<compile_context>
chip_gen: v7x
topology: tpu7x:2x2x1
jax: 0.10.0
libtpu: 0.0.40
codegen_flags: <defaults>
</compile_context>

<pallas_src>
import jax
import jax.numpy as jnp
from jax.experimental import pallas as pl
from jax.experimental.pallas import tpu as pltpu

GEM_EPS = 1e-6      # GeM clamp eps
BN_EPS = 1e-5       # BatchNorm1d default eps
LANE = 128
SUBLANE = 8
DEFAULT_ROW_BUDGET = 4096            # points (rows) of live intermediates per grid step
VMEM_LIMIT_BYTES = 48 * 1024 * 1024  # explicit scoped-VMEM ceiling (fits v5e/v6e/v7x)


def _cdiv(a, b):
    return -(-a // b)


def _round_up(a, b):
    return _cdiv(a, b) * b


def _int_pow(x, n):
    """x**n for a small positive integer n via exponentiation-by-squaring (VPU only)."""
    result = None
    base = x
    while True:
        if n & 1:
            result = base if result is None else result * base
        n >>= 1
        if not n:
            return result
        base = base * base


def _plan(B, N, row_budget):
    """Choose (Bt, Nt, GB, GN): Bt batch elements and Nt points per grid step, with
    Bt*Nt capped by `row_budget` rows (Nt a multiple of 8) and, when B >= 2, at least
    2 batch-parallel grid steps so both v7x TensorCores get work."""
    n8 = _round_up(N, SUBLANE)
    if N >= row_budget or B == 1:
        Bt = 1
    else:
        Bt = max(1, min(B // 2, row_budget // n8))
        while B % Bt:
            Bt -= 1
    GB = B // Bt
    if Bt == 1 and N > row_budget:
        GN = _cdiv(N, row_budget)
        Nt = _round_up(_cdiv(N, GN), SUBLANE)
        GN = _cdiv(N, Nt)
    else:
        Nt, GN = n8, 1
    return Bt, Nt, GB, GN


def _make_kernel(p, n_true, nt, need_mask):
    """Build the per-step kernel with the GeM power / point count baked in."""
    p = float(p)
    p_is_int = p.is_integer() and 1 <= int(p) <= 8
    p_int = int(p)
    inv_n = 1.0 / float(n_true)
    inv_p = 1.0 / p

    def kernel(x_ref, w1, t1, w2, t2, w3, t3, w4, t4, w5, t5, wfc, bfc,
               o_ref, acc_ref):
        ni = pl.program_id(1)

        # zero the resident GeM accumulator at the first N tile of each batch group
        @pl.when(ni == 0)
        def _():
            acc_ref[...] = jnp.zeros_like(acc_ref)

        bt = x_ref.shape[1]
        x = x_ref[0].reshape(bt * nt, x_ref.shape[3])            # [M, cin_pad] f32

        # layer 1 (cin zero-padded to 8) on the MXU: bf16 operands, f32 accumulate
        h = jnp.dot(x.astype(jnp.bfloat16), w1[...],
                    preferred_element_type=jnp.float32)
        h = jnp.maximum(h + t1[...], 0.0).astype(jnp.bfloat16)

        def conv_bn_relu(h, w_ref, t_ref, out_dtype):
            y = jnp.dot(h, w_ref[...], preferred_element_type=jnp.float32)
            return jnp.maximum(y + t_ref[...], 0.0).astype(out_dtype)

        h = conv_bn_relu(h, w2, t2, jnp.bfloat16)
        h = conv_bn_relu(h, w3, t3, jnp.bfloat16)
        h = conv_bn_relu(h, w4, t4, jnp.bfloat16)
        h = conv_bn_relu(h, w5, t5, jnp.float32)                 # [M, feat] f32 for GeM

        # GeM: clamp + p-th power; integer p stays on the VPU (no EUP transcendentals)
        hc = jnp.maximum(h, GEM_EPS)
        if p_is_int:
            hp = _int_pow(hc, p_int)
        else:
            # TODO(synk): for generic p on v6e/v7x a bf16 exp/log path would halve the
            # EUP cost; kept f32 (v5e has no bf16 EUP) since the default p=3 skips it.
            hp = jnp.exp(p * jnp.log(hc))
        hp = hp.reshape(bt, nt, hp.shape[-1])

        if need_mask:   # zero rows that are padding of the ragged point dimension
            pidx = jax.lax.broadcasted_iota(jnp.int32, (1, nt, 1), 1)
            hp = jnp.where(ni * nt + pidx < n_true, hp, 0.0)

        acc_ref[...] += jnp.sum(hp, axis=1)                      # GeM partial sum [Bt, feat]

        # last N tile: finish GeM (mean, ^(1/p)) and run the FC head (f32, lane-padded)
        @pl.when(ni == pl.num_programs(1) - 1)
        def _():
            g = acc_ref[...] * inv_n
            g = jnp.exp(jnp.log(g) * inv_p)                      # g ** (1/p); g >= eps^p > 0
            out = jnp.dot(g, wfc[...], preferred_element_type=jnp.float32) + bfc[...]
            o_ref[...] = out[None]

    return kernel


def make_params(key, in_dim=3, feat_dim=256, output_dim=64, p=3.0):
    """Deterministic synthetic parameters matching the torch module's layer shapes
    (scale=1), with conv bias + eval-mode BatchNorm folded: BN(xW + b) = x(W*s) + t.
    Layer-1 input channels are zero-padded to a sublane multiple (MXU path)."""
    dims = [in_dim, 64, 64, 64, 128, feat_dim]
    cin_pad = _round_up(in_dim, SUBLANE)
    keys = iter(jax.random.split(key, 64))
    layers = []
    for i in range(5):
        cin, cout = dims[i], dims[i + 1]
        w = jax.random.normal(next(keys), (cin, cout), jnp.float32) / jnp.sqrt(float(cin))
        b = 0.05 * jax.random.normal(next(keys), (1, cout), jnp.float32)
        gamma = 1.0 + 0.1 * jax.random.normal(next(keys), (1, cout), jnp.float32)
        beta = 0.05 * jax.random.normal(next(keys), (1, cout), jnp.float32)
        mean = 0.05 * jax.random.normal(next(keys), (1, cout), jnp.float32)
        var = 1.0 + 0.1 * jnp.abs(jax.random.normal(next(keys), (1, cout), jnp.float32))
        s = gamma / jnp.sqrt(var + BN_EPS)           # eval-mode BN scale
        w_folded = w * s                             # fold BN scale into the conv weight
        t = (b - mean) * s + beta                    # conv bias + BN shift
        if i == 0:                                   # zero-pad cin so layer 1 hits the MXU
            w_folded = jnp.zeros((cin_pad, cout), jnp.float32).at[:cin].set(w_folded)
        layers.append((w_folded.astype(jnp.bfloat16), t))
    # FC head kept in f32 (tiny matmul; better parity with a torch f32 Linear)
    wfc = (jax.random.normal(next(keys), (feat_dim, output_dim), jnp.float32)
           / jnp.sqrt(float(feat_dim)))
    bfc = 0.05 * jax.random.normal(next(keys), (1, output_dim), jnp.float32)
    return {"layers": layers, "wfc": wfc, "bfc": bfc, "p": float(p)}


def pointnet_gem(x, params, row_budget=DEFAULT_ROW_BUDGET):
    """x: [B, N, in_dim] float32  ->  [B, output_dim] float32."""
    B, N, cin = x.shape
    feat_dim, outdim = params["wfc"].shape
    out_pad = _round_up(outdim, LANE)
    cin_pad = params["layers"][0][0].shape[0]

    Bt, Nt, GB, GN = _plan(B, N, row_budget)
    n_pad = GN * Nt
    # TODO(synk): when B == 1 the batch-parallel axis has a single step, so one v7x
    # TensorCore idles; splitting the N axis across cores needs a partial-sum output
    # combined in the wrapper and is not emitted here.

    # host-side layout prep: pad cin -> cin_pad, pad N -> GN*Nt, group Bt elems / step
    xp = jnp.zeros((B, n_pad, cin_pad), jnp.float32)
    xp = xp.at[:, :N, :cin].set(x.astype(jnp.float32))
    xg = xp.reshape(GB, Bt, n_pad, cin_pad)

    # lane-dense FC output: pad out dim to a multiple of 128 (unmasked vst), slice after
    wfc = jnp.zeros((feat_dim, out_pad), jnp.float32).at[:, :outdim].set(params["wfc"])
    bfc = jnp.zeros((1, out_pad), jnp.float32).at[:, :outdim].set(params["bfc"])

    kernel = _make_kernel(params["p"], N, Nt, need_mask=(n_pad != N))

    const_args = []
    for (w, t) in params["layers"]:
        const_args += [w, t]
    const_args += [wfc, bfc]

    def run(buffered_consts):
        def const_spec(a):
            nd = a.ndim
            idx = lambda b, n, _nd=nd: (0,) * _nd
            if buffered_consts:
                # weights/shifts have constant index_maps: a single buffer is enough
                return pl.BlockSpec(a.shape, idx, pipeline_mode=pl.Buffered(1))
            return pl.BlockSpec(a.shape, idx)

        in_specs = [pl.BlockSpec((1, Bt, Nt, cin_pad), lambda b, n: (b, 0, n, 0))]
        in_specs += [const_spec(a) for a in const_args]

        return pl.pallas_call(
            kernel,
            out_shape=jax.ShapeDtypeStruct((GB, Bt, out_pad), jnp.float32),
            grid=(GB, GN),
            in_specs=in_specs,
            out_specs=pl.BlockSpec((1, Bt, out_pad), lambda b, n: (b, 0, 0)),
            scratch_shapes=[pltpu.VMEM((Bt, feat_dim), jnp.float32)],  # resident GeM acc
            compiler_params=pltpu.CompilerParams(
                dimension_semantics=("parallel", "arbitrary"),
                vmem_limit_bytes=VMEM_LIMIT_BYTES),
        )(xg, *const_args)

    try:
        out = run(buffered_consts=True)
    except Exception:
        # pl.Buffered(1) single-buffered constant operands unsupported on this
        # jax version / backend -> fall back to default double-buffered specs.
        out = run(buffered_consts=False)

    return out.reshape(B, out_pad)[:, :outdim]


def reference(x, params):
    """Pure-JAX reference of the same forward pass (matmul operands rounded to bf16
    exactly like the kernel's MXU path; GeM, layer-5 output and the FC stay in f32)."""
    f32 = jnp.float32
    cin = x.shape[-1]
    p = params["p"]

    def mm(h, w):
        return jnp.einsum("bnc,cd->bnd",
                          h.astype(jnp.bfloat16).astype(f32), w.astype(f32))

    w1, t1 = params["layers"][0]
    h = jnp.maximum(mm(x, w1[:cin]) + t1, 0.0)
    for (w, t) in params["layers"][1:]:
        h = jnp.maximum(mm(h, w) + t, 0.0)
    g = jnp.mean(jnp.maximum(h, GEM_EPS) ** p, axis=1) ** (1.0 / p)
    return g @ params["wfc"] + params["bfc"]


if __name__ == "__main__":
    key = jax.random.PRNGKey(0)
    k_a, k_b, k_p = jax.random.split(key, 3)

    FEAT_DIM, OUT_DIM = 256, 64          # scaled-down feat_dim / output_dim
    params = make_params(k_p, in_dim=3, feat_dim=FEAT_DIM, output_dim=OUT_DIM, p=3.0)

    # Config A: small aligned point cloud -> batch elements fused per step, one N tile.
    xa = jax.random.normal(k_a, (4, 128, 3), jnp.float32)
    out_a = jax.block_until_ready(pointnet_gem(xa, params))
    ref_a = jax.block_until_ready(reference(xa, params))
    assert out_a.shape == (4, OUT_DIM)
    assert jnp.allclose(out_a, ref_a, rtol=1e-2, atol=1e-2), (out_a, ref_a)

    # Config B: ragged N with a tiny row budget -> exercises the N-tiled resident GeM
    # accumulator, last-tile masking, and the finalize-on-last-tile FC path.
    xb = jax.random.normal(k_b, (2, 100, 3), jnp.float32)
    out_b = jax.block_until_ready(pointnet_gem(xb, params, row_budget=64))
    ref_b = jax.block_until_ready(reference(xb, params))
    assert out_b.shape == (2, OUT_DIM)
    assert jnp.allclose(out_b, ref_b, rtol=1e-2, atol=1e-2), (out_b, ref_b)

    print("KERNEL_OK")
</pallas_src>

<mosaic_0001>
module attributes {stable_mosaic.version = 11 : i64} {
  func.func @kernel(%arg0: i32, %arg1: i32, %arg2: memref<1x2x128x8xf32, #tpu.memory_space<vmem>>, %arg3: memref<8x64xbf16, #tpu.memory_space<vmem>>, %arg4: memref<1x64xf32, #tpu.memory_space<vmem>>, %arg5: memref<64x64xbf16, #tpu.memory_space<vmem>>, %arg6: memref<1x64xf32, #tpu.memory_space<vmem>>, %arg7: memref<64x64xbf16, #tpu.memory_space<vmem>>, %arg8: memref<1x64xf32, #tpu.memory_space<vmem>>, %arg9: memref<64x128xbf16, #tpu.memory_space<vmem>>, %arg10: memref<1x128xf32, #tpu.memory_space<vmem>>, %arg11: memref<128x256xbf16, #tpu.memory_space<vmem>>, %arg12: memref<1x256xf32, #tpu.memory_space<vmem>>, %arg13: memref<256x128xf32, #tpu.memory_space<vmem>>, %arg14: memref<1x128xf32, #tpu.memory_space<vmem>>, %arg15: memref<1x2x128xf32, #tpu.memory_space<vmem>>, %arg16: memref<2x256xf32, #tpu.memory_space<vmem>>) attributes {dimension_semantics = [#tpu.dimension_semantics<parallel>, #tpu.dimension_semantics<arbitrary>], iteration_bounds = array<i64: 2, 1>, scalar_prefetch = 0 : i64, scratch_operands = 1 : i64, tpu.core_type = #tpu.core_type<tc>, window_params = [{transform_indices = @transform_0, window_bounds = array<i64: 1, 2, 128, 8>}, {pipeline_mode = #tpu.pipeline_mode<synchronous>, transform_indices = @transform_1, window_bounds = array<i64: 8, 64>}, {pipeline_mode = #tpu.pipeline_mode<synchronous>, transform_indices = @transform_2, window_bounds = array<i64: 1, 64>}, {pipeline_mode = #tpu.pipeline_mode<synchronous>, transform_indices = @transform_3, window_bounds = array<i64: 64, 64>}, {pipeline_mode = #tpu.pipeline_mode<synchronous>, transform_indices = @transform_4, window_bounds = array<i64: 1, 64>}, {pipeline_mode = #tpu.pipeline_mode<synchronous>, transform_indices = @transform_5, window_bounds = array<i64: 64, 64>}, {pipeline_mode = #tpu.pipeline_mode<synchronous>, transform_indices = @transform_6, window_bounds = array<i64: 1, 64>}, {pipeline_mode = #tpu.pipeline_mode<synchronous>, transform_indices = @transform_7, window_bounds = array<i64: 64, 128>}, {pipeline_mode = #tpu.pipeline_mode<synchronous>, transform_indices = @transform_8, window_bounds = array<i64: 1, 128>}, {pipeline_mode = #tpu.pipeline_mode<synchronous>, transform_indices = @transform_9, window_bounds = array<i64: 128, 256>}, {pipeline_mode = #tpu.pipeline_mode<synchronous>, transform_indices = @transform_10, window_bounds = array<i64: 1, 256>}, {pipeline_mode = #tpu.pipeline_mode<synchronous>, transform_indices = @transform_11, window_bounds = array<i64: 256, 128>}, {pipeline_mode = #tpu.pipeline_mode<synchronous>, transform_indices = @transform_12, window_bounds = array<i64: 1, 128>}, {transform_indices = @transform_13, window_bounds = array<i64: 1, 2, 128>}]} {
    %c0_i32 = arith.constant 0 : i32
    %0 = arith.cmpi eq, %arg1, %c0_i32 : i32
    %1 = arith.extui %0 : i1 to i32
    %c0_i32_0 = arith.constant 0 : i32
    %2 = arith.cmpi ne, %1, %c0_i32_0 : i32
    scf.if %2 {
      %cst_41 = arith.constant 0.000000e+00 : f32
      %58 = vector.broadcast %cst_41 : f32 to vector<2x256xf32>
      %c0_42 = arith.constant 0 : index
      %c0_43 = arith.constant 0 : index
      %59 = vector.load %arg16[%c0_42, %c0_43] : memref<2x256xf32, #tpu.memory_space<vmem>>, vector<2x256xf32>
      tpu.vector_store %arg16[%c0_42, %c0_43], %58 {strides = array<i32>} : memref<2x256xf32, #tpu.memory_space<vmem>>, vector<2x256xf32>,
    } else {
    }
    %c0 = arith.constant 0 : index
    %c0_1 = arith.constant 0 : index
    %c0_2 = arith.constant 0 : index
    %c0_3 = arith.constant 0 : index
    %3 = vector.load %arg2[%c0, %c0_1, %c0_2, %c0_3] : memref<1x2x128x8xf32, #tpu.memory_space<vmem>>, vector<1x2x128x8xf32>
    %4 = vector.shape_cast %3 : vector<1x2x128x8xf32> to vector<2x128x8xf32>
    %5 = vector.shape_cast %4 : vector<2x128x8xf32> to vector<256x8xf32>
    %6 = arith.truncf %5 : vector<256x8xf32> to vector<256x8xbf16>
    %c0_4 = arith.constant 0 : index
    %c0_5 = arith.constant 0 : index
    %7 = vector.load %arg3[%c0_4, %c0_5] : memref<8x64xbf16, #tpu.memory_space<vmem>>, vector<8x64xbf16>
    %cst = arith.constant dense<0.000000e+00> : vector<256x64xf32>
    %8 = tpu.matmul %6, %7, %cst {dimension_numbers = #tpu.dot_dimension_numbers<[1], [0], [0], [1], [0, 0, 1, 1], [], []>} : vector<256x8xbf16>, vector<8x64xbf16>, vector<256x64xf32> -> vector<256x64xf32>
    %c0_6 = arith.constant 0 : index
    %c0_7 = arith.constant 0 : index
    %9 = vector.load %arg4[%c0_6, %c0_7] : memref<1x64xf32, #tpu.memory_space<vmem>>, vector<1x64xf32>
    %10 = vector.broadcast %9 : vector<1x64xf32> to vector<256x64xf32>
    %11 = arith.addf %8, %10 : vector<256x64xf32>
    %cst_8 = arith.constant 0.000000e+00 : f32
    %12 = vector.broadcast %cst_8 : f32 to vector<256x64xf32>
    %13 = arith.maximumf %11, %12 : vector<256x64xf32>
    %14 = arith.truncf %13 : vector<256x64xf32> to vector<256x64xbf16>
    %c0_9 = arith.constant 0 : index
    %c0_10 = arith.constant 0 : index
    %15 = vector.load %arg5[%c0_9, %c0_10] : memref<64x64xbf16, #tpu.memory_space<vmem>>, vector<64x64xbf16>
    %cst_11 = arith.constant dense<0.000000e+00> : vector<256x64xf32>
    %16 = tpu.matmul %14, %15, %cst_11 {dimension_numbers = #tpu.dot_dimension_numbers<[1], [0], [0], [1], [0, 0, 1, 1], [], []>} : vector<256x64xbf16>, vector<64x64xbf16>, vector<256x64xf32> -> vector<256x64xf32>
    %c0_12 = arith.constant 0 : index
    %c0_13 = arith.constant 0 : index
    %17 = vector.load %arg6[%c0_12, %c0_13] : memref<1x64xf32, #tpu.memory_space<vmem>>, vector<1x64xf32>
    %18 = vector.broadcast %17 : vector<1x64xf32> to vector<256x64xf32>
    %19 = arith.addf %16, %18 : vector<256x64xf32>
    %cst_14 = arith.constant 0.000000e+00 : f32
    %20 = vector.broadcast %cst_14 : f32 to vector<256x64xf32>
    %21 = arith.maximumf %19, %20 : vector<256x64xf32>
    %22 = arith.truncf %21 : vector<256x64xf32> to vector<256x64xbf16>
    %c0_15 = arith.constant 0 : index
    %c0_16 = arith.constant 0 : index
    %23 = vector.load %arg7[%c0_15, %c0_16] : memref<64x64xbf16, #tpu.memory_space<vmem>>, vector<64x64xbf16>
    %cst_17 = arith.constant dense<0.000000e+00> : vector<256x64xf32>
    %24 = tpu.matmul %22, %23, %cst_17 {dimension_numbers = #tpu.dot_dimension_numbers<[1], [0], [0], [1], [0, 0, 1, 1], [], []>} : vector<256x64xbf16>, vector<64x64xbf16>, vector<256x64xf32> -> vector<256x64xf32>
    %c0_18 = arith.constant 0 : index
    %c0_19 = arith.constant 0 : index
    %25 = vector.load %arg8[%c0_18, %c0_19] : memref<1x64xf32, #tpu.memory_space<vmem>>, vector<1x64xf32>
    %26 = vector.broadcast %25 : vector<1x64xf32> to vector<256x64xf32>
    %27 = arith.addf %24, %26 : vector<256x64xf32>
    %cst_20 = arith.constant 0.000000e+00 : f32
    %28 = vector.broadcast %cst_20 : f32 to vector<256x64xf32>
    %29 = arith.maximumf %27, %28 : vector<256x64xf32>
    %30 = arith.truncf %29 : vector<256x64xf32> to vector<256x64xbf16>
    %c0_21 = arith.constant 0 : index
    %c0_22 = arith.constant 0 : index
    %31 = vector.load %arg9[%c0_21, %c0_22] : memref<64x128xbf16, #tpu.memory_space<vmem>>, vector<64x128xbf16>
    %cst_23 = arith.constant dense<0.000000e+00> : vector<256x128xf32>
    %32 = tpu.matmul %30, %31, %cst_23 {dimension_numbers = #tpu.dot_dimension_numbers<[1], [0], [0], [1], [0, 0, 1, 1], [], []>} : vector<256x64xbf16>, vector<64x128xbf16>, vector<256x128xf32> -> vector<256x128xf32>
    %c0_24 = arith.constant 0 : index
    %c0_25 = arith.constant 0 : index
    %33 = vector.load %arg10[%c0_24, %c0_25] : memref<1x128xf32, #tpu.memory_space<vmem>>, vector<1x128xf32>
    %34 = vector.broadcast %33 : vector<1x128xf32> to vector<256x128xf32>
    %35 = arith.addf %32, %34 : vector<256x128xf32>
    %cst_26 = arith.constant 0.000000e+00 : f32
    %36 = vector.broadcast %cst_26 : f32 to vector<256x128xf32>
    %37 = arith.maximumf %35, %36 : vector<256x128xf32>
    %38 = arith.truncf %37 : vector<256x128xf32> to vector<256x128xbf16>
    %c0_27 = arith.constant 0 : index
    %c0_28 = arith.constant 0 : index
    %39 = vector.load %arg11[%c0_27, %c0_28] : memref<128x256xbf16, #tpu.memory_space<vmem>>, vector<128x256xbf16>
    %cst_29 = arith.constant dense<0.000000e+00> : vector<256x256xf32>
    %40 = tpu.matmul %38, %39, %cst_29 {dimension_numbers = #tpu.dot_dimension_numbers<[1], [0], [0], [1], [0, 0, 1, 1], [], []>} : vector<256x128xbf16>, vector<128x256xbf16>, vector<256x256xf32> -> vector<256x256xf32>
    %c0_30 = arith.constant 0 : index
    %c0_31 = arith.constant 0 : index
    %41 = vector.load %arg12[%c0_30, %c0_31] : memref<1x256xf32, #tpu.memory_space<vmem>>, vector<1x256xf32>
    %42 = vector.broadcast %41 : vector<1x256xf32> to vector<256x256xf32>
    %43 = arith.addf %40, %42 : vector<256x256xf32>
    %cst_32 = arith.constant 0.000000e+00 : f32
    %44 = vector.broadcast %cst_32 : f32 to vector<256x256xf32>
    %45 = arith.maximumf %43, %44 : vector<256x256xf32>
    %cst_33 = arith.constant 9.99999997E-7 : f32
    %46 = vector.broadcast %cst_33 : f32 to vector<256x256xf32>
    %47 = arith.maximumf %45, %46 : vector<256x256xf32>
    %48 = arith.mulf %47, %47 : vector<256x256xf32>
    %49 = arith.mulf %47, %48 : vector<256x256xf32>
    %50 = vector.shape_cast %49 : vector<256x256xf32> to vector<2x128x256xf32>
    %c0_34 = arith.constant 0 : index
    %c0_35 = arith.constant 0 : index
    %51 = vector.load %arg16[%c0_34, %c0_35] : memref<2x256xf32, #tpu.memory_space<vmem>>, vector<2x256xf32>
    %cst_36 = arith.constant dense<0.000000e+00> : vector<2x256xf32>
    %52 = vector.multi_reduction <add>, %50, %cst_36 [1] : vector<2x128x256xf32> to vector<2x256xf32>
    %53 = arith.addf %51, %52 : vector<2x256xf32>
    %c0_37 = arith.constant 0 : index
    %c0_38 = arith.constant 0 : index
    %54 = vector.load %arg16[%c0_37, %c0_38] : memref<2x256xf32, #tpu.memory_space<vmem>>, vector<2x256xf32>
    tpu.vector_store %arg16[%c0_37, %c0_38], %53 {strides = array<i32>} : memref<2x256xf32, #tpu.memory_space<vmem>>, vector<2x256xf32>,
    %c0_i32_39 = arith.constant 0 : i32
    %55 = arith.cmpi eq, %arg1, %c0_i32_39 : i32
    %56 = arith.extui %55 : i1 to i32
    %c0_i32_40 = arith.constant 0 : i32
    %57 = arith.cmpi ne, %56, %c0_i32_40 : i32
    scf.if %57 {
      %c0_41 = arith.constant 0 : index
      %c0_42 = arith.constant 0 : index
      %58 = vector.load %arg16[%c0_41, %c0_42] : memref<2x256xf32, #tpu.memory_space<vmem>>, vector<2x256xf32>
      %cst_43 = arith.constant 7.812500e-03 : f32
      %59 = vector.broadcast %cst_43 : f32 to vector<2x256xf32>
      %60 = arith.mulf %58, %59 : vector<2x256xf32>
      %61 = math.log %60 : vector<2x256xf32>
      %cst_44 = arith.constant 0.333333343 : f32
      %62 = vector.broadcast %cst_44 : f32 to vector<2x256xf32>
      %63 = arith.mulf %61, %62 : vector<2x256xf32>
      %64 = math.exp %63 : vector<2x256xf32>
      %c0_45 = arith.constant 0 : index
      %c0_46 = arith.constant 0 : index
      %65 = vector.load %arg13[%c0_45, %c0_46] : memref<256x128xf32, #tpu.memory_space<vmem>>, vector<256x128xf32>
      %cst_47 = arith.constant dense<0.000000e+00> : vector<2x128xf32>
      %66 = tpu.matmul %64, %65, %cst_47 {dimension_numbers = #tpu.dot_dimension_numbers<[1], [0], [0], [1], [0, 0, 1, 1], [], []>} : vector<2x256xf32>, vector<256x128xf32>, vector<2x128xf32> -> vector<2x128xf32>
      %c0_48 = arith.constant 0 : index
      %c0_49 = arith.constant 0 : index
      %67 = vector.load %arg14[%c0_48, %c0_49] : memref<1x128xf32, #tpu.memory_space<vmem>>, vector<1x128xf32>
      %68 = vector.broadcast %67 : vector<1x128xf32> to vector<2x128xf32>
      %69 = arith.addf %66, %68 : vector<2x128xf32>
      %70 = vector.shape_cast %69 : vector<2x128xf32> to vector<1x2x128xf32>
      %c0_50 = arith.constant 0 : index
      %c0_51 = arith.constant 0 : index
      %c0_52 = arith.constant 0 : index
      %71 = vector.load %arg15[%c0_50, %c0_51, %c0_52] : memref<1x2x128xf32, #tpu.memory_space<vmem>>, vector<1x2x128xf32>
      tpu.vector_store %arg15[%c0_50, %c0_51, %c0_52], %70 {strides = array<i32>} : memref<1x2x128xf32, #tpu.memory_space<vmem>>, vector<1x2x128xf32>,
    } else {
    }
    return
  }
  func.func @transform_0(%arg0: i32, %arg1: i32) -> (i32, i32, i32, i32) {
    %c0_i32 = arith.constant 0 : i32
    %c0_i32_0 = arith.constant 0 : i32
    %c0_i32_1 = arith.constant 0 : i32
    return %arg0, %c0_i32, %arg1, %c0_i32_0 : i32, i32, i32, i32
  }
  func.func @transform_1(%arg0: i32, %arg1: i32) -> (i32, i32) {
    %c0_i32 = arith.constant 0 : i32
    %c0_i32_0 = arith.constant 0 : i32
    %c0_i32_1 = arith.constant 0 : i32
    return %c0_i32, %c0_i32_0 : i32, i32
  }
  func.func @transform_2(%arg0: i32, %arg1: i32) -> (i32, i32) {
    %c0_i32 = arith.constant 0 : i32
    %c0_i32_0 = arith.constant 0 : i32
    %c0_i32_1 = arith.constant 0 : i32
    return %c0_i32, %c0_i32_0 : i32, i32
  }
  func.func @transform_3(%arg0: i32, %arg1: i32) -> (i32, i32) {
    %c0_i32 = arith.constant 0 : i32
    %c0_i32_0 = arith.constant 0 : i32
    %c0_i32_1 = arith.constant 0 : i32
    return %c0_i32, %c0_i32_0 : i32, i32
  }
  func.func @transform_4(%arg0: i32, %arg1: i32) -> (i32, i32) {
    %c0_i32 = arith.constant 0 : i32
    %c0_i32_0 = arith.constant 0 : i32
    %c0_i32_1 = arith.constant 0 : i32
    return %c0_i32, %c0_i32_0 : i32, i32
  }
  func.func @transform_5(%arg0: i32, %arg1: i32) -> (i32, i32) {
    %c0_i32 = arith.constant 0 : i32
    %c0_i32_0 = arith.constant 0 : i32
    %c0_i32_1 = arith.constant 0 : i32
    return %c0_i32, %c0_i32_0 : i32, i32
  }
  func.func @transform_6(%arg0: i32, %arg1: i32) -> (i32, i32) {
    %c0_i32 = arith.constant 0 : i32
    %c0_i32_0 = arith.constant 0 : i32
    %c0_i32_1 = arith.constant 0 : i32
    return %c0_i32, %c0_i32_0 : i32, i32
  }
  func.func @transform_7(%arg0: i32, %arg1: i32) -> (i32, i32) {
    %c0_i32 = arith.constant 0 : i32
    %c0_i32_0 = arith.constant 0 : i32
    %c0_i32_1 = arith.constant 0 : i32
    return %c0_i32, %c0_i32_0 : i32, i32
  }
  func.func @transform_8(%arg0: i32, %arg1: i32) -> (i32, i32) {
    %c0_i32 = arith.constant 0 : i32
    %c0_i32_0 = arith.constant 0 : i32
    %c0_i32_1 = arith.constant 0 : i32
    return %c0_i32, %c0_i32_0 : i32, i32
  }
  func.func @transform_9(%arg0: i32, %arg1: i32) -> (i32, i32) {
    %c0_i32 = arith.constant 0 : i32
    %c0_i32_0 = arith.constant 0 : i32
    %c0_i32_1 = arith.constant 0 : i32
    return %c0_i32, %c0_i32_0 : i32, i32
  }
  func.func @transform_10(%arg0: i32, %arg1: i32) -> (i32, i32) {
    %c0_i32 = arith.constant 0 : i32
    %c0_i32_0 = arith.constant 0 : i32
    %c0_i32_1 = arith.constant 0 : i32
    return %c0_i32, %c0_i32_0 : i32, i32
  }
  func.func @transform_11(%arg0: i32, %arg1: i32) -> (i32, i32) {
    %c0_i32 = arith.constant 0 : i32
    %c0_i32_0 = arith.constant 0 : i32
    %c0_i32_1 = arith.constant 0 : i32
    return %c0_i32, %c0_i32_0 : i32, i32
  }
  func.func @transform_12(%arg0: i32, %arg1: i32) -> (i32, i32) {
    %c0_i32 = arith.constant 0 : i32
    %c0_i32_0 = arith.constant 0 : i32
    %c0_i32_1 = arith.constant 0 : i32
    return %c0_i32, %c0_i32_0 : i32, i32
  }
  func.func @transform_13(%arg0: i32, %arg1: i32) -> (i32, i32, i32) {
    %c0_i32 = arith.constant 0 : i32
    %c0_i32_0 = arith.constant 0 : i32
    %c0_i32_1 = arith.constant 0 : i32
    return %arg0, %c0_i32, %c0_i32_0 : i32, i32, i32
  }
}

module attributes {stable_mosaic.version = 11 : i64} {
  func.func @kernel(%arg0: i32, %arg1: i32, %arg2: memref<1x2x128x8xf32, #tpu.memory_space<vmem>>, %arg3: memref<8x64xbf16, #tpu.memory_space<vmem>>, %arg4: memref<1x64xf32, #tpu.memory_space<vmem>>, %arg5: memref<64x64xbf16, #tpu.memory_space<vmem>>, %arg6: memref<1x64xf32, #tpu.memory_space<vmem>>, %arg7: memref<64x64xbf16, #tpu.memory_space<vmem>>, %arg8: memref<1x64xf32, #tpu.memory_space<vmem>>, %arg9: memref<64x128xbf16, #tpu.memory_space<vmem>>, %arg10: memref<1x128xf32, #tpu.memory_space<vmem>>, %arg11: memref<128x256xbf16, #tpu.memory_space<vmem>>, %arg12: memref<1x256xf32, #tpu.memory_space<vmem>>, %arg13: memref<256x128xf32, #tpu.memory_space<vmem>>, %arg14: memref<1x128xf32, #tpu.memory_space<vmem>>, %arg15: memref<1x2x128xf32, #tpu.memory_space<vmem>>, %arg16: memref<2x256xf32, #tpu.memory_space<vmem>>) attributes {dimension_semantics = [#tpu.dimension_semantics<parallel>, #tpu.dimension_semantics<arbitrary>], iteration_bounds = array<i64: 2, 1>, scalar_prefetch = 0 : i64, scratch_operands = 1 : i64, tpu.core_type = #tpu.core_type<tc>, window_params = [{transform_indices = @transform_0, window_bounds = array<i64: 1, 2, 128, 8>}, {pipeline_mode = #tpu.pipeline_mode<synchronous>, transform_indices = @transform_1, window_bounds = array<i64: 8, 64>}, {pipeline_mode = #tpu.pipeline_mode<synchronous>, transform_indices = @transform_2, window_bounds = array<i64: 1, 64>}, {pipeline_mode = #tpu.pipeline_mode<synchronous>, transform_indices = @transform_3, window_bounds = array<i64: 64, 64>}, {pipeline_mode = #tpu.pipeline_mode<synchronous>, transform_indices = @transform_4, window_bounds = array<i64: 1, 64>}, {pipeline_mode = #tpu.pipeline_mode<synchronous>, transform_indices = @transform_5, window_bounds = array<i64: 64, 64>}, {pipeline_mode = #tpu.pipeline_mode<synchronous>, transform_indices = @transform_6, window_bounds = array<i64: 1, 64>}, {pipeline_mode = #tpu.pipeline_mode<synchronous>, transform_indices = @transform_7, window_bounds = array<i64: 64, 128>}, {pipeline_mode = #tpu.pipeline_mode<synchronous>, transform_indices = @transform_8, window_bounds = array<i64: 1, 128>}, {pipeline_mode = #tpu.pipeline_mode<synchronous>, transform_indices = @transform_9, window_bounds = array<i64: 128, 256>}, {pipeline_mode = #tpu.pipeline_mode<synchronous>, transform_indices = @transform_10, window_bounds = array<i64: 1, 256>}, {pipeline_mode = #tpu.pipeline_mode<synchronous>, transform_indices = @transform_11, window_bounds = array<i64: 256, 128>}, {pipeline_mode = #tpu.pipeline_mode<synchronous>, transform_indices = @transform_12, window_bounds = array<i64: 1, 128>}, {transform_indices = @transform_13, window_bounds = array<i64: 1, 2, 128>}]} {
    %c0_i32 = arith.constant 0 : i32
    %0 = arith.cmpi eq, %arg1, %c0_i32 : i32
    %1 = arith.extui %0 : i1 to i32
    %c0_i32_0 = arith.constant 0 : i32
    %2 = arith.cmpi ne, %1, %c0_i32_0 : i32
    scf.if %2 {
      %cst_41 = arith.constant 0.000000e+00 : f32
      %58 = vector.broadcast %cst_41 : f32 to vector<2x256xf32>
      %c0_42 = arith.constant 0 : index
      %c0_43 = arith.constant 0 : index
      %59 = vector.load %arg16[%c0_42, %c0_43] : memref<2x256xf32, #tpu.memory_space<vmem>>, vector<2x256xf32>
      tpu.vector_store %arg16[%c0_42, %c0_43], %58 {strides = array<i32>} : memref<2x256xf32, #tpu.memory_space<vmem>>, vector<2x256xf32>,
    } else {
    }
    %c0 = arith.constant 0 : index
    %c0_1 = arith.constant 0 : index
    %c0_2 = arith.constant 0 : index
    %c0_3 = arith.constant 0 : index
    %3 = vector.load %arg2[%c0, %c0_1, %c0_2, %c0_3] : memref<1x2x128x8xf32, #tpu.memory_space<vmem>>, vector<1x2x128x8xf32>
    %4 = vector.shape_cast %3 : vector<1x2x128x8xf32> to vector<2x128x8xf32>
    %5 = vector.shape_cast %4 : vector<2x128x8xf32> to vector<256x8xf32>
    %6 = arith.truncf %5 : vector<256x8xf32> to vector<256x8xbf16>
    %c0_4 = arith.constant 0 : index
    %c0_5 = arith.constant 0 : index
    %7 = vector.load %arg3[%c0_4, %c0_5] : memref<8x64xbf16, #tpu.memory_space<vmem>>, vector<8x64xbf16>
    %cst = arith.constant dense<0.000000e+00> : vector<256x64xf32>
    %8 = tpu.matmul %6, %7, %cst {dimension_numbers = #tpu.dot_dimension_numbers<[1], [0], [0], [1], [0, 0, 1, 1], [], []>} : vector<256x8xbf16>, vector<8x64xbf16>, vector<256x64xf32> -> vector<256x64xf32>
    %c0_6 = arith.constant 0 : index
    %c0_7 = arith.constant 0 : index
    %9 = vector.load %arg4[%c0_6, %c0_7] : memref<1x64xf32, #tpu.memory_space<vmem>>, vector<1x64xf32>
    %10 = vector.broadcast %9 : vector<1x64xf32> to vector<256x64xf32>
    %11 = arith.addf %8, %10 : vector<256x64xf32>
    %cst_8 = arith.constant 0.000000e+00 : f32
    %12 = vector.broadcast %cst_8 : f32 to vector<256x64xf32>
    %13 = arith.maximumf %11, %12 : vector<256x64xf32>
    %14 = arith.truncf %13 : vector<256x64xf32> to vector<256x64xbf16>
    %c0_9 = arith.constant 0 : index
    %c0_10 = arith.constant 0 : index
    %15 = vector.load %arg5[%c0_9, %c0_10] : memref<64x64xbf16, #tpu.memory_space<vmem>>, vector<64x64xbf16>
    %cst_11 = arith.constant dense<0.000000e+00> : vector<256x64xf32>
    %16 = tpu.matmul %14, %15, %cst_11 {dimension_numbers = #tpu.dot_dimension_numbers<[1], [0], [0], [1], [0, 0, 1, 1], [], []>} : vector<256x64xbf16>, vector<64x64xbf16>, vector<256x64xf32> -> vector<256x64xf32>
    %c0_12 = arith.constant 0 : index
    %c0_13 = arith.constant 0 : index
    %17 = vector.load %arg6[%c0_12, %c0_13] : memref<1x64xf32, #tpu.memory_space<vmem>>, vector<1x64xf32>
    %18 = vector.broadcast %17 : vector<1x64xf32> to vector<256x64xf32>
    %19 = arith.addf %16, %18 : vector<256x64xf32>
    %cst_14 = arith.constant 0.000000e+00 : f32
    %20 = vector.broadcast %cst_14 : f32 to vector<256x64xf32>
    %21 = arith.maximumf %19, %20 : vector<256x64xf32>
    %22 = arith.truncf %21 : vector<256x64xf32> to vector<256x64xbf16>
    %c0_15 = arith.constant 0 : index
    %c0_16 = arith.constant 0 : index
    %23 = vector.load %arg7[%c0_15, %c0_16] : memref<64x64xbf16, #tpu.memory_space<vmem>>, vector<64x64xbf16>
    %cst_17 = arith.constant dense<0.000000e+00> : vector<256x64xf32>
    %24 = tpu.matmul %22, %23, %cst_17 {dimension_numbers = #tpu.dot_dimension_numbers<[1], [0], [0], [1], [0, 0, 1, 1], [], []>} : vector<256x64xbf16>, vector<64x64xbf16>, vector<256x64xf32> -> vector<256x64xf32>
    %c0_18 = arith.constant 0 : index
    %c0_19 = arith.constant 0 : index
    %25 = vector.load %arg8[%c0_18, %c0_19] : memref<1x64xf32, #tpu.memory_space<vmem>>, vector<1x64xf32>
    %26 = vector.broadcast %25 : vector<1x64xf32> to vector<256x64xf32>
    %27 = arith.addf %24, %26 : vector<256x64xf32>
    %cst_20 = arith.constant 0.000000e+00 : f32
    %28 = vector.broadcast %cst_20 : f32 to vector<256x64xf32>
    %29 = arith.maximumf %27, %28 : vector<256x64xf32>
    %30 = arith.truncf %29 : vector<256x64xf32> to vector<256x64xbf16>
    %c0_21 = arith.constant 0 : index
    %c0_22 = arith.constant 0 : index
    %31 = vector.load %arg9[%c0_21, %c0_22] : memref<64x128xbf16, #tpu.memory_space<vmem>>, vector<64x128xbf16>
    %cst_23 = arith.constant dense<0.000000e+00> : vector<256x128xf32>
    %32 = tpu.matmul %30, %31, %cst_23 {dimension_numbers = #tpu.dot_dimension_numbers<[1], [0], [0], [1], [0, 0, 1, 1], [], []>} : vector<256x64xbf16>, vector<64x128xbf16>, vector<256x128xf32> -> vector<256x128xf32>
    %c0_24 = arith.constant 0 : index
    %c0_25 = arith.constant 0 : index
    %33 = vector.load %arg10[%c0_24, %c0_25] : memref<1x128xf32, #tpu.memory_space<vmem>>, vector<1x128xf32>
    %34 = vector.broadcast %33 : vector<1x128xf32> to vector<256x128xf32>
    %35 = arith.addf %32, %34 : vector<256x128xf32>
    %cst_26 = arith.constant 0.000000e+00 : f32
    %36 = vector.broadcast %cst_26 : f32 to vector<256x128xf32>
    %37 = arith.maximumf %35, %36 : vector<256x128xf32>
    %38 = arith.truncf %37 : vector<256x128xf32> to vector<256x128xbf16>
    %c0_27 = arith.constant 0 : index
    %c0_28 = arith.constant 0 : index
    %39 = vector.load %arg11[%c0_27, %c0_28] : memref<128x256xbf16, #tpu.memory_space<vmem>>, vector<128x256xbf16>
    %cst_29 = arith.constant dense<0.000000e+00> : vector<256x256xf32>
    %40 = tpu.matmul %38, %39, %cst_29 {dimension_numbers = #tpu.dot_dimension_numbers<[1], [0], [0], [1], [0, 0, 1, 1], [], []>} : vector<256x128xbf16>, vector<128x256xbf16>, vector<256x256xf32> -> vector<256x256xf32>
    %c0_30 = arith.constant 0 : index
    %c0_31 = arith.constant 0 : index
    %41 = vector.load %arg12[%c0_30, %c0_31] : memref<1x256xf32, #tpu.memory_space<vmem>>, vector<1x256xf32>
    %42 = vector.broadcast %41 : vector<1x256xf32> to vector<256x256xf32>
    %43 = arith.addf %40, %42 : vector<256x256xf32>
    %cst_32 = arith.constant 0.000000e+00 : f32
    %44 = vector.broadcast %cst_32 : f32 to vector<256x256xf32>
    %45 = arith.maximumf %43, %44 : vector<256x256xf32>
    %cst_33 = arith.constant 9.99999997E-7 : f32
    %46 = vector.broadcast %cst_33 : f32 to vector<256x256xf32>
    %47 = arith.maximumf %45, %46 : vector<256x256xf32>
    %48 = arith.mulf %47, %47 : vector<256x256xf32>
    %49 = arith.mulf %47, %48 : vector<256x256xf32>
    %50 = vector.shape_cast %49 : vector<256x256xf32> to vector<2x128x256xf32>
    %c0_34 = arith.constant 0 : index
    %c0_35 = arith.constant 0 : index
    %51 = vector.load %arg16[%c0_34, %c0_35] : memref<2x256xf32, #tpu.memory_space<vmem>>, vector<2x256xf32>
    %cst_36 = arith.constant dense<0.000000e+00> : vector<2x256xf32>
    %52 = vector.multi_reduction <add>, %50, %cst_36 [1] : vector<2x128x256xf32> to vector<2x256xf32>
    %53 = arith.addf %51, %52 : vector<2x256xf32>
    %c0_37 = arith.constant 0 : index
    %c0_38 = arith.constant 0 : index
    %54 = vector.load %arg16[%c0_37, %c0_38] : memref<2x256xf32, #tpu.memory_space<vmem>>, vector<2x256xf32>
    tpu.vector_store %arg16[%c0_37, %c0_38], %53 {strides = array<i32>} : memref<2x256xf32, #tpu.memory_space<vmem>>, vector<2x256xf32>,
    %c0_i32_39 = arith.constant 0 : i32
    %55 = arith.cmpi eq, %arg1, %c0_i32_39 : i32
    %56 = arith.extui %55 : i1 to i32
    %c0_i32_40 = arith.constant 0 : i32
    %57 = arith.cmpi ne, %56, %c0_i32_40 : i32
    scf.if %57 {
      %c0_41 = arith.constant 0 : index
      %c0_42 = arith.constant 0 : index
      %58 = vector.load %arg16[%c0_41, %c0_42] : memref<2x256xf32, #tpu.memory_space<vmem>>, vector<2x256xf32>
      %cst_43 = arith.constant 7.812500e-03 : f32
      %59 = vector.broadcast %cst_43 : f32 to vector<2x256xf32>
      %60 = arith.mulf %58, %59 : vector<2x256xf32>
      %61 = math.log %60 : vector<2x256xf32>
      %cst_44 = arith.constant 0.333333343 : f32
      %62 = vector.broadcast %cst_44 : f32 to vector<2x256xf32>
      %63 = arith.mulf %61, %62 : vector<2x256xf32>
      %64 = math.exp %63 : vector<2x256xf32>
      %c0_45 = arith.constant 0 : index
      %c0_46 = arith.constant 0 : index
      %65 = vector.load %arg13[%c0_45, %c0_46] : memref<256x128xf32, #tpu.memory_space<vmem>>, vector<256x128xf32>
      %cst_47 = arith.constant dense<0.000000e+00> : vector<2x128xf32>
      %66 = tpu.matmul %64, %65, %cst_47 {dimension_numbers = #tpu.dot_dimension_numbers<[1], [0], [0], [1], [0, 0, 1, 1], [], []>} : vector<2x256xf32>, vector<256x128xf32>, vector<2x128xf32> -> vector<2x128xf32>
      %c0_48 = arith.constant 0 : index
      %c0_49 = arith.constant 0 : index
      %67 = vector.load %arg14[%c0_48, %c0_49] : memref<1x128xf32, #tpu.memory_space<vmem>>, vector<1x128xf32>
      %68 = vector.broadcast %67 : vector<1x128xf32> to vector<2x128xf32>
      %69 = arith.addf %66, %68 : vector<2x128xf32>
      %70 = vector.shape_cast %69 : vector<2x128xf32> to vector<1x2x128xf32>
      %c0_50 = arith.constant 0 : index
      %c0_51 = arith.constant 0 : index
      %c0_52 = arith.constant 0 : index
      %71 = vector.load %arg15[%c0_50, %c0_51, %c0_52] : memref<1x2x128xf32, #tpu.memory_space<vmem>>, vector<1x2x128xf32>
      tpu.vector_store %arg15[%c0_50, %c0_51, %c0_52], %70 {strides = array<i32>} : memref<1x2x128xf32, #tpu.memory_space<vmem>>, vector<1x2x128xf32>,
    } else {
    }
    return
  }
  func.func @transform_0(%arg0: i32, %arg1: i32) -> (i32, i32, i32, i32) {
    %c0_i32 = arith.constant 0 : i32
    %c0_i32_0 = arith.constant 0 : i32
    %c0_i32_1 = arith.constant 0 : i32
    return %arg0, %c0_i32, %arg1, %c0_i32_0 : i32, i32, i32, i32
  }
  func.func @transform_1(%arg0: i32, %arg1: i32) -> (i32, i32) {
    %c0_i32 = arith.constant 0 : i32
    %c0_i32_0 = arith.constant 0 : i32
    %c0_i32_1 = arith.constant 0 : i32
    return %c0_i32, %c0_i32_0 : i32, i32
  }
  func.func @transform_2(%arg0: i32, %arg1: i32) -> (i32, i32) {
    %c0_i32 = arith.constant 0 : i32
    %c0_i32_0 = arith.constant 0 : i32
    %c0_i32_1 = arith.constant 0 : i32
    return %c0_i32, %c0_i32_0 : i32, i32
  }
  func.func @transform_3(%arg0: i32, %arg1: i32) -> (i32, i32) {
    %c0_i32 = arith.constant 0 : i32
    %c0_i32_0 = arith.constant 0 : i32
    %c0_i32_1 = arith.constant 0 : i32
    return %c0_i32, %c0_i32_0 : i32, i32
  }
  func.func @transform_4(%arg0: i32, %arg1: i32) -> (i32, i32) {
    %c0_i32 = arith.constant 0 : i32
    %c0_i32_0 = arith.constant 0 : i32
    %c0_i32_1 = arith.constant 0 : i32
    return %c0_i32, %c0_i32_0 : i32, i32
  }
  func.func @transform_5(%arg0: i32, %arg1: i32) -> (i32, i32) {
    %c0_i32 = arith.constant 0 : i32
    %c0_i32_0 = arith.constant 0 : i32
    %c0_i32_1 = arith.constant 0 : i32
    return %c0_i32, %c0_i32_0 : i32, i32
  }
  func.func @transform_6(%arg0: i32, %arg1: i32) -> (i32, i32) {
    %c0_i32 = arith.constant 0 : i32
    %c0_i32_0 = arith.constant 0 : i32
    %c0_i32_1 = arith.constant 0 : i32
    return %c0_i32, %c0_i32_0 : i32, i32
  }
  func.func @transform_7(%arg0: i32, %arg1: i32) -> (i32, i32) {
    %c0_i32 = arith.constant 0 : i32
    %c0_i32_0 = arith.constant 0 : i32
    %c0_i32_1 = arith.constant 0 : i32
    return %c0_i32, %c0_i32_0 : i32, i32
  }
  func.func @transform_8(%arg0: i32, %arg1: i32) -> (i32, i32) {
    %c0_i32 = arith.constant 0 : i32
    %c0_i32_0 = arith.constant 0 : i32
    %c0_i32_1 = arith.constant 0 : i32
    return %c0_i32, %c0_i32_0 : i32, i32
  }
  func.func @transform_9(%arg0: i32, %arg1: i32) -> (i32, i32) {
    %c0_i32 = arith.constant 0 : i32
    %c0_i32_0 = arith.constant 0 : i32
    %c0_i32_1 = arith.constant 0 : i32
    return %c0_i32, %c0_i32_0 : i32, i32
  }
  func.func @transform_10(%arg0: i32, %arg1: i32) -> (i32, i32) {
    %c0_i32 = arith.constant 0 : i32
    %c0_i32_0 = arith.constant 0 : i32
    %c0_i32_1 = arith.constant 0 : i32
    return %c0_i32, %c0_i32_0 : i32, i32
  }
  func.func @transform_11(%arg0: i32, %arg1: i32) -> (i32, i32) {
    %c0_i32 = arith.constant 0 : i32
    %c0_i32_0 = arith.constant 0 : i32
    %c0_i32_1 = arith.constant 0 : i32
    return %c0_i32, %c0_i32_0 : i32, i32
  }
  func.func @transform_12(%arg0: i32, %arg1: i32) -> (i32, i32) {
    %c0_i32 = arith.constant 0 : i32
    %c0_i32_0 = arith.constant 0 : i32
    %c0_i32_1 = arith.constant 0 : i32
    return %c0_i32, %c0_i32_0 : i32, i32
  }
  func.func @transform_13(%arg0: i32, %arg1: i32) -> (i32, i32, i32) {
    %c0_i32 = arith.constant 0 : i32
    %c0_i32_0 = arith.constant 0 : i32
    %c0_i32_1 = arith.constant 0 : i32
    return %arg0, %c0_i32, %c0_i32_0 : i32, i32, i32
  }
}

</mosaic_0001>

<llo_original>
// kernel: tpu_custom_call.1
$region0: #{tpu_custom_call.1}
  #allocation0 [shape = 'u32[]', space=smem, size = 0x4, offset = 0x4, fixed_abs, tag = 'smem constant byte address 0x4 - core index']
  #allocation1 [shape = 'u32[144,128]{1,0:T(1,128)}', space=vmem, size = 0x12000, scoped, tag = 'internal scratch']
  #allocation2 [shape = 'f32[2,256]{1,0:T(2,128)}', space=vmem, size = 0x800, scoped, tag = 'scratch operand']
  %s0 = inlined_call_operand.vmem [shape: f32[2,2,128,8], index: 0, kind: input, shape index: {}]
  %s1 = inlined_call_operand.vmem [shape: bf16[8,64], index: 1, kind: input, shape index: {}]
  %s2 = inlined_call_operand.vmem [shape: f32[1,64], index: 2, kind: input, shape index: {}]
  %s3 = inlined_call_operand.vmem [shape: bf16[64,64], index: 3, kind: input, shape index: {}]
  %s4 = inlined_call_operand.vmem [shape: f32[1,64], index: 4, kind: input, shape index: {}]
  %s5 = inlined_call_operand.vmem [shape: bf16[64,64], index: 5, kind: input, shape index: {}]
  %s6 = inlined_call_operand.vmem [shape: f32[1,64], index: 6, kind: input, shape index: {}]
  %s7 = inlined_call_operand.vmem [shape: bf16[64,128], index: 7, kind: input, shape index: {}]
  %s8 = inlined_call_operand.vmem [shape: f32[1,128], index: 8, kind: input, shape index: {}]
  %s9 = inlined_call_operand.vmem [shape: bf16[128,256], index: 9, kind: input, shape index: {}]
  %s10 = inlined_call_operand.vmem [shape: f32[1,256], index: 10, kind: input, shape index: {}]
  %s11 = inlined_call_operand.vmem [shape: f32[256,128], index: 11, kind: input, shape index: {}]
  %s12 = inlined_call_operand.vmem [shape: f32[1,128], index: 12, kind: input, shape index: {}]
  %s13 = inlined_call_operand.hbm [shape: f32[2,2,128], index: 13, kind: output, shape index: {}]
  %s14 = sld [smem:[#allocation0]]
  $region93: #{tpu_custom_call.1} parent=0
    _
  %s16 = ssub.s32 1, %s14
  %s17 = scalar_select 0, %s16, %s14
  $region1: #{tpu_custom_call.1} parent=0
    #allocation3 [shape = 'u8[2048]{0}', space=vmem, size = 0x800, scoped, tag = 'output window, operand 0']
    #allocation4 [shape = 's32[2]{0}', space=sflag, size = 0x8, scoped, tag = 'scoped memory for tpu_custom_call.1']
    %18 = vsyncpa [#allocation4], 0
    %s19 = scalar_lea.sflag [#allocation4], 1
    %20 = vsyncpa %s19, 0
    loop: start=0, step=1, limit=4
    $region2: #{tpu_custom_call.1} parent=1 // loop_pre_header
      _
    $region3: #{tpu_custom_call.1} parent=1 // loop_header
      %s22 = sphi 0, %s26
      %p23 = scmp.ge.s32.totalorder %s22, 4
      %s29 = sphi 0, %s41
      %s30 = sphi 0, %s37
      %s31 = sphi 0, %s29
      %s32 = sphi 0, %s30
      %s33 = sphi 0, %s31
      %s34 = sphi 0, %s32
      %s46 = sphi 0, %s48
      %s49 = sphi 0, %s46
      %s50 = sphi 0, %s49
      %s66 = sphi 0, %s50
      %s70 = sphi 0, %s70
      %s72 = sphi 0, %s70
      %s73 = sphi 0, %s72
      %s87 = sphi 0, %s73
      %s91 = sphi 0, %s91
      %s93 = sphi 0, %s91
      %s94 = sphi 0, %s93
      %s108 = sphi 0, %s94
      %s112 = sphi 0, %s112
      %s114 = sphi 0, %s112
      %s115 = sphi 0, %s114
      %s129 = sphi 0, %s115
      %s133 = sphi 0, %s133
      %s135 = sphi 0, %s133
      %s136 = sphi 0, %s135
      %s150 = sphi 0, %s136
      %s154 = sphi 0, %s154
      %s156 = sphi 0, %s154
      %s157 = sphi 0, %s156
      %s171 = sphi 0, %s157
      %s175 = sphi 0, %s175
      %s177 = sphi 0, %s175
      %s178 = sphi 0, %s177
      %s192 = sphi 0, %s178
      %s196 = sphi 0, %s196
      %s198 = sphi 0, %s196
      %s199 = sphi 0, %s198
      %s213 = sphi 0, %s199
      %s217 = sphi 0, %s217
      %s219 = sphi 0, %s217
      %s220 = sphi 0, %s219
      %s234 = sphi 0, %s220
      %s238 = sphi 0, %s238
      %s240 = sphi 0, %s238
      %s241 = sphi 0, %s240
      %s255 = sphi 0, %s241
      %s259 = sphi 0, %s259
      %s261 = sphi 0, %s259
      %s262 = sphi 0, %s261
      %s276 = sphi 0, %s262
      %s280 = sphi 0, %s280
      %s282 = sphi 0, %s280
      %s283 = sphi 0, %s282
      %s297 = sphi 0, %s283
      %s301 = sphi 0, %s301
      %s303 = sphi 0, %s301
      %s304 = sphi 0, %s303
      %s318 = sphi 0, %s304
      %s324 = sphi 0, %s326
      %s327 = sphi 0, %s324
      %s328 = sphi 0, %s327
      %s344 = sphi 0, %s328
    $region4: #{tpu_custom_call.1} parent=1 // loop_header_branch
      %25 = sbr.rel (%p23) target = $region8
    $region5: #{tpu_custom_call.1} parent=1 // loop_body
      %s27 = ssub.s32 %s22, 1
      %s28 = ssub.s32 %s22, 2
      %s35 = sadd.s32 1, %s30
      %p36 = scmp.ge.s32.totalorder %s35, 1
      %s37 = scalar_select %p36, 0, %s35
      %s38 = sadd.s32 1, %s29
      %s39 = scalar_select %p36, %s38, %s29
      %p40 = scmp.ge.s32.totalorder %s39, 2
      %s41 = scalar_select %p40, 0, %s39
      %s42 = ssub.s32 %s29, %s41
      %s43 = ssub.s32 %s30, %s37
      %s44 = sor.u32 %s42, %s43
      %p45 = scmp.eq.s32.totalorder %s44, 0
      %s47 = sadd.s32 %s46, 1
      %s48 = scalar_select %p45, %s46, %s47
      %p51 = pneg %p45
      %p52 = scmp.eq.s32.totalorder %s22, 1
      %p53 = por %p51, %p52
      %p54 = scmp.ne.s32.totalorder %s46, %s49
      %p55 = scmp.eq.s32.totalorder %s22, 0
      %p56 = por %p54, %p55
      %p57 = scmp.ne.s32.totalorder %s46, %s49
      %p58 = scmp.eq.s32.totalorder %s27, 1
      %p59 = por %p57, %p58
      %p60 = scmp.ne.s32.totalorder %s49, %s50
      %p61 = scmp.eq.s32.totalorder %s27, 0
      %p62 = por %p60, %p61
      %p63 = scmp.ne.s32.totalorder %s49, %s50
      %p64 = scmp.eq.s32.totalorder %s28, 1
      %p65 = por %p63, %p64
      %p67 = scmp.ne.s32.totalorder %s50, %s66
      %p68 = scmp.eq.s32.totalorder %s28, 0
      %p69 = por %p67, %p68
      %s71 = sadd.s32 %s70, 1
      %p74 = scmp.eq.s32.totalorder %s22, 1
      %p75 = scmp.ne.s32.totalorder %s70, %s72
      %p76 = scmp.eq.s32.totalorder %s22, 0
      %p77 = por %p75, %p76
      %p78 = scmp.ne.s32.totalorder %s70, %s72
      %p79 = scmp.eq.s32.totalorder %s27, 1
      %p80 = por %p78, %p79
      %p81 = scmp.ne.s32.totalorder %s72, %s73
      %p82 = scmp.eq.s32.totalorder %s27, 0
      %p83 = por %p81, %p82
      %p84 = scmp.ne.s32.totalorder %s72, %s73
      %p85 = scmp.eq.s32.totalorder %s28, 1
      %p86 = por %p84, %p85
      %p88 = scmp.ne.s32.totalorder %s73, %s87
      %p89 = scmp.eq.s32.totalorder %s28, 0
      %p90 = por %p88, %p89
      %s92 = sadd.s32 %s91, 1
      %p95 = scmp.eq.s32.totalorder %s22, 1
      %p96 = scmp.ne.s32.totalorder %s91, %s93
      %p97 = scmp.eq.s32.totalorder %s22, 0
      %p98 = por %p96, %p97
      %p99 = scmp.ne.s32.totalorder %s91, %s93
      %p100 = scmp.eq.s32.totalorder %s27, 1
      %p101 = por %p99, %p100
      %p102 = scmp.ne.s32.totalorder %s93, %s94
      %p103 = scmp.eq.s32.totalorder %s27, 0
      %p104 = por %p102, %p103
      %p105 = scmp.ne.s32.totalorder %s93, %s94
      %p106 = scmp.eq.s32.totalorder %s28, 1
      %p107 = por %p105, %p106
      %p109 = scmp.ne.s32.totalorder %s94, %s108
      %p110 = scmp.eq.s32.totalorder %s28, 0
      %p111 = por %p109, %p110
      %s113 = sadd.s32 %s112, 1
      %p116 = scmp.eq.s32.totalorder %s22, 1
      %p117 = scmp.ne.s32.totalorder %s112, %s114
      %p118 = scmp.eq.s32.totalorder %s22, 0
      %p119 = por %p117, %p118
      %p120 = scmp.ne.s32.totalorder %s112, %s114
      %p121 = scmp.eq.s32.totalorder %s27, 1
      %p122 = por %p120, %p121
      %p123 = scmp.ne.s32.totalorder %s114, %s115
      %p124 = scmp.eq.s32.totalorder %s27, 0
      %p125 = por %p123, %p124
      %p126 = scmp.ne.s32.totalorder %s114, %s115
      %p127 = scmp.eq.s32.totalorder %s28, 1
      %p128 = por %p126, %p127
      %p130 = scmp.ne.s32.totalorder %s115, %s129
      %p131 = scmp.eq.s32.totalorder %s28, 0
      %p132 = por %p130, %p131
      %s134 = sadd.s32 %s133, 1
      %p137 = scmp.eq.s32.totalorder %s22, 1
      %p138 = scmp.ne.s32.totalorder %s133, %s135
      %p139 = scmp.eq.s32.totalorder %s22, 0
      %p140 = por %p138, %p139
      %p141 = scmp.ne.s32.totalorder %s133, %s135
      %p142 = scmp.eq.s32.totalorder %s27, 1
      %p143 = por %p141, %p142
      %p144 = scmp.ne.s32.totalorder %s135, %s136
      %p145 = scmp.eq.s32.totalorder %s27, 0
      %p146 = por %p144, %p145
      %p147 = scmp.ne.s32.totalorder %s135, %s136
      %p148 = scmp.eq.s32.totalorder %s28, 1
      %p149 = por %p147, %p148
      %p151 = scmp.ne.s32.totalorder %s136, %s150
      %p152 = scmp.eq.s32.totalorder %s28, 0
      %p153 = por %p151, %p152
      %s155 = sadd.s32 %s154, 1
      %p158 = scmp.eq.s32.totalorder %s22, 1
      %p159 = scmp.ne.s32.totalorder %s154, %s156
      %p160 = scmp.eq.s32.totalorder %s22, 0
      %p161 = por %p159, %p160
      %p162 = scmp.ne.s32.totalorder %s154, %s156
      %p163 = scmp.eq.s32.totalorder %s27, 1
      %p164 = por %p162, %p163
      %p165 = scmp.ne.s32.totalorder %s156, %s157
      %p166 = scmp.eq.s32.totalorder %s27, 0
      %p167 = por %p165, %p166
      %p168 = scmp.ne.s32.totalorder %s156, %s157
      %p169 = scmp.eq.s32.totalorder %s28, 1
      %p170 = por %p168, %p169
      %p172 = scmp.ne.s32.totalorder %s157, %s171
      %p173 = scmp.eq.s32.totalorder %s28, 0
      %p174 = por %p172, %p173
      %s176 = sadd.s32 %s175, 1
      %p179 = scmp.eq.s32.totalorder %s22, 1
      %p180 = scmp.ne.s32.totalorder %s175, %s177
      %p181 = scmp.eq.s32.totalorder %s22, 0
      %p182 = por %p180, %p181
      %p183 = scmp.ne.s32.totalorder %s175, %s177
      %p184 = scmp.eq.s32.totalorder %s27, 1
      %p185 = por %p183, %p184
      %p186 = scmp.ne.s32.totalorder %s177, %s178
      %p187 = scmp.eq.s32.totalorder %s27, 0
      %p188 = por %p186, %p187
      %p189 = scmp.ne.s32.totalorder %s177, %s178
      %p190 = scmp.eq.s32.totalorder %s28, 1
      %p191 = por %p189, %p190
      %p193 = scmp.ne.s32.totalorder %s178, %s192
      %p194 = scmp.eq.s32.totalorder %s28, 0
      %p195 = por %p193, %p194
      %s197 = sadd.s32 %s196, 1
      %p200 = scmp.eq.s32.totalorder %s22, 1
      %p201 = scmp.ne.s32.totalorder %s196, %s198
      %p202 = scmp.eq.s32.totalorder %s22, 0
      %p203 = por %p201, %p202
      %p204 = scmp.ne.s32.totalorder %s196, %s198
      %p205 = scmp.eq.s32.totalorder %s27, 1
      %p206 = por %p204, %p205
      %p207 = scmp.ne.s32.totalorder %s198, %s199
      %p208 = scmp.eq.s32.totalorder %s27, 0
      %p209 = por %p207, %p208
      %p210 = scmp.ne.s32.totalorder %s198, %s199
      %p211 = scmp.eq.s32.totalorder %s28, 1
      %p212 = por %p210, %p211
      %p214 = scmp.ne.s32.totalorder %s199, %s213
      %p215 = scmp.eq.s32.totalorder %s28, 0
      %p216 = por %p214, %p215
      %s218 = sadd.s32 %s217, 1
      %p221 = scmp.eq.s32.totalorder %s22, 1
      %p222 = scmp.ne.s32.totalorder %s217, %s219
      %p223 = scmp.eq.s32.totalorder %s22, 0
      %p224 = por %p222, %p223
      %p225 = scmp.ne.s32.totalorder %s217, %s219
      %p226 = scmp.eq.s32.totalorder %s27, 1
      %p227 = por %p225, %p226
      %p228 = scmp.ne.s32.totalorder %s219, %s220
      %p229 = scmp.eq.s32.totalorder %s27, 0
      %p230 = por %p228, %p229
      %p231 = scmp.ne.s32.totalorder %s219, %s220
      %p232 = scmp.eq.s32.totalorder %s28, 1
      %p233 = por %p231, %p232
      %p235 = scmp.ne.s32.totalorder %s220, %s234
      %p236 = scmp.eq.s32.totalorder %s28, 0
      %p237 = por %p235, %p236
      %s239 = sadd.s32 %s238, 1
      %p242 = scmp.eq.s32.totalorder %s22, 1
      %p243 = scmp.ne.s32.totalorder %s238, %s240
      %p244 = scmp.eq.s32.totalorder %s22, 0
      %p245 = por %p243, %p244
      %p246 = scmp.ne.s32.totalorder %s238, %s240
      %p247 = scmp.eq.s32.totalorder %s27, 1
      %p248 = por %p246, %p247
      %p249 = scmp.ne.s32.totalorder %s240, %s241
      %p250 = scmp.eq.s32.totalorder %s27, 0
      %p251 = por %p249, %p250
      %p252 = scmp.ne.s32.totalorder %s240, %s241
      %p253 = scmp.eq.s32.totalorder %s28, 1
      %p254 = por %p252, %p253
      %p256 = scmp.ne.s32.totalorder %s241, %s255
      %p257 = scmp.eq.s32.totalorder %s28, 0
      %p258 = por %p256, %p257
      %s260 = sadd.s32 %s259, 1
      %p263 = scmp.eq.s32.totalorder %s22, 1
      %p264 = scmp.ne.s32.totalorder %s259, %s261
      %p265 = scmp.eq.s32.totalorder %s22, 0
      %p266 = por %p264, %p265
      %p267 = scmp.ne.s32.totalorder %s259, %s261
      %p268 = scmp.eq.s32.totalorder %s27, 1
      %p269 = por %p267, %p268
      %p270 = scmp.ne.s32.totalorder %s261, %s262
      %p271 = scmp.eq.s32.totalorder %s27, 0
      %p272 = por %p270, %p271
      %p273 = scmp.ne.s32.totalorder %s261, %s262
      %p274 = scmp.eq.s32.totalorder %s28, 1
      %p275 = por %p273, %p274
      %p277 = scmp.ne.s32.totalorder %s262, %s276
      %p278 = scmp.eq.s32.totalorder %s28, 0
      %p279 = por %p277, %p278
      %s281 = sadd.s32 %s280, 1
      %p284 = scmp.eq.s32.totalorder %s22, 1
      %p285 = scmp.ne.s32.totalorder %s280, %s282
      %p286 = scmp.eq.s32.totalorder %s22, 0
      %p287 = por %p285, %p286
      %p288 = scmp.ne.s32.totalorder %s280, %s282
      %p289 = scmp.eq.s32.totalorder %s27, 1
      %p290 = por %p288, %p289
      %p291 = scmp.ne.s32.totalorder %s282, %s283
      %p292 = scmp.eq.s32.totalorder %s27, 0
      %p293 = por %p291, %p292
      %p294 = scmp.ne.s32.totalorder %s282, %s283
      %p295 = scmp.eq.s32.totalorder %s28, 1
      %p296 = por %p294, %p295
      %p298 = scmp.ne.s32.totalorder %s283, %s297
      %p299 = scmp.eq.s32.totalorder %s28, 0
      %p300 = por %p298, %p299
      %s302 = sadd.s32 %s301, 1
      %p305 = scmp.eq.s32.totalorder %s22, 1
      %p306 = scmp.ne.s32.totalorder %s301, %s303
      %p307 = scmp.eq.s32.totalorder %s22, 0
      %p308 = por %p306, %p307
      %p309 = scmp.ne.s32.totalorder %s301, %s303
      %p310 = scmp.eq.s32.totalorder %s27, 1
      %p311 = por %p309, %p310
      %p312 = scmp.ne.s32.totalorder %s303, %s304
      %p313 = scmp.eq.s32.totalorder %s27, 0
      %p314 = por %p312, %p313
      %p315 = scmp.ne.s32.totalorder %s303, %s304
      %p316 = scmp.eq.s32.totalorder %s28, 1
      %p317 = por %p315, %p316
      %p319 = scmp.ne.s32.totalorder %s304, %s318
      %p320 = scmp.eq.s32.totalorder %s28, 0
      %p321 = por %p319, %p320
      %s322 = ssub.s32 %s29, %s41
      %p323 = scmp.eq.s32.totalorder %s322, 0
      %s325 = sadd.s32 %s324, 1
      %s326 = scalar_select %p323, %s324, %s325
      %p329 = pneg %p323
      %p330 = scmp.eq.s32.totalorder %s22, 1
      %p331 = por %p329, %p330
      %p332 = scmp.ne.s32.totalorder %s324, %s327
      %p333 = scmp.eq.s32.totalorder %s22, 0
      %p334 = por %p332, %p333
      %p335 = scmp.ne.s32.totalorder %s324, %s327
      %p336 = scmp.eq.s32.totalorder %s27, 1
      %p337 = por %p335, %p336
      %p338 = scmp.ne.s32.totalorder %s327, %s328
      %p339 = scmp.eq.s32.totalorder %s27, 0
      %p340 = por %p338, %p339
      %p341 = scmp.ne.s32.totalorder %s327, %s328
      %p342 = scmp.eq.s32.totalorder %s28, 1
      %p343 = por %p341, %p342
      %p345 = scmp.ne.s32.totalorder %s328, %s344
      %p346 = scmp.eq.s32.totalorder %s28, 0
      %p347 = por %p345, %p346
      %p348 = scmp.le.s32.totalorder 1, %s22
      %p349 = scmp.lt.s32.totalorder %s22, 3
      %p350 = pnand %p348, %p349
      %p351 = pneg %p350
      // Predicated region
      $region9: #{tpu_custom_call.1} parent=5 // pred_check
        _
      $region10: #{tpu_custom_call.1} parent=5 // pred_check_branch
        %353 = sbr.rel (%p350) target = $region12
      $region11: #{tpu_custom_call.1} parent=5 // pred_region
        %s354 = ssub.s32 %s22, 1
        // Predicated region
        $region13: #{tpu_custom_call.1} parent=11 // pred_check
          %p355 = pneg %p83
        $region14: #{tpu_custom_call.1} parent=11 // pred_check_branch
          %357 = sbr.rel (%p355) target = $region16
        $region15: #{tpu_custom_call.1} parent=11 // pred_region
          _
        $region16: #{tpu_custom_call.1} parent=11 // pred_fallthru
          _
        // Predicated region
        $region17: #{tpu_custom_call.1} parent=11 // pred_check
          %p358 = pneg %p104
        $region18: #{tpu_custom_call.1} parent=11 // pred_check_branch
          %360 = sbr.rel (%p358) target = $region20
        $region19: #{tpu_custom_call.1} parent=11 // pred_region
          _
        $region20: #{tpu_custom_call.1} parent=11 // pred_fallthru
          _
        // Predicated region
        $region21: #{tpu_custom_call.1} parent=11 // pred_check
          %p361 = pneg %p125
        $region22: #{tpu_custom_call.1} parent=11 // pred_check_branch
          %363 = sbr.rel (%p361) target = $region24
        $region23: #{tpu_custom_call.1} parent=11 // pred_region
          _
        $region24: #{tpu_custom_call.1} parent=11 // pred_fallthru
          _
        // Predicated region
        $region25: #{tpu_custom_call.1} parent=11 // pred_check
          %p364 = pneg %p146
        $region26: #{tpu_custom_call.1} parent=11 // pred_check_branch
          %366 = sbr.rel (%p364) target = $region28
        $region27: #{tpu_custom_call.1} parent=11 // pred_region
          _
        $region28: #{tpu_custom_call.1} parent=11 // pred_fallthru
          _
        // Predicated region
        $region29: #{tpu_custom_call.1} parent=11 // pred_check
          %p367 = pneg %p167
        $region30: #{tpu_custom_call.1} parent=11 // pred_check_branch
          %369 = sbr.rel (%p367) target = $region32
        $region31: #{tpu_custom_call.1} parent=11 // pred_region
          _
        $region32: #{tpu_custom_call.1} parent=11 // pred_fallthru
          _
        // Predicated region
        $region33: #{tpu_custom_call.1} parent=11 // pred_check
          %p370 = pneg %p188
        $region34: #{tpu_custom_call.1} parent=11 // pred_check_branch
          %372 = sbr.rel (%p370) target = $region36
        $region35: #{tpu_custom_call.1} parent=11 // pred_region
          _
        $region36: #{tpu_custom_call.1} parent=11 // pred_fallthru
          _
        // Predicated region
        $region37: #{tpu_custom_call.1} parent=11 // pred_check
          %p373 = pneg %p209
        $region38: #{tpu_custom_call.1} parent=11 // pred_check_branch
          %375 = sbr.rel (%p373) target = $region40
        $region39: #{tpu_custom_call.1} parent=11 // pred_region
          _
        $region40: #{tpu_custom_call.1} parent=11 // pred_fallthru
          _
        // Predicated region
        $region41: #{tpu_custom_call.1} parent=11 // pred_check
          %p376 = pneg %p230
        $region42: #{tpu_custom_call.1} parent=11 // pred_check_branch
          %378 = sbr.rel (%p376) target = $region44
        $region43: #{tpu_custom_call.1} parent=11 // pred_region
          _
        $region44: #{tpu_custom_call.1} parent=11 // pred_fallthru
          _
        // Predicated region
        $region45: #{tpu_custom_call.1} parent=11 // pred_check
          %p379 = pneg %p251
        $region46: #{tpu_custom_call.1} parent=11 // pred_check_branch
          %381 = sbr.rel (%p379) target = $region48
        $region47: #{tpu_custom_call.1} parent=11 // pred_region
          _
        $region48: #{tpu_custom_call.1} parent=11 // pred_fallthru
          _
        // Predicated region
        $region49: #{tpu_custom_call.1} parent=11 // pred_check
          %p382 = pneg %p272
        $region50: #{tpu_custom_call.1} parent=11 // pred_check_branch
          %384 = sbr.rel (%p382) target = $region52
        $region51: #{tpu_custom_call.1} parent=11 // pred_region
          _
        $region52: #{tpu_custom_call.1} parent=11 // pred_fallthru
          _
        // Predicated region
        $region53: #{tpu_custom_call.1} parent=11 // pred_check
          %p385 = pneg %p293
        $region54: #{tpu_custom_call.1} parent=11 // pred_check_branch
          %387 = sbr.rel (%p385) target = $region56
        $region55: #{tpu_custom_call.1} parent=11 // pred_region
          _
        $region56: #{tpu_custom_call.1} parent=11 // pred_fallthru
          _
        // Predicated region
        $region57: #{tpu_custom_call.1} parent=11 // pred_check
          %p388 = pneg %p314
        $region58: #{tpu_custom_call.1} parent=11 // pred_check_branch
          %390 = sbr.rel (%p388) target = $region60
        $region59: #{tpu_custom_call.1} parent=11 // pred_region
          _
        $region60: #{tpu_custom_call.1} parent=11 // pred_fallthru
          _
      $region12: #{tpu_custom_call.1} parent=5 // pred_fallthru
        _
      %p391 = scmp.lt.s32.totalorder %s22, 2
      // Predicated region
      $region61: #{tpu_custom_call.1} parent=5 // pred_check
        %p392 = pneg %p391
      $region62: #{tpu_custom_call.1} parent=5 // pred_check_branch
        %394 = sbr.rel (%p392) target = $region64
      $region63: #{tpu_custom_call.1} parent=5 // pred_region
        // Predicated region
        $region65: #{tpu_custom_call.1} parent=63 // pred_check
          %p395 = pneg %p56
        $region66: #{tpu_custom_call.1} parent=63 // pred_check_branch
          %397 = sbr.rel (%p395) target = $region68
        $region67: #{tpu_custom_call.1} parent=63 // pred_region
          %s398 = smul.u32 16, %s30
          %p399 = scmp.lt.s32.totalorder %s29, 1
          %s400 = scalar_select %p399, %s29, 1
          %p401 = scmp.lt.s32.totalorder %s398, 15
          %s402 = scalar_select %p401, %s398, 15
          %s403 = smul.addr %s400, 32
          %s404 = sadd.s32 %s402, %s403
          %s405 = smul.addr %s404, 8
          %s406 = scalar_lea.vmem %s0, %s405
          %s407 = smul.u32 16, %s30
        $region68: #{tpu_custom_call.1} parent=63 // pred_fallthru
          _
      $region64: #{tpu_custom_call.1} parent=5 // pred_fallthru
        _
      %p408 = scmp.le.s32.totalorder 1, %s22
      %p409 = scmp.lt.s32.totalorder %s22, 3
      %p410 = pnand %p408, %p409
      %p411 = pneg %p410
      // Predicated region
      $region69: #{tpu_custom_call.1} parent=5 // pred_check
        _
      $region70: #{tpu_custom_call.1} parent=5 // pred_check_branch
        %413 = sbr.rel (%p410) target = $region72
      $region71: #{tpu_custom_call.1} parent=5 // pred_region
        %s414 = ssub.s32 %s22, 1
        %s415 = smul.u32 16, %s32
        %p416 = scmp.lt.s32.totalorder %s31, 1
        %s417 = scalar_select %p416, %s31, 1
        %p418 = scmp.lt.s32.totalorder %s415, 15
        %s419 = scalar_select %p418, %s415, 15
        %s420 = smul.addr %s417, 32
        %s421 = sadd.s32 %s419, %s420
        %s422 = smul.addr %s421, 8
        %s423 = scalar_lea.vmem %s0, %s422
        %p424 = pneg %p62
        %p425 = pneg %p59
        %p426 = pneg %p83
        %p427 = pneg %p80
        %p428 = pneg %p104
        %p429 = pneg %p101
        %p430 = pneg %p125
        %p431 = pneg %p122
        %p432 = pneg %p146
        %p433 = pneg %p143
        %p434 = pneg %p167
        %p435 = pneg %p164
        %p436 = pneg %p188
        %p437 = pneg %p185
        %p438 = pneg %p209
        %p439 = pneg %p206
        %p440 = pneg %p230
        %p441 = pneg %p227
        %p442 = pneg %p251
        %p443 = pneg %p248
        %p444 = pneg %p272
        %p445 = pneg %p269
        %p446 = pneg %p293
        %p447 = pneg %p290
        %p448 = pneg %p314
        %p449 = pneg %p311
        %p450 = pneg %p340
        %p451 = pneg %p337
        %s452 = sand.u32 %s327, 1
        %s453 = scalar_lea.sflag [#allocation4], %s452
        %s454 = sand.u32 %s327, 1
        %s455 = smul.addr %s454, 2
        %s456 = scalar_lea.vmem [#allocation3], %s455
        %s457 = smul.u32 16, %s32
        %p458 = scmp.lt.s32.totalorder %s31, 1
        %s459 = scalar_select %p458, %s31, 1
        %p460 = scmp.lt.s32.totalorder %s457, 15
        %s461 = scalar_select %p460, %s457, 15
        %s462 = smul.addr %s459, 32
        %s463 = sadd.s32 %s461, %s462
        %s464 = smul.addr %s463, 8
        %s465 = scalar_lea.vmem %s0, %s464
        %s466 = smul.u32 16, %s32
        %p468 = scmp.eq.s32.totalorder %s32, 0
        // Predicated region
        $region73: #{tpu_custom_call.1} parent=71 // pred_check
          %p469 = pneg %p468
        $region74: #{tpu_custom_call.1} parent=71 // pred_check_branch
          %471 = sbr.rel (%p469) target = $region76
        $region75: #{tpu_custom_call.1} parent=71 // pred_region
          %472 = vst [vmem:[#allocation2] sm:$0xf] 0.0
        $region76: #{tpu_custom_call.1} parent=71 // pred_fallthru
          _
        %v473 = vld [vmem:[%s465] sm:$0xff]
        %v474 = vld [vmem:[%s465 + $0x8] sm:$0xff]
        %v475 = vld [vmem:[%s465 + $0x10] sm:$0xff]
        %v476 = vld [vmem:[%s465 + $0x18] sm:$0xff]
        %v477 = vld [vmem:[%s465 + $0x20] sm:$0xff]
        %v478 = vld [vmem:[%s465 + $0x28] sm:$0xff]
        %v479 = vld [vmem:[%s465 + $0x30] sm:$0xff]
        %v480 = vld [vmem:[%s465 + $0x38] sm:$0xff]
        %v481 = vld [vmem:[%s465 + $0x40] sm:$0xff]
        %v482 = vld [vmem:[%s465 + $0x48] sm:$0xff]
        %v483 = vld [vmem:[%s465 + $0x50] sm:$0xff]
        %v484 = vld [vmem:[%s465 + $0x58] sm:$0xff]
        %v485 = vld [vmem:[%s465 + $0x60] sm:$0xff]
        %v486 = vld [vmem:[%s465 + $0x68] sm:$0xff]
        %v487 = vld [vmem:[%s465 + $0x70] sm:$0xff]
        %v488 = vld [vmem:[%s465 + $0x78] sm:$0xff]
        %v489 = vld [vmem:[%s465 + $0x80] sm:$0xff]
        %v490 = vld [vmem:[%s465 + $0x88] sm:$0xff]
        %v491 = vld [vmem:[%s465 + $0x90] sm:$0xff]
        %v492 = vld [vmem:[%s465 + $0x98] sm:$0xff]
        %v493 = vld [vmem:[%s465 + $0xa0] sm:$0xff]
        %v494 = vld [vmem:[%s465 + $0xa8] sm:$0xff]
        %v495 = vld [vmem:[%s465 + $0xb0] sm:$0xff]
        %v496 = vld [vmem:[%s465 + $0xb8] sm:$0xff]
        %v497 = vld [vmem:[%s465 + $0xc0] sm:$0xff]
        %v498 = vld [vmem:[%s465 + $0xc8] sm:$0xff]
        %v499 = vld [vmem:[%s465 + $0xd0] sm:$0xff]
        %v500 = vld [vmem:[%s465 + $0xd8] sm:$0xff]
        %v501 = vld [vmem:[%s465 + $0xe0] sm:$0xff]
        %v502 = vld [vmem:[%s465 + $0xe8] sm:$0xff]
        %v503 = vld [vmem:[%s465 + $0xf0] sm:$0xff]
        %v504 = vld [vmem:[%s465 + $0xf8] sm:$0xff]
        %v505 = vpack.c.bf16 %v474, %v473
        %v506 = vpack.c.bf16 %v476, %v475
        %v507 = vpack.c.bf16 %v478, %v477
        %v508 = vpack.c.bf16 %v480, %v479
        %v509 = vpack.c.bf16 %v482, %v481
        %v510 = vpack.c.bf16 %v484, %v483
        %v511 = vpack.c.bf16 %v486, %v485
        %v512 = vpack.c.bf16 %v488, %v487
        %v513 = vpack.c.bf16 %v490, %v489
        %v514 = vpack.c.bf16 %v492, %v491
        %v515 = vpack.c.bf16 %v494, %v493
        %v516 = vpack.c.bf16 %v496, %v495
        %v517 = vpack.c.bf16 %v498, %v497
        %v518 = vpack.c.bf16 %v500, %v499
        %v519 = vpack.c.bf16 %v502, %v501
        %v520 = vpack.c.bf16 %v504, %v503
        %v521 = vld [vmem:[%s1] sm:$0xf]
        %v522 = vld [vmem:[%s2] sm:$0x1]
        %v524 = vlaneseq
        %v525 = vshrl.u32 %v524, 7
        %v526 = vsub.s32 0, %v525
        %v527 = vrot.slane %v522, %v526
        %vm529 = vcmask 64512
        %v531 = vsel %vm529, %v505, 0
        %v534 = vsel %vm529, %v506, 0
        %v537 = vsel %vm529, %v507, 0
        %v540 = vsel %vm529, %v508, 0
        %v543 = vsel %vm529, %v509, 0
        %v546 = vsel %vm529, %v510, 0
        %v549 = vsel %vm529, %v511, 0
        %v552 = vsel %vm529, %v512, 0
        %v555 = vsel %vm529, %v513, 0
        %v558 = vsel %vm529, %v514, 0
        %v561 = vsel %vm529, %v515, 0
        %v564 = vsel %vm529, %v516, 0
        %v567 = vsel %vm529, %v517, 0
        %v570 = vsel %vm529, %v518, 0
        %v573 = vsel %vm529, %v519, 0
        %v576 = vsel %vm529, %v520, 0
        %vm578 = vcmask 1043456
        %v580 = vsel %vm578, %v521, 0
        %582 = vmatprep.subr.bf16.mxu0 0
        %583 = vmatpush1.bf16.msra.mxu0 %v580
        %584 = vmatprep.subr.bf16.mxu0 0
        %585 = vmatpush1.bf16.msra.mxu0 0
        %586 = vmatprep.subr.bf16.mxu0 0
        %587 = vmatpush1.bf16.msra.mxu0 0
        %588 = vmatprep.subr.bf16.mxu0 0
        %589 = vmatpush1.bf16.msra.mxu0 0
        %590 = vmatprep.subr.bf16.mxu0 0
        %591 = vmatpush1.bf16.msra.mxu0 0
        %592 = vmatprep.subr.bf16.mxu0 0
        %593 = vmatpush1.bf16.msra.mxu0 0
        %594 = vmatprep.subr.bf16.mxu0 0
        %595 = vmatpush1.bf16.msra.mxu0 0
        %596 = vmatprep.subr.bf16.mxu0 0
        %597 = vmatpush1.bf16.msra.mxu0 0
        %598 = vmatprep.subr.bf16.mxu0 0
        %599 = vmatpush1.bf16.msra.mxu0 0
        %600 = vmatprep.subr.bf16.mxu0 0
        %601 = vmatpush1.bf16.msra.mxu0 0
        %602 = vmatprep.subr.bf16.mxu0 0
        %603 = vmatpush1.bf16.msra.mxu0 0
        %604 = vmatprep.subr.bf16.mxu0 0
        %605 = vmatpush1.bf16.msra.mxu0 0
        %606 = vmatprep.subr.bf16.mxu0 0
        %607 = vmatpush1.bf16.msra.mxu0 0
        %608 = vmatprep.subr.bf16.mxu0 0
        %609 = vmatpush1.bf16.msra.mxu0 0
        %610 = vmatprep.subr.bf16.mxu0 0
        %611 = vmatpush1.bf16.msra.mxu0 0
        %612 = vmatprep.subr.bf16.mxu0 0
        %613 = vmatpush1.bf16.msra.mxu0 0
        %614 = vmatprep.mubr.bf16.mxu0 0
        %615 = vmatmul.mubr.bf16.gmra.mrb[0].mxu0 %v531
        %v616 = vpop.f32.mrb[0].mxu0
        %v617 = vadd.f32 %v527, %v616
        %v618 = vpop.f32.mrb[0].mxu0
        %v619 = vpop.f32.mrb[0].mxu0
        %v620 = vadd.f32 %v527, %v619
        %v621 = vpop.f32.mrb[0].mxu0
        %622 = vmatprep.mubr.bf16.mxu0 0
        %623 = vmatmul.mubr.bf16.gmra.mrb[0].mxu0 %v534
        %v624 = vpop.f32.mrb[0].mxu0
        %v625 = vadd.f32 %v527, %v624
        %v626 = vpop.f32.mrb[0].mxu0
        %v627 = vpop.f32.mrb[0].mxu0
        %v628 = vadd.f32 %v527, %v627
        %v629 = vpop.f32.mrb[0].mxu0
        %630 = vmatprep.mubr.bf16.mxu0 0
        %631 = vmatmul.mubr.bf16.gmra.mrb[0].mxu0 %v537
        %v632 = vpop.f32.mrb[0].mxu0
        %v633 = vadd.f32 %v527, %v632
        %v634 = vpop.f32.mrb[0].mxu0
        %v635 = vpop.f32.mrb[0].mxu0
        %v636 = vadd.f32 %v527, %v635
        %v637 = vpop.f32.mrb[0].mxu0
        %638 = vmatprep.mubr.bf16.mxu0 0
        %639 = vmatmul.mubr.bf16.gmra.mrb[0].mxu0 %v540
        %v640 = vpop.f32.mrb[0].mxu0
        %v641 = vadd.f32 %v527, %v640
        %v642 = vpop.f32.mrb[0].mxu0
        %v643 = vpop.f32.mrb[0].mxu0
        %v644 = vadd.f32 %v527, %v643
        %v645 = vpop.f32.mrb[0].mxu0
        %646 = vmatprep.mubr.bf16.mxu0 0
        %647 = vmatmul.mubr.bf16.gmra.mrb[0].mxu0 %v543
        %v648 = vpop.f32.mrb[0].mxu0
        %v649 = vadd.f32 %v527, %v648
        %v650 = vpop.f32.mrb[0].mxu0
        %v651 = vpop.f32.mrb[0].mxu0
        %v652 = vadd.f32 %v527, %v651
        %v653 = vpop.f32.mrb[0].mxu0
        %654 = vmatprep.mubr.bf16.mxu0 0
        %655 = vmatmul.mubr.bf16.gmra.mrb[0].mxu0 %v546
        %v656 = vpop.f32.mrb[0].mxu0
        %v657 = vadd.f32 %v527, %v656
        %v658 = vpop.f32.mrb[0].mxu0
        %v659 = vpop.f32.mrb[0].mxu0
        %v660 = vadd.f32 %v527, %v659
        %v661 = vpop.f32.mrb[0].mxu0
        %662 = vmatprep.mubr.bf16.mxu0 0
        %663 = vmatmul.mubr.bf16.gmra.mrb[0].mxu0 %v549
        %v664 = vpop.f32.mrb[0].mxu0
        %v665 = vadd.f32 %v527, %v664
        %v666 = vpop.f32.mrb[0].mxu0
        %v667 = vpop.f32.mrb[0].mxu0
        %v668 = vadd.f32 %v527, %v667
        %v669 = vpop.f32.mrb[0].mxu0
        %670 = vmatprep.mubr.bf16.mxu0 0
        %671 = vmatmul.mubr.bf16.gmra.mrb[0].mxu0 %v552
        %v672 = vpop.f32.mrb[0].mxu0
        %v673 = vadd.f32 %v527, %v672
        %v674 = vpop.f32.mrb[0].mxu0
        %v675 = vpop.f32.mrb[0].mxu0
        %v676 = vadd.f32 %v527, %v675
        %v677 = vpop.f32.mrb[0].mxu0
        %678 = vmatprep.mubr.bf16.mxu0 0
        %679 = vmatmul.mubr.bf16.gmra.mrb[0].mxu0 %v555
        %v680 = vpop.f32.mrb[0].mxu0
        %v681 = vadd.f32 %v527, %v680
        %v682 = vpop.f32.mrb[0].mxu0
        %v683 = vpop.f32.mrb[0].mxu0
        %v684 = vadd.f32 %v527, %v683
        %v685 = vpop.f32.mrb[0].mxu0
        %686 = vmatprep.mubr.bf16.mxu0 0
        %687 = vmatmul.mubr.bf16.gmra.mrb[0].mxu0 %v558
        %v688 = vpop.f32.mrb[0].mxu0
        %v689 = vadd.f32 %v527, %v688
        %v690 = vpop.f32.mrb[0].mxu0
        %v691 = vpop.f32.mrb[0].mxu0
        %v692 = vadd.f32 %v527, %v691
        %v693 = vpop.f32.mrb[0].mxu0
        %694 = vmatprep.mubr.bf16.mxu0 0
        %695 = vmatmul.mubr.bf16.gmra.mrb[0].mxu0 %v561
        %v696 = vpop.f32.mrb[0].mxu0
        %v697 = vadd.f32 %v527, %v696
        %v698 = vpop.f32.mrb[0].mxu0
        %v699 = vpop.f32.mrb[0].mxu0
        %v700 = vadd.f32 %v527, %v699
        %v701 = vpop.f32.mrb[0].mxu0
        %702 = vmatprep.mubr.bf16.mxu0 0
        %703 = vmatmul.mubr.bf16.gmra.mrb[0].mxu0 %v564
        %v704 = vpop.f32.mrb[0].mxu0
        %v705 = vadd.f32 %v527, %v704
        %v706 = vpop.f32.mrb[0].mxu0
        %v707 = vpop.f32.mrb[0].mxu0
        %v708 = vadd.f32 %v527, %v707
        %v709 = vpop.f32.mrb[0].mxu0
        %710 = vmatprep.mubr.bf16.mxu0 0
        %711 = vmatmul.mubr.bf16.gmra.mrb[0].mxu0 %v567
        %v712 = vpop.f32.mrb[0].mxu0
        %v713 = vadd.f32 %v527, %v712
        %v714 = vpop.f32.mrb[0].mxu0
        %v715 = vpop.f32.mrb[0].mxu0
        %v716 = vadd.f32 %v527, %v715
        %v717 = vpop.f32.mrb[0].mxu0
        %718 = vmatprep.mubr.bf16.mxu0 0
        %719 = vmatmul.mubr.bf16.gmra.mrb[0].mxu0 %v570
        %v720 = vpop.f32.mrb[0].mxu0
        %v721 = vadd.f32 %v527, %v720
        %v722 = vpop.f32.mrb[0].mxu0
        %v723 = vpop.f32.mrb[0].mxu0
        %v724 = vadd.f32 %v527, %v723
        %v725 = vpop.f32.mrb[0].mxu0
        %726 = vmatprep.mubr.bf16.mxu0 0
        %727 = vmatmul.mubr.bf16.gmra.mrb[0].mxu0 %v573
        %v728 = vpop.f32.mrb[0].mxu0
        %v729 = vadd.f32 %v527, %v728
        %v730 = vpop.f32.mrb[0].mxu0
        %v731 = vpop.f32.mrb[0].mxu0
        %v732 = vadd.f32 %v527, %v731
        %v733 = vpop.f32.mrb[0].mxu0
        %734 = vmatprep.mubr.bf16.mxu0 0
        %735 = vmatmul.mubr.bf16.gmra.mrb[0].mxu0 %v576
        %v736 = vpop.f32.mrb[0].mxu0
        %v737 = vadd.f32 %v527, %v736
        %v738 = vpop.f32.mrb[0].mxu0
        %v739 = vpop.f32.mrb[0].mxu0
        %v740 = vadd.f32 %v527, %v739
        %v741 = vpop.f32.mrb[0].mxu0
        %742 = vdwg.mxu0
        %v743 = vmax.f32 %v617, 0.0
        %v744 = vmax.f32 %v620, 0.0
        %v745 = vmax.f32 %v625, 0.0
        %v746 = vmax.f32 %v628, 0.0
        %v747 = vmax.f32 %v633, 0.0
        %v748 = vmax.f32 %v636, 0.0
        %v749 = vmax.f32 %v641, 0.0
        %v750 = vmax.f32 %v644, 0.0
        %v751 = vmax.f32 %v649, 0.0
        %v752 = vmax.f32 %v652, 0.0
        %v753 = vmax.f32 %v657, 0.0
        %v754 = vmax.f32 %v660, 0.0
        %v755 = vmax.f32 %v665, 0.0
        %v756 = vmax.f32 %v668, 0.0
        %v757 = vmax.f32 %v673, 0.0
        %v758 = vmax.f32 %v676, 0.0
        %v759 = vmax.f32 %v681, 0.0
        %v760 = vmax.f32 %v684, 0.0
        %v761 = vmax.f32 %v689, 0.0
        %v762 = vmax.f32 %v692, 0.0
        %v763 = vmax.f32 %v697, 0.0
        %v764 = vmax.f32 %v700, 0.0
        %v765 = vmax.f32 %v705, 0.0
        %v766 = vmax.f32 %v708, 0.0
        %v767 = vmax.f32 %v713, 0.0
        %v768 = vmax.f32 %v716, 0.0
        %v769 = vmax.f32 %v721, 0.0
        %v770 = vmax.f32 %v724, 0.0
        %v771 = vmax.f32 %v729, 0.0
        %v772 = vmax.f32 %v732, 0.0
        %v773 = vmax.f32 %v737, 0.0
        %v774 = vmax.f32 %v740, 0.0
        %v775 = vpack.c.bf16 %v744, %v743
        %v776 = vpack.c.bf16 %v746, %v745
        %v777 = vpack.c.bf16 %v748, %v747
        %v778 = vpack.c.bf16 %v750, %v749
        %v779 = vpack.c.bf16 %v752, %v751
        %v780 = vpack.c.bf16 %v754, %v753
        %v781 = vpack.c.bf16 %v756, %v755
        %v782 = vpack.c.bf16 %v758, %v757
        %v783 = vpack.c.bf16 %v760, %v759
        %v784 = vpack.c.bf16 %v762, %v761
        %v785 = vpack.c.bf16 %v764, %v763
        %v786 = vpack.c.bf16 %v766, %v765
        %v787 = vpack.c.bf16 %v768, %v767
        %v788 = vpack.c.bf16 %v770, %v769
        %v789 = vpack.c.bf16 %v772, %v771
        %v790 = vpack.c.bf16 %v774, %v773
        %v791 = vld [vmem:[%s3] sm:$0xf]
        %v792 = vld [vmem:[%s3 + $0x4] sm:$0xf]
        %v793 = vld [vmem:[%s3 + $0x8] sm:$0xf]
        %v794 = vld [vmem:[%s3 + $0xc] sm:$0xf]
        %v795 = vld [vmem:[%s3 + $0x10] sm:$0xf]
        %v796 = vld [vmem:[%s3 + $0x14] sm:$0xf]
        %v797 = vld [vmem:[%s3 + $0x18] sm:$0xf]
        %v798 = vld [vmem:[%s3 + $0x1c] sm:$0xf]
        %v799 = vld [vmem:[%s4] sm:$0x1]
        %v801 = vlaneseq
        %v802 = vshrl.u32 %v801, 7
        %v803 = vsub.s32 0, %v802
        %v804 = vrot.slane %v799, %v803
        %v814 = vunpack.c.l.b16 %v791
        %v815 = vunpack.c.l.b16 %v792
        %v816 = vunpack.c.l.b16 %v793
        %v817 = vunpack.c.l.b16 %v794
        %v818 = vunpack.c.l.b16 %v795
        %v819 = vunpack.c.l.b16 %v796
        %v820 = vunpack.c.l.b16 %v797
        %v821 = vunpack.c.l.b16 %v798
        %v822 = vpack.c.b16 %v815, %v814
        %v823 = vpack.c.b16 %v817, %v816
        %v824 = vpack.c.b16 %v819, %v818
        %v825 = vpack.c.b16 %v821, %v820
        %vm830 = vcmask 523264
        %v832 = vsel %vm830, %v775, 0
        %v835 = vsel %vm830, %v776, 0
        %v838 = vsel %vm830, %v777, 0
        %v841 = vsel %vm830, %v778, 0
        %v844 = vsel %vm830, %v779, 0
        %v847 = vsel %vm830, %v780, 0
        %v850 = vsel %vm830, %v781, 0
        %v853 = vsel %vm830, %v782, 0
        %v856 = vsel %vm830, %v783, 0
        %v859 = vsel %vm830, %v784, 0
        %v862 = vsel %vm830, %v785, 0
        %v865 = vsel %vm830, %v786, 0
        %v868 = vsel %vm830, %v787, 0
        %v871 = vsel %vm830, %v788, 0
        %v874 = vsel %vm830, %v789, 0
        %v877 = vsel %vm830, %v790, 0
        %879 = vmatprep.subr.bf16.mxu0 0
        %880 = vmatpush1.bf16.msra.mxu0 %v822
        %881 = vmatprep.subr.bf16.mxu0 0
        %882 = vmatpush1.bf16.msra.mxu0 %v823
        %883 = vmatprep.subr.bf16.mxu0 0
        %884 = vmatpush1.bf16.msra.mxu0 %v824
        %885 = vmatprep.subr.bf16.mxu0 0
        %886 = vmatpush1.bf16.msra.mxu0 %v825
        %887 = vmatprep.subr.bf16.mxu0 0
        %888 = vmatpush1.bf16.msra.mxu0 0
        %889 = vmatprep.subr.bf16.mxu0 0
        %890 = vmatpush1.bf16.msra.mxu0 0
        %891 = vmatprep.subr.bf16.mxu0 0
        %892 = vmatpush1.bf16.msra.mxu0 0
        %893 = vmatprep.subr.bf16.mxu0 0
        %894 = vmatpush1.bf16.msra.mxu0 0
        %895 = vmatprep.subr.bf16.mxu0 0
        %896 = vmatpush1.bf16.msra.mxu0 0
        %897 = vmatprep.subr.bf16.mxu0 0
        %898 = vmatpush1.bf16.msra.mxu0 0
        %899 = vmatprep.subr.bf16.mxu0 0
        %900 = vmatpush1.bf16.msra.mxu0 0
        %901 = vmatprep.subr.bf16.mxu0 0
        %902 = vmatpush1.bf16.msra.mxu0 0
        %903 = vmatprep.subr.bf16.mxu0 0
        %904 = vmatpush1.bf16.msra.mxu0 0
        %905 = vmatprep.subr.bf16.mxu0 0
        %906 = vmatpush1.bf16.msra.mxu0 0
        %907 = vmatprep.subr.bf16.mxu0 0
        %908 = vmatpush1.bf16.msra.mxu0 0
        %909 = vmatprep.subr.bf16.mxu0 0
        %910 = vmatpush1.bf16.msra.mxu0 0
        %911 = vmatprep.mubr.bf16.mxu0 0
        %912 = vmatmul.mubr.bf16.gmra.mrb[0].mxu0 %v832
        %v913 = vpop.f32.mrb[0].mxu0
        %v914 = vadd.f32 %v804, %v913
        %v915 = vpop.f32.mrb[0].mxu0
        %v916 = vpop.f32.mrb[0].mxu0
        %v917 = vadd.f32 %v804, %v916
        %v918 = vpop.f32.mrb[0].mxu0
        %919 = vmatprep.mubr.bf16.mxu0 0
        %920 = vmatmul.mubr.bf16.gmra.mrb[0].mxu0 %v835
        %v921 = vpop.f32.mrb[0].mxu0
        %v922 = vadd.f32 %v804, %v921
        %v923 = vpop.f32.mrb[0].mxu0
        %v924 = vpop.f32.mrb[0].mxu0
        %v925 = vadd.f32 %v804, %v924
        %v926 = vpop.f32.mrb[0].mxu0
        %927 = vmatprep.mubr.bf16.mxu0 0
        %928 = vmatmul.mubr.bf16.gmra.mrb[0].mxu0 %v838
        %v929 = vpop.f32.mrb[0].mxu0
        %v930 = vadd.f32 %v804, %v929
        %v931 = vpop.f32.mrb[0].mxu0
        %v932 = vpop.f32.mrb[0].mxu0
        %v933 = vadd.f32 %v804, %v932
        %v934 = vpop.f32.mrb[0].mxu0
        %935 = vmatprep.mubr.bf16.mxu0 0
        %936 = vmatmul.mubr.bf16.gmra.mrb[0].mxu0 %v841
        %v937 = vpop.f32.mrb[0].mxu0
        %v938 = vadd.f32 %v804, %v937
        %v939 = vpop.f32.mrb[0].mxu0
        %v940 = vpop.f32.mrb[0].mxu0
        %v941 = vadd.f32 %v804, %v940
        %v942 = vpop.f32.mrb[0].mxu0
        %943 = vmatprep.mubr.bf16.mxu0 0
        %944 = vmatmul.mubr.bf16.gmra.mrb[0].mxu0 %v844
        %v945 = vpop.f32.mrb[0].mxu0
        %v946 = vadd.f32 %v804, %v945
        %v947 = vpop.f32.mrb[0].mxu0
        %v948 = vpop.f32.mrb[0].mxu0
        %v949 = vadd.f32 %v804, %v948
        %v950 = vpop.f32.mrb[0].mxu0
        %951 = vmatprep.mubr.bf16.mxu0 0
        %952 = vmatmul.mubr.bf16.gmra.mrb[0].mxu0 %v847
        %v953 = vpop.f32.mrb[0].mxu0
        %v954 = vadd.f32 %v804, %v953
        %v955 = vpop.f32.mrb[0].mxu0
        %v956 = vpop.f32.mrb[0].mxu0
        %v957 = vadd.f32 %v804, %v956
        %v958 = vpop.f32.mrb[0].mxu0
        %959 = vmatprep.mubr.bf16.mxu0 0
        %960 = vmatmul.mubr.bf16.gmra.mrb[0].mxu0 %v850
        %v961 = vpop.f32.mrb[0].mxu0
        %v962 = vadd.f32 %v804, %v961
        %v963 = vpop.f32.mrb[0].mxu0
        %v964 = vpop.f32.mrb[0].mxu0
        %v965 = vadd.f32 %v804, %v964
        %v966 = vpop.f32.mrb[0].mxu0
        %967 = vmatprep.mubr.bf16.mxu0 0
        %968 = vmatmul.mubr.bf16.gmra.mrb[0].mxu0 %v853
        %v969 = vpop.f32.mrb[0].mxu0
        %v970 = vadd.f32 %v804, %v969
        %v971 = vpop.f32.mrb[0].mxu0
        %v972 = vpop.f32.mrb[0].mxu0
        %v973 = vadd.f32 %v804, %v972
        %v974 = vpop.f32.mrb[0].mxu0
        %975 = vmatprep.mubr.bf16.mxu0 0
        %976 = vmatmul.mubr.bf16.gmra.mrb[0].mxu0 %v856
        %v977 = vpop.f32.mrb[0].mxu0
        %v978 = vadd.f32 %v804, %v977
        %v979 = vpop.f32.mrb[0].mxu0
        %v980 = vpop.f32.mrb[0].mxu0
        %v981 = vadd.f32 %v804, %v980
        %v982 = vpop.f32.mrb[0].mxu0
        %983 = vmatprep.mubr.bf16.mxu0 0
        %984 = vmatmul.mubr.bf16.gmra.mrb[0].mxu0 %v859
        %v985 = vpop.f32.mrb[0].mxu0
        %v986 = vadd.f32 %v804, %v985
        %v987 = vpop.f32.mrb[0].mxu0
        %v988 = vpop.f32.mrb[0].mxu0
        %v989 = vadd.f32 %v804, %v988
        %v990 = vpop.f32.mrb[0].mxu0
        %991 = vmatprep.mubr.bf16.mxu0 0
        %992 = vmatmul.mubr.bf16.gmra.mrb[0].mxu0 %v862
        %v993 = vpop.f32.mrb[0].mxu0
        %v994 = vadd.f32 %v804, %v993
        %v995 = vpop.f32.mrb[0].mxu0
        %v996 = vpop.f32.mrb[0].mxu0
        %v997 = vadd.f32 %v804, %v996
        %v998 = vpop.f32.mrb[0].mxu0
        %999 = vmatprep.mubr.bf16.mxu0 0
        %1000 = vmatmul.mubr.bf16.gmra.mrb[0].mxu0 %v865
        %v1001 = vpop.f32.mrb[0].mxu0
        %v1002 = vadd.f32 %v804, %v1001
        %v1003 = vpop.f32.mrb[0].mxu0
        %v1004 = vpop.f32.mrb[0].mxu0
        %v1005 = vadd.f32 %v804, %v1004
        %v1006 = vpop.f32.mrb[0].mxu0
        %1007 = vmatprep.mubr.bf16.mxu0 0
        %1008 = vmatmul.mubr.bf16.gmra.mrb[0].mxu0 %v868
        %v1009 = vpop.f32.mrb[0].mxu0
        %v1010 = vadd.f32 %v804, %v1009
        %v1011 = vpop.f32.mrb[0].mxu0
        %v1012 = vpop.f32.mrb[0].mxu0
        %v1013 = vadd.f32 %v804, %v1012
        %v1014 = vpop.f32.mrb[0].mxu0
        %1015 = vmatprep.mubr.bf16.mxu0 0
        %1016 = vmatmul.mubr.bf16.gmra.mrb[0].mxu0 %v871
        %v1017 = vpop.f32.mrb[0].mxu0
        %v1018 = vadd.f32 %v804, %v1017
        %v1019 = vpop.f32.mrb[0].mxu0
        %v1020 = vpop.f32.mrb[0].mxu0
        %v1021 = vadd.f32 %v804, %v1020
        %v1022 = vpop.f32.mrb[0].mxu0
        %1023 = vmatprep.mubr.bf16.mxu0 0
        %1024 = vmatmul.mubr.bf16.gmra.mrb[0].mxu0 %v874
        %v1025 = vpop.f32.mrb[0].mxu0
        %v1026 = vadd.f32 %v804, %v1025
        %v1027 = vpop.f32.mrb[0].mxu0
        %v1028 = vpop.f32.mrb[0].mxu0
        %v1029 = vadd.f32 %v804, %v1028
        %v1030 = vpop.f32.mrb[0].mxu0
        %1031 = vmatprep.mubr.bf16.mxu0 0
        %1032 = vmatmul.mubr.bf16.gmra.mrb[0].mxu0 %v877
        %v1033 = vpop.f32.mrb[0].mxu0
        %v1034 = vadd.f32 %v804, %v1033
        %v1035 = vpop.f32.mrb[0].mxu0
        %v1036 = vpop.f32.mrb[0].mxu0
        %v1037 = vadd.f32 %v804, %v1036
        %v1038 = vpop.f32.mrb[0].mxu0
        %1039 = vdwg.mxu0
        %v1040 = vmax.f32 %v914, 0.0
        %v1041 = vmax.f32 %v917, 0.0
        %v1042 = vmax.f32 %v922, 0.0
        %v1043 = vmax.f32 %v925, 0.0
        %v1044 = vmax.f32 %v930, 0.0
        %v1045 = vmax.f32 %v933, 0.0
        %v1046 = vmax.f32 %v938, 0.0
        %v1047 = vmax.f32 %v941, 0.0
        %v1048 = vmax.f32 %v946, 0.0
        %v1049 = vmax.f32 %v949, 0.0
        %v1050 = vmax.f32 %v954, 0.0
        %v1051 = vmax.f32 %v957, 0.0
        %v1052 = vmax.f32 %v962, 0.0
        %v1053 = vmax.f32 %v965, 0.0
        %v1054 = vmax.f32 %v970, 0.0
        %v1055 = vmax.f32 %v973, 0.0
        %v1056 = vmax.f32 %v978, 0.0
        %v1057 = vmax.f32 %v981, 0.0
        %v1058 = vmax.f32 %v986, 0.0
        %v1059 = vmax.f32 %v989, 0.0
        %v1060 = vmax.f32 %v994, 0.0
        %v1061 = vmax.f32 %v997, 0.0
        %v1062 = vmax.f32 %v1002, 0.0
        %v1063 = vmax.f32 %v1005, 0.0
        %v1064 = vmax.f32 %v1010, 0.0
        %v1065 = vmax.f32 %v1013, 0.0
        %v1066 = vmax.f32 %v1018, 0.0
        %v1067 = vmax.f32 %v1021, 0.0
        %v1068 = vmax.f32 %v1026, 0.0
        %v1069 = vmax.f32 %v1029, 0.0
        %v1070 = vmax.f32 %v1034, 0.0
        %v1071 = vmax.f32 %v1037, 0.0
        %v1072 = vpack.c.bf16 %v1041, %v1040
        %v1073 = vpack.c.bf16 %v1043, %v1042
        %v1074 = vpack.c.bf16 %v1045, %v1044
        %v1075 = vpack.c.bf16 %v1047, %v1046
        %v1076 = vpack.c.bf16 %v1049, %v1048
        %v1077 = vpack.c.bf16 %v1051, %v1050
        %v1078 = vpack.c.bf16 %v1053, %v1052
        %v1079 = vpack.c.bf16 %v1055, %v1054
        %v1080 = vpack.c.bf16 %v1057, %v1056
        %v1081 = vpack.c.bf16 %v1059, %v1058
        %v1082 = vpack.c.bf16 %v1061, %v1060
        %v1083 = vpack.c.bf16 %v1063, %v1062
        %v1084 = vpack.c.bf16 %v1065, %v1064
        %v1085 = vpack.c.bf16 %v1067, %v1066
        %v1086 = vpack.c.bf16 %v1069, %v1068
        %v1087 = vpack.c.bf16 %v1071, %v1070
        %v1088 = vld [vmem:[%s5] sm:$0xf]
        %v1089 = vld [vmem:[%s5 + $0x4] sm:$0xf]
        %v1090 = vld [vmem:[%s5 + $0x8] sm:$0xf]
        %v1091 = vld [vmem:[%s5 + $0xc] sm:$0xf]
        %v1092 = vld [vmem:[%s5 + $0x10] sm:$0xf]
        %v1093 = vld [vmem:[%s5 + $0x14] sm:$0xf]
        %v1094 = vld [vmem:[%s5 + $0x18] sm:$0xf]
        %v1095 = vld [vmem:[%s5 + $0x1c] sm:$0xf]
        %v1096 = vld [vmem:[%s6] sm:$0x1]
        %v1098 = vlaneseq
        %v1099 = vshrl.u32 %v1098, 7
        %v1100 = vsub.s32 0, %v1099
        %v1101 = vrot.slane %v1096, %v1100
        %v1111 = vunpack.c.l.b16 %v1088
        %v1112 = vunpack.c.l.b16 %v1089
        %v1113 = vunpack.c.l.b16 %v1090
        %v1114 = vunpack.c.l.b16 %v1091
        %v1115 = vunpack.c.l.b16 %v1092
        %v1116 = vunpack.c.l.b16 %v1093
        %v1117 = vunpack.c.l.b16 %v1094
        %v1118 = vunpack.c.l.b16 %v1095
        %v1119 = vpack.c.b16 %v1112, %v1111
        %v1120 = vpack.c.b16 %v1114, %v1113
        %v1121 = vpack.c.b16 %v1116, %v1115
        %v1122 = vpack.c.b16 %v1118, %v1117
        %v1128 = vsel %vm830, %v1072, 0
        %v1131 = vsel %vm830, %v1073, 0
        %v1134 = vsel %vm830, %v1074, 0
        %v1137 = vsel %vm830, %v1075, 0
        %v1140 = vsel %vm830, %v1076, 0
        %v1143 = vsel %vm830, %v1077, 0
        %v1146 = vsel %vm830, %v1078, 0
        %v1149 = vsel %vm830, %v1079, 0
        %v1152 = vsel %vm830, %v1080, 0
        %v1155 = vsel %vm830, %v1081, 0
        %v1158 = vsel %vm830, %v1082, 0
        %v1161 = vsel %vm830, %v1083, 0
        %v1164 = vsel %vm830, %v1084, 0
        %v1167 = vsel %vm830, %v1085, 0
        %v1170 = vsel %vm830, %v1086, 0
        %v1173 = vsel %vm830, %v1087, 0
        %1175 = vmatprep.subr.bf16.mxu0 0
        %1176 = vmatpush1.bf16.msra.mxu0 %v1119
        %1177 = vmatprep.subr.bf16.mxu0 0
        %1178 = vmatpush1.bf16.msra.mxu0 %v1120
        %1179 = vmatprep.subr.bf16.mxu0 0
        %1180 = vmatpush1.bf16.msra.mxu0 %v1121
        %1181 = vmatprep.subr.bf16.mxu0 0
        %1182 = vmatpush1.bf16.msra.mxu0 %v1122
        %1183 = vmatprep.subr.bf16.mxu0 0
        %1184 = vmatpush1.bf16.msra.mxu0 0
        %1185 = vmatprep.subr.bf16.mxu0 0
        %1186 = vmatpush1.bf16.msra.mxu0 0
        %1187 = vmatprep.subr.bf16.mxu0 0
        %1188 = vmatpush1.bf16.msra.mxu0 0
        %1189 = vmatprep.subr.bf16.mxu0 0
        %1190 = vmatpush1.bf16.msra.mxu0 0
        %1191 = vmatprep.subr.bf16.mxu0 0
        %1192 = vmatpush1.bf16.msra.mxu0 0
        %1193 = vmatprep.subr.bf16.mxu0 0
        %1194 = vmatpush1.bf16.msra.mxu0 0
        %1195 = vmatprep.subr.bf16.mxu0 0
        %1196 = vmatpush1.bf16.msra.mxu0 0
        %1197 = vmatprep.subr.bf16.mxu0 0
        %1198 = vmatpush1.bf16.msra.mxu0 0
        %1199 = vmatprep.subr.bf16.mxu0 0
        %1200 = vmatpush1.bf16.msra.mxu0 0
        %1201 = vmatprep.subr.bf16.mxu0 0
        %1202 = vmatpush1.bf16.msra.mxu0 0
        %1203 = vmatprep.subr.bf16.mxu0 0
        %1204 = vmatpush1.bf16.msra.mxu0 0
        %1205 = vmatprep.subr.bf16.mxu0 0
        %1206 = vmatpush1.bf16.msra.mxu0 0
        %1207 = vmatprep.mubr.bf16.mxu0 0
        %1208 = vmatmul.mubr.bf16.gmra.mrb[0].mxu0 %v1128
        %v1209 = vpop.f32.mrb[0].mxu0
        %v1210 = vadd.f32 %v1101, %v1209
        %v1211 = vpop.f32.mrb[0].mxu0
        %v1212 = vpop.f32.mrb[0].mxu0
        %v1213 = vadd.f32 %v1101, %v1212
        %v1214 = vpop.f32.mrb[0].mxu0
        %1215 = vmatprep.mubr.bf16.mxu0 0
        %1216 = vmatmul.mubr.bf16.gmra.mrb[0].mxu0 %v1131
        %v1217 = vpop.f32.mrb[0].mxu0
        %v1218 = vadd.f32 %v1101, %v1217
        %v1219 = vpop.f32.mrb[0].mxu0
        %v1220 = vpop.f32.mrb[0].mxu0
        %v1221 = vadd.f32 %v1101, %v1220
        %v1222 = vpop.f32.mrb[0].mxu0
        %1223 = vmatprep.mubr.bf16.mxu0 0
        %1224 = vmatmul.mubr.bf16.gmra.mrb[0].mxu0 %v1134
        %v1225 = vpop.f32.mrb[0].mxu0
        %v1226 = vadd.f32 %v1101, %v1225
        %v1227 = vpop.f32.mrb[0].mxu0
        %v1228 = vpop.f32.mrb[0].mxu0
        %v1229 = vadd.f32 %v1101, %v1228
        %v1230 = vpop.f32.mrb[0].mxu0
        %1231 = vmatprep.mubr.bf16.mxu0 0
        %1232 = vmatmul.mubr.bf16.gmra.mrb[0].mxu0 %v1137
        %v1233 = vpop.f32.mrb[0].mxu0
        %v1234 = vadd.f32 %v1101, %v1233
        %v1235 = vpop.f32.mrb[0].mxu0
        %v1236 = vpop.f32.mrb[0].mxu0
        %v1237 = vadd.f32 %v1101, %v1236
        %v1238 = vpop.f32.mrb[0].mxu0
        %1239 = vmatprep.mubr.bf16.mxu0 0
        %1240 = vmatmul.mubr.bf16.gmra.mrb[0].mxu0 %v1140
        %v1241 = vpop.f32.mrb[0].mxu0
        %v1242 = vadd.f32 %v1101, %v1241
        %v1243 = vpop.f32.mrb[0].mxu0
        %v1244 = vpop.f32.mrb[0].mxu0
        %v1245 = vadd.f32 %v1101, %v1244
        %v1246 = vpop.f32.mrb[0].mxu0
        %1247 = vmatprep.mubr.bf16.mxu0 0
        %1248 = vmatmul.mubr.bf16.gmra.mrb[0].mxu0 %v1143
        %v1249 = vpop.f32.mrb[0].mxu0
        %v1250 = vadd.f32 %v1101, %v1249
        %v1251 = vpop.f32.mrb[0].mxu0
        %v1252 = vpop.f32.mrb[0].mxu0
        %v1253 = vadd.f32 %v1101, %v1252
        %v1254 = vpop.f32.mrb[0].mxu0
        %1255 = vmatprep.mubr.bf16.mxu0 0
        %1256 = vmatmul.mubr.bf16.gmra.mrb[0].mxu0 %v1146
        %v1257 = vpop.f32.mrb[0].mxu0
        %v1258 = vadd.f32 %v1101, %v1257
        %v1259 = vpop.f32.mrb[0].mxu0
        %v1260 = vpop.f32.mrb[0].mxu0
        %v1261 = vadd.f32 %v1101, %v1260
        %v1262 = vpop.f32.mrb[0].mxu0
        %1263 = vmatprep.mubr.bf16.mxu0 0
        %1264 = vmatmul.mubr.bf16.gmra.mrb[0].mxu0 %v1149
        %v1265 = vpop.f32.mrb[0].mxu0
        %v1266 = vadd.f32 %v1101, %v1265
        %v1267 = vpop.f32.mrb[0].mxu0
        %v1268 = vpop.f32.mrb[0].mxu0
        %v1269 = vadd.f32 %v1101, %v1268
        %v1270 = vpop.f32.mrb[0].mxu0
        %1271 = vmatprep.mubr.bf16.mxu0 0
        %1272 = vmatmul.mubr.bf16.gmra.mrb[0].mxu0 %v1152
        %v1273 = vpop.f32.mrb[0].mxu0
        %v1274 = vadd.f32 %v1101, %v1273
        %v1275 = vpop.f32.mrb[0].mxu0
        %v1276 = vpop.f32.mrb[0].mxu0
        %v1277 = vadd.f32 %v1101, %v1276
        %v1278 = vpop.f32.mrb[0].mxu0
        %1279 = vmatprep.mubr.bf16.mxu0 0
        %1280 = vmatmul.mubr.bf16.gmra.mrb[0].mxu0 %v1155
        %v1281 = vpop.f32.mrb[0].mxu0
        %v1282 = vadd.f32 %v1101, %v1281
        %v1283 = vpop.f32.mrb[0].mxu0
        %v1284 = vpop.f32.mrb[0].mxu0
        %v1285 = vadd.f32 %v1101, %v1284
        %v1286 = vpop.f32.mrb[0].mxu0
        %1287 = vmatprep.mubr.bf16.mxu0 0
        %1288 = vmatmul.mubr.bf16.gmra.mrb[0].mxu0 %v1158
        %v1289 = vpop.f32.mrb[0].mxu0
        %v1290 = vadd.f32 %v1101, %v1289
        %v1291 = vpop.f32.mrb[0].mxu0
        %v1292 = vpop.f32.mrb[0].mxu0
        %v1293 = vadd.f32 %v1101, %v1292
        %v1294 = vpop.f32.mrb[0].mxu0
        %1295 = vmatprep.mubr.bf16.mxu0 0
        %1296 = vmatmul.mubr.bf16.gmra.mrb[0].mxu0 %v1161
        %v1297 = vpop.f32.mrb[0].mxu0
        %v1298 = vadd.f32 %v1101, %v1297
        %v1299 = vpop.f32.mrb[0].mxu0
        %v1300 = vpop.f32.mrb[0].mxu0
        %v1301 = vadd.f32 %v1101, %v1300
        %v1302 = vpop.f32.mrb[0].mxu0
        %1303 = vmatprep.mubr.bf16.mxu0 0
        %1304 = vmatmul.mubr.bf16.gmra.mrb[0].mxu0 %v1164
        %v1305 = vpop.f32.mrb[0].mxu0
        %v1306 = vadd.f32 %v1101, %v1305
        %v1307 = vpop.f32.mrb[0].mxu0
        %v1308 = vpop.f32.mrb[0].mxu0
        %v1309 = vadd.f32 %v1101, %v1308
        %v1310 = vpop.f32.mrb[0].mxu0
        %1311 = vmatprep.mubr.bf16.mxu0 0
        %1312 = vmatmul.mubr.bf16.gmra.mrb[0].mxu0 %v1167
        %v1313 = vpop.f32.mrb[0].mxu0
        %v1314 = vadd.f32 %v1101, %v1313
        %v1315 = vpop.f32.mrb[0].mxu0
        %v1316 = vpop.f32.mrb[0].mxu0
        %v1317 = vadd.f32 %v1101, %v1316
        %v1318 = vpop.f32.mrb[0].mxu0
        %1319 = vmatprep.mubr.bf16.mxu0 0
        %1320 = vmatmul.mubr.bf16.gmra.mrb[0].mxu0 %v1170
        %v1321 = vpop.f32.mrb[0].mxu0
        %v1322 = vadd.f32 %v1101, %v1321
        %v1323 = vpop.f32.mrb[0].mxu0
        %v1324 = vpop.f32.mrb[0].mxu0
        %v1325 = vadd.f32 %v1101, %v1324
        %v1326 = vpop.f32.mrb[0].mxu0
        %1327 = vmatprep.mubr.bf16.mxu0 0
        %1328 = vmatmul.mubr.bf16.gmra.mrb[0].mxu0 %v1173
        %v1329 = vpop.f32.mrb[0].mxu0
        %v1330 = vadd.f32 %v1101, %v1329
        %v1331 = vpop.f32.mrb[0].mxu0
        %v1332 = vpop.f32.mrb[0].mxu0
        %v1333 = vadd.f32 %v1101, %v1332
        %v1334 = vpop.f32.mrb[0].mxu0
        %1335 = vdwg.mxu0
        %v1336 = vmax.f32 %v1210, 0.0
        %v1337 = vmax.f32 %v1213, 0.0
        %v1338 = vmax.f32 %v1218, 0.0
        %v1339 = vmax.f32 %v1221, 0.0
        %v1340 = vmax.f32 %v1226, 0.0
        %v1341 = vmax.f32 %v1229, 0.0
        %v1342 = vmax.f32 %v1234, 0.0
        %v1343 = vmax.f32 %v1237, 0.0
        %v1344 = vmax.f32 %v1242, 0.0
        %v1345 = vmax.f32 %v1245, 0.0
        %v1346 = vmax.f32 %v1250, 0.0
        %v1347 = vmax.f32 %v1253, 0.0
        %v1348 = vmax.f32 %v1258, 0.0
        %v1349 = vmax.f32 %v1261, 0.0
        %v1350 = vmax.f32 %v1266, 0.0
        %v1351 = vmax.f32 %v1269, 0.0
        %v1352 = vmax.f32 %v1274, 0.0
        %v1353 = vmax.f32 %v1277, 0.0
        %v1354 = vmax.f32 %v1282, 0.0
        %v1355 = vmax.f32 %v1285, 0.0
        %v1356 = vmax.f32 %v1290, 0.0
        %v1357 = vmax.f32 %v1293, 0.0
        %v1358 = vmax.f32 %v1298, 0.0
        %v1359 = vmax.f32 %v1301, 0.0
        %v1360 = vmax.f32 %v1306, 0.0
        %v1361 = vmax.f32 %v1309, 0.0
        %v1362 = vmax.f32 %v1314, 0.0
        %v1363 = vmax.f32 %v1317, 0.0
        %v1364 = vmax.f32 %v1322, 0.0
        %v1365 = vmax.f32 %v1325, 0.0
        %v1366 = vmax.f32 %v1330, 0.0
        %v1367 = vmax.f32 %v1333, 0.0
        %v1368 = vpack.c.bf16 %v1337, %v1336
        %v1369 = vpack.c.bf16 %v1339, %v1338
        %v1370 = vpack.c.bf16 %v1341, %v1340
        %v1371 = vpack.c.bf16 %v1343, %v1342
        %v1372 = vpack.c.bf16 %v1345, %v1344
        %v1373 = vpack.c.bf16 %v1347, %v1346
        %v1374 = vpack.c.bf16 %v1349, %v1348
        %v1375 = vpack.c.bf16 %v1351, %v1350
        %v1376 = vpack.c.bf16 %v1353, %v1352
        %v1377 = vpack.c.bf16 %v1355, %v1354
        %v1378 = vpack.c.bf16 %v1357, %v1356
        %v1379 = vpack.c.bf16 %v1359, %v1358
        %v1380 = vpack.c.bf16 %v1361, %v1360
        %v1381 = vpack.c.bf16 %v1363, %v1362
        %v1382 = vpack.c.bf16 %v1365, %v1364
        %v1383 = vpack.c.bf16 %v1367, %v1366
        %v1384 = vld [vmem:[%s7] sm:$0xf]
        %v1385 = vld [vmem:[%s7 + $0x4] sm:$0xf]
        %v1386 = vld [vmem:[%s7 + $0x8] sm:$0xf]
        %v1387 = vld [vmem:[%s7 + $0xc] sm:$0xf]
        %v1388 = vld [vmem:[%s7 + $0x10] sm:$0xf]
        %v1389 = vld [vmem:[%s7 + $0x14] sm:$0xf]
        %v1390 = vld [vmem:[%s7 + $0x18] sm:$0xf]
        %v1391 = vld [vmem:[%s7 + $0x1c] sm:$0xf]
        %v1392 = vld [vmem:[%s8] sm:$0x1]
        %v1394 = vlaneseq
        %v1395 = vshrl.u32 %v1394, 7
        %v1396 = vsub.s32 0, %v1395
        %v1397 = vrot.slane %v1392, %v1396
        %v1407 = vunpack.c.l.b16 %v1384
        %v1408 = vunpack.c.l.b16 %v1385
        %v1409 = vunpack.c.l.b16 %v1386
        %v1410 = vunpack.c.l.b16 %v1387
        %v1411 = vunpack.c.l.b16 %v1388
        %v1412 = vunpack.c.l.b16 %v1389
        %v1413 = vunpack.c.l.b16 %v1390
        %v1414 = vunpack.c.l.b16 %v1391
        %v1415 = vpack.c.b16 %v1408, %v1407
        %v1416 = vpack.c.b16 %v1410, %v1409
        %v1417 = vpack.c.b16 %v1412, %v1411
        %v1418 = vpack.c.b16 %v1414, %v1413
        %v1424 = vsel %vm830, %v1368, 0
        %v1427 = vsel %vm830, %v1369, 0
        %v1430 = vsel %vm830, %v1370, 0
        %v1433 = vsel %vm830, %v1371, 0
        %v1436 = vsel %vm830, %v1372, 0
        %v1439 = vsel %vm830, %v1373, 0
        %v1442 = vsel %vm830, %v1374, 0
        %v1445 = vsel %vm830, %v1375, 0
        %v1448 = vsel %vm830, %v1376, 0
        %v1451 = vsel %vm830, %v1377, 0
        %v1454 = vsel %vm830, %v1378, 0
        %v1457 = vsel %vm830, %v1379, 0
        %v1460 = vsel %vm830, %v1380, 0
        %v1463 = vsel %vm830, %v1381, 0
        %v1466 = vsel %vm830, %v1382, 0
        %v1469 = vsel %vm830, %v1383, 0
        %1471 = vmatprep.subr.bf16.mxu0 0
        %1472 = vmatpush1.bf16.msra.mxu0 %v1415
        %1473 = vmatprep.subr.bf16.mxu0 0
        %1474 = vmatpush1.bf16.msra.mxu0 %v1416
        %1475 = vmatprep.subr.bf16.mxu0 0
        %1476 = vmatpush1.bf16.msra.mxu0 %v1417
        %1477 = vmatprep.subr.bf16.mxu0 0
        %1478 = vmatpush1.bf16.msra.mxu0 %v1418
        %1479 = vmatprep.subr.bf16.mxu0 0
        %1480 = vmatpush1.bf16.msra.mxu0 0
        %1481 = vmatprep.subr.bf16.mxu0 0
        %1482 = vmatpush1.bf16.msra.mxu0 0
        %1483 = vmatprep.subr.bf16.mxu0 0
        %1484 = vmatpush1.bf16.msra.mxu0 0
        %1485 = vmatprep.subr.bf16.mxu0 0
        %1486 = vmatpush1.bf16.msra.mxu0 0
        %1487 = vmatprep.subr.bf16.mxu0 0
        %1488 = vmatpush1.bf16.msra.mxu0 0
        %1489 = vmatprep.subr.bf16.mxu0 0
        %1490 = vmatpush1.bf16.msra.mxu0 0
        %1491 = vmatprep.subr.bf16.mxu0 0
        %1492 = vmatpush1.bf16.msra.mxu0 0
        %1493 = vmatprep.subr.bf16.mxu0 0
        %1494 = vmatpush1.bf16.msra.mxu0 0
        %1495 = vmatprep.subr.bf16.mxu0 0
        %1496 = vmatpush1.bf16.msra.mxu0 0
        %1497 = vmatprep.subr.bf16.mxu0 0
        %1498 = vmatpush1.bf16.msra.mxu0 0
        %1499 = vmatprep.subr.bf16.mxu0 0
        %1500 = vmatpush1.bf16.msra.mxu0 0
        %1501 = vmatprep.subr.bf16.mxu0 0
        %1502 = vmatpush1.bf16.msra.mxu0 0
        %1503 = vmatprep.mubr.bf16.mxu0 0
        %1504 = vmatmul.mubr.bf16.gmra.mrb[0].mxu0 %v1424
        %v1505 = vpop.f32.mrb[0].mxu0
        %v1506 = vadd.f32 %v1397, %v1505
        %v1507 = vpop.f32.mrb[0].mxu0
        %v1508 = vpop.f32.mrb[0].mxu0
        %v1509 = vadd.f32 %v1397, %v1508
        %v1510 = vpop.f32.mrb[0].mxu0
        %1511 = vmatprep.mubr.bf16.mxu0 0
        %1512 = vmatmul.mubr.bf16.gmra.mrb[0].mxu0 %v1427
        %v1513 = vpop.f32.mrb[0].mxu0
        %v1514 = vadd.f32 %v1397, %v1513
        %v1515 = vpop.f32.mrb[0].mxu0
        %v1516 = vpop.f32.mrb[0].mxu0
        %v1517 = vadd.f32 %v1397, %v1516
        %v1518 = vpop.f32.mrb[0].mxu0
        %1519 = vmatprep.mubr.bf16.mxu0 0
        %1520 = vmatmul.mubr.bf16.gmra.mrb[0].mxu0 %v1430
        %v1521 = vpop.f32.mrb[0].mxu0
        %v1522 = vadd.f32 %v1397, %v1521
        %v1523 = vpop.f32.mrb[0].mxu0
        %v1524 = vpop.f32.mrb[0].mxu0
        %v1525 = vadd.f32 %v1397, %v1524
        %v1526 = vpop.f32.mrb[0].mxu0
        %1527 = vmatprep.mubr.bf16.mxu0 0
        %1528 = vmatmul.mubr.bf16.gmra.mrb[0].mxu0 %v1433
        %v1529 = vpop.f32.mrb[0].mxu0
        %v1530 = vadd.f32 %v1397, %v1529
        %v1531 = vpop.f32.mrb[0].mxu0
        %v1532 = vpop.f32.mrb[0].mxu0
        %v1533 = vadd.f32 %v1397, %v1532
        %v1534 = vpop.f32.mrb[0].mxu0
        %1535 = vmatprep.mubr.bf16.mxu0 0
        %1536 = vmatmul.mubr.bf16.gmra.mrb[0].mxu0 %v1436
        %v1537 = vpop.f32.mrb[0].mxu0
        %v1538 = vadd.f32 %v1397, %v1537
        %v1539 = vpop.f32.mrb[0].mxu0
        %v1540 = vpop.f32.mrb[0].mxu0
        %v1541 = vadd.f32 %v1397, %v1540
        %v1542 = vpop.f32.mrb[0].mxu0
        %1543 = vmatprep.mubr.bf16.mxu0 0
        %1544 = vmatmul.mubr.bf16.gmra.mrb[0].mxu0 %v1439
        %v1545 = vpop.f32.mrb[0].mxu0
        %v1546 = vadd.f32 %v1397, %v1545
        %v1547 = vpop.f32.mrb[0].mxu0
        %v1548 = vpop.f32.mrb[0].mxu0
        %v1549 = vadd.f32 %v1397, %v1548
        %v1550 = vpop.f32.mrb[0].mxu0
        %1551 = vmatprep.mubr.bf16.mxu0 0
        %1552 = vmatmul.mubr.bf16.gmra.mrb[0].mxu0 %v1442
        %v1553 = vpop.f32.mrb[0].mxu0
        %v1554 = vadd.f32 %v1397, %v1553
        %v1555 = vpop.f32.mrb[0].mxu0
        %v1556 = vpop.f32.mrb[0].mxu0
        %v1557 = vadd.f32 %v1397, %v1556
        %v1558 = vpop.f32.mrb[0].mxu0
        %1559 = vmatprep.mubr.bf16.mxu0 0
        %1560 = vmatmul.mubr.bf16.gmra.mrb[0].mxu0 %v1445
        %v1561 = vpop.f32.mrb[0].mxu0
        %v1562 = vadd.f32 %v1397, %v1561
        %v1563 = vpop.f32.mrb[0].mxu0
        %v1564 = vpop.f32.mrb[0].mxu0
        %v1565 = vadd.f32 %v1397, %v1564
        %v1566 = vpop.f32.mrb[0].mxu0
        %1567 = vmatprep.mubr.bf16.mxu0 0
        %1568 = vmatmul.mubr.bf16.gmra.mrb[0].mxu0 %v1448
        %v1569 = vpop.f32.mrb[0].mxu0
        %v1570 = vadd.f32 %v1397, %v1569
        %v1571 = vpop.f32.mrb[0].mxu0
        %v1572 = vpop.f32.mrb[0].mxu0
        %v1573 = vadd.f32 %v1397, %v1572
        %v1574 = vpop.f32.mrb[0].mxu0
        %1575 = vmatprep.mubr.bf16.mxu0 0
        %1576 = vmatmul.mubr.bf16.gmra.mrb[0].mxu0 %v1451
        %v1577 = vpop.f32.mrb[0].mxu0
        %v1578 = vadd.f32 %v1397, %v1577
        %v1579 = vpop.f32.mrb[0].mxu0
        %v1580 = vpop.f32.mrb[0].mxu0
        %v1581 = vadd.f32 %v1397, %v1580
        %v1582 = vpop.f32.mrb[0].mxu0
        %1583 = vmatprep.mubr.bf16.mxu0 0
        %1584 = vmatmul.mubr.bf16.gmra.mrb[0].mxu0 %v1454
        %v1585 = vpop.f32.mrb[0].mxu0
        %v1586 = vadd.f32 %v1397, %v1585
        %v1587 = vpop.f32.mrb[0].mxu0
        %v1588 = vpop.f32.mrb[0].mxu0
        %v1589 = vadd.f32 %v1397, %v1588
        %v1590 = vpop.f32.mrb[0].mxu0
        %1591 = vmatprep.mubr.bf16.mxu0 0
        %1592 = vmatmul.mubr.bf16.gmra.mrb[0].mxu0 %v1457
        %v1593 = vpop.f32.mrb[0].mxu0
        %v1594 = vadd.f32 %v1397, %v1593
        %v1595 = vpop.f32.mrb[0].mxu0
        %v1596 = vpop.f32.mrb[0].mxu0
        %v1597 = vadd.f32 %v1397, %v1596
        %v1598 = vpop.f32.mrb[0].mxu0
        %1599 = vmatprep.mubr.bf16.mxu0 0
        %1600 = vmatmul.mubr.bf16.gmra.mrb[0].mxu0 %v1460
        %v1601 = vpop.f32.mrb[0].mxu0
        %v1602 = vadd.f32 %v1397, %v1601
        %v1603 = vpop.f32.mrb[0].mxu0
        %v1604 = vpop.f32.mrb[0].mxu0
        %v1605 = vadd.f32 %v1397, %v1604
        %v1606 = vpop.f32.mrb[0].mxu0
        %1607 = vmatprep.mubr.bf16.mxu0 0
        %1608 = vmatmul.mubr.bf16.gmra.mrb[0].mxu0 %v1463
        %v1609 = vpop.f32.mrb[0].mxu0
        %v1610 = vadd.f32 %v1397, %v1609
        %v1611 = vpop.f32.mrb[0].mxu0
        %v1612 = vpop.f32.mrb[0].mxu0
        %v1613 = vadd.f32 %v1397, %v1612
        %v1614 = vpop.f32.mrb[0].mxu0
        %1615 = vmatprep.mubr.bf16.mxu0 0
        %1616 = vmatmul.mubr.bf16.gmra.mrb[0].mxu0 %v1466
        %v1617 = vpop.f32.mrb[0].mxu0
        %v1618 = vadd.f32 %v1397, %v1617
        %v1619 = vpop.f32.mrb[0].mxu0
        %v1620 = vpop.f32.mrb[0].mxu0
        %v1621 = vadd.f32 %v1397, %v1620
        %v1622 = vpop.f32.mrb[0].mxu0
        %1623 = vmatprep.mubr.bf16.mxu0 0
        %1624 = vmatmul.mubr.bf16.gmra.mrb[0].mxu0 %v1469
        %v1625 = vpop.f32.mrb[0].mxu0
        %v1626 = vadd.f32 %v1397, %v1625
        %v1627 = vpop.f32.mrb[0].mxu0
        %v1628 = vpop.f32.mrb[0].mxu0
        %v1629 = vadd.f32 %v1397, %v1628
        %v1630 = vpop.f32.mrb[0].mxu0
        %1631 = vdwg.mxu0
        %v1632 = vmax.f32 %v1506, 0.0
        %v1633 = vmax.f32 %v1509, 0.0
        %v1634 = vmax.f32 %v1514, 0.0
        %v1635 = vmax.f32 %v1517, 0.0
        %v1636 = vmax.f32 %v1522, 0.0
        %v1637 = vmax.f32 %v1525, 0.0
        %v1638 = vmax.f32 %v1530, 0.0
        %v1639 = vmax.f32 %v1533, 0.0
        %v1640 = vmax.f32 %v1538, 0.0
        %v1641 = vmax.f32 %v1541, 0.0
        %v1642 = vmax.f32 %v1546, 0.0
        %v1643 = vmax.f32 %v1549, 0.0
        %v1644 = vmax.f32 %v1554, 0.0
        %v1645 = vmax.f32 %v1557, 0.0
        %v1646 = vmax.f32 %v1562, 0.0
        %v1647 = vmax.f32 %v1565, 0.0
        %v1648 = vmax.f32 %v1570, 0.0
        %v1649 = vmax.f32 %v1573, 0.0
        %v1650 = vmax.f32 %v1578, 0.0
        %v1651 = vmax.f32 %v1581, 0.0
        %v1652 = vmax.f32 %v1586, 0.0
        %v1653 = vmax.f32 %v1589, 0.0
        %v1654 = vmax.f32 %v1594, 0.0
        %v1655 = vmax.f32 %v1597, 0.0
        %v1656 = vmax.f32 %v1602, 0.0
        %v1657 = vmax.f32 %v1605, 0.0
        %v1658 = vmax.f32 %v1610, 0.0
        %v1659 = vmax.f32 %v1613, 0.0
        %v1660 = vmax.f32 %v1618, 0.0
        %v1661 = vmax.f32 %v1621, 0.0
        %v1662 = vmax.f32 %v1626, 0.0
        %v1663 = vmax.f32 %v1629, 0.0
        %v1664 = vpack.c.bf16 %v1633, %v1632
        %v1665 = vpack.c.bf16 %v1635, %v1634
        %v1666 = vpack.c.bf16 %v1637, %v1636
        %v1667 = vpack.c.bf16 %v1639, %v1638
        %v1668 = vpack.c.bf16 %v1641, %v1640
        %v1669 = vpack.c.bf16 %v1643, %v1642
        %v1670 = vpack.c.bf16 %v1645, %v1644
        %v1671 = vpack.c.bf16 %v1647, %v1646
        %v1672 = vpack.c.bf16 %v1649, %v1648
        %v1673 = vpack.c.bf16 %v1651, %v1650
        %v1674 = vpack.c.bf16 %v1653, %v1652
        %v1675 = vpack.c.bf16 %v1655, %v1654
        %v1676 = vpack.c.bf16 %v1657, %v1656
        %v1677 = vpack.c.bf16 %v1659, %v1658
        %v1678 = vpack.c.bf16 %v1661, %v1660
        %v1679 = vpack.c.bf16 %v1663, %v1662
        %v1680 = vld [vmem:[%s9] sm:$0xff]
        %v1681 = vld [vmem:[%s9 + $0x8] sm:$0xff]
        %v1682 = vld [vmem:[%s9 + $0x10] sm:$0xff]
        %v1683 = vld [vmem:[%s9 + $0x18] sm:$0xff]
        %v1684 = vld [vmem:[%s9 + $0x20] sm:$0xff]
        %v1685 = vld [vmem:[%s9 + $0x28] sm:$0xff]
        %v1686 = vld [vmem:[%s9 + $0x30] sm:$0xff]
        %v1687 = vld [vmem:[%s9 + $0x38] sm:$0xff]
        %v1688 = vld [vmem:[%s9 + $0x40] sm:$0xff]
        %v1689 = vld [vmem:[%s9 + $0x48] sm:$0xff]
        %v1690 = vld [vmem:[%s9 + $0x50] sm:$0xff]
        %v1691 = vld [vmem:[%s9 + $0x58] sm:$0xff]
        %v1692 = vld [vmem:[%s9 + $0x60] sm:$0xff]
        %v1693 = vld [vmem:[%s9 + $0x68] sm:$0xff]
        %v1694 = vld [vmem:[%s9 + $0x70] sm:$0xff]
        %v1695 = vld [vmem:[%s9 + $0x78] sm:$0xff]
        %v1696 = vld [vmem:[%s10] sm:$0x3]
        %v1698 = vlaneseq
        %v1699 = vshrl.u32 %v1698, 7
        %v1700 = vsub.s32 0, %v1699
        %v1701 = vrot.slane %v1696, %v1700
        %v1702 = vlaneseq
        %v1703 = vshrl.u32 %v1702, 7
        %v1704 = vsub.s32 1, %v1703
        %v1705 = vrot.slane %v1696, %v1704
        %v1724 = vunpack.c.l.b16 %v1680
        %v1725 = vunpack.c.h.b16 %v1680
        %v1726 = vunpack.c.l.b16 %v1681
        %v1727 = vunpack.c.h.b16 %v1681
        %v1728 = vunpack.c.l.b16 %v1682
        %v1729 = vunpack.c.h.b16 %v1682
        %v1730 = vunpack.c.l.b16 %v1683
        %v1731 = vunpack.c.h.b16 %v1683
        %v1732 = vunpack.c.l.b16 %v1684
        %v1733 = vunpack.c.h.b16 %v1684
        %v1734 = vunpack.c.l.b16 %v1685
        %v1735 = vunpack.c.h.b16 %v1685
        %v1736 = vunpack.c.l.b16 %v1686
        %v1737 = vunpack.c.h.b16 %v1686
        %v1738 = vunpack.c.l.b16 %v1687
        %v1739 = vunpack.c.h.b16 %v1687
        %v1740 = vunpack.c.l.b16 %v1688
        %v1741 = vunpack.c.h.b16 %v1688
        %v1742 = vunpack.c.l.b16 %v1689
        %v1743 = vunpack.c.h.b16 %v1689
        %v1744 = vunpack.c.l.b16 %v1690
        %v1745 = vunpack.c.h.b16 %v1690
        %v1746 = vunpack.c.l.b16 %v1691
        %v1747 = vunpack.c.h.b16 %v1691
        %v1748 = vunpack.c.l.b16 %v1692
        %v1749 = vunpack.c.h.b16 %v1692
        %v1750 = vunpack.c.l.b16 %v1693
        %v1751 = vunpack.c.h.b16 %v1693
        %v1752 = vunpack.c.l.b16 %v1694
        %v1753 = vunpack.c.h.b16 %v1694
        %v1754 = vunpack.c.l.b16 %v1695
        %v1755 = vunpack.c.h.b16 %v1695
        %v1756 = vpack.c.b16 %v1726, %v1724
        %v1757 = vpack.c.b16 %v1727, %v1725
        %v1758 = vpack.c.b16 %v1730, %v1728
        %v1759 = vpack.c.b16 %v1731, %v1729
        %v1760 = vpack.c.b16 %v1734, %v1732
        %v1761 = vpack.c.b16 %v1735, %v1733
        %v1762 = vpack.c.b16 %v1738, %v1736
        %v1763 = vpack.c.b16 %v1739, %v1737
        %v1764 = vpack.c.b16 %v1742, %v1740
        %v1765 = vpack.c.b16 %v1743, %v1741
        %v1766 = vpack.c.b16 %v1746, %v1744
        %v1767 = vpack.c.b16 %v1747, %v1745
        %v1768 = vpack.c.b16 %v1750, %v1748
        %v1769 = vpack.c.b16 %v1751, %v1749
        %v1770 = vpack.c.b16 %v1754, %v1752
        %v1771 = vpack.c.b16 %v1755, %v1753
        %1788 = vmatprep.subr.bf16.mxu0 %v1757
        %1789 = vmatpush1.bf16.msra.mxu0 %v1756
        %1790 = vmatprep.subr.bf16.mxu0 %v1759
        %1791 = vmatpush1.bf16.msra.mxu0 %v1758
        %1792 = vmatprep.subr.bf16.mxu0 %v1761
        %1793 = vmatpush1.bf16.msra.mxu0 %v1760
        %1794 = vmatprep.subr.bf16.mxu0 %v1763
        %1795 = vmatpush1.bf16.msra.mxu0 %v1762
        %1796 = vmatprep.subr.bf16.mxu0 %v1765
        %1797 = vmatpush1.bf16.msra.mxu0 %v1764
        %1798 = vmatprep.subr.bf16.mxu0 %v1767
        %1799 = vmatpush1.bf16.msra.mxu0 %v1766
        %1800 = vmatprep.subr.bf16.mxu0 %v1769
        %1801 = vmatpush1.bf16.msra.mxu0 %v1768
        %1802 = vmatprep.subr.bf16.mxu0 %v1771
        %1803 = vmatpush1.bf16.msra.mxu0 %v1770
        %1804 = vmatprep.subr.bf16.mxu0 0
        %1805 = vmatpush1.bf16.msra.mxu0 0
        %1806 = vmatprep.subr.bf16.mxu0 0
        %1807 = vmatpush1.bf16.msra.mxu0 0
        %1808 = vmatprep.subr.bf16.mxu0 0
        %1809 = vmatpush1.bf16.msra.mxu0 0
        %1810 = vmatprep.subr.bf16.mxu0 0
        %1811 = vmatpush1.bf16.msra.mxu0 0
        %1812 = vmatprep.subr.bf16.mxu0 0
        %1813 = vmatpush1.bf16.msra.mxu0 0
        %1814 = vmatprep.subr.bf16.mxu0 0
        %1815 = vmatpush1.bf16.msra.mxu0 0
        %1816 = vmatprep.subr.bf16.mxu0 0
        %1817 = vmatpush1.bf16.msra.mxu0 0
        %1818 = vmatprep.subr.bf16.mxu0 0
        %1819 = vmatpush1.bf16.msra.mxu0 0
        %1820 = vmatprep.mubr.bf16.mxu0 0
        %1821 = vmatmul.mubr.bf16.gmra.mrb[0].mxu0 %v1664
        %v1822 = vpop.f32.mrb[0].mxu0
        %v1823 = vadd.f32 %v1701, %v1822
        %v1824 = vpop.f32.mrb[0].mxu0
        %v1825 = vadd.f32 %v1705, %v1824
        %v1826 = vpop.f32.mrb[0].mxu0
        %v1827 = vadd.f32 %v1701, %v1826
        %v1828 = vpop.f32.mrb[0].mxu0
        %v1829 = vadd.f32 %v1705, %v1828
        %1830 = vmatprep.mubr.bf16.mxu0 0
        %1831 = vmatmul.mubr.bf16.gmra.mrb[0].mxu0 %v1665
        %v1832 = vpop.f32.mrb[0].mxu0
        %v1833 = vadd.f32 %v1701, %v1832
        %v1834 = vpop.f32.mrb[0].mxu0
        %v1835 = vadd.f32 %v1705, %v1834
        %v1836 = vpop.f32.mrb[0].mxu0
        %v1837 = vadd.f32 %v1701, %v1836
        %v1838 = vpop.f32.mrb[0].mxu0
        %v1839 = vadd.f32 %v1705, %v1838
        %1840 = vmatprep.mubr.bf16.mxu0 0
        %1841 = vmatmul.mubr.bf16.gmra.mrb[0].mxu0 %v1666
        %v1842 = vpop.f32.mrb[0].mxu0
        %v1843 = vadd.f32 %v1701, %v1842
        %v1844 = vpop.f32.mrb[0].mxu0
        %v1845 = vadd.f32 %v1705, %v1844
        %v1846 = vpop.f32.mrb[0].mxu0
        %v1847 = vadd.f32 %v1701, %v1846
        %v1848 = vpop.f32.mrb[0].mxu0
        %v1849 = vadd.f32 %v1705, %v1848
        %1850 = vmatprep.mubr.bf16.mxu0 0
        %1851 = vmatmul.mubr.bf16.gmra.mrb[0].mxu0 %v1667
        %v1852 = vpop.f32.mrb[0].mxu0
        %v1853 = vadd.f32 %v1701, %v1852
        %v1854 = vpop.f32.mrb[0].mxu0
        %v1855 = vadd.f32 %v1705, %v1854
        %v1856 = vpop.f32.mrb[0].mxu0
        %v1857 = vadd.f32 %v1701, %v1856
        %v1858 = vpop.f32.mrb[0].mxu0
        %v1859 = vadd.f32 %v1705, %v1858
        %1860 = vmatprep.mubr.bf16.mxu0 0
        %1861 = vmatmul.mubr.bf16.gmra.mrb[0].mxu0 %v1668
        %v1862 = vpop.f32.mrb[0].mxu0
        %v1863 = vadd.f32 %v1701, %v1862
        %v1864 = vpop.f32.mrb[0].mxu0
        %v1865 = vadd.f32 %v1705, %v1864
        %v1866 = vpop.f32.mrb[0].mxu0
        %v1867 = vadd.f32 %v1701, %v1866
        %v1868 = vpop.f32.mrb[0].mxu0
        %v1869 = vadd.f32 %v1705, %v1868
        %1870 = vmatprep.mubr.bf16.mxu0 0
        %1871 = vmatmul.mubr.bf16.gmra.mrb[0].mxu0 %v1669
        %v1872 = vpop.f32.mrb[0].mxu0
        %v1873 = vadd.f32 %v1701, %v1872
        %v1874 = vpop.f32.mrb[0].mxu0
        %v1875 = vadd.f32 %v1705, %v1874
        %v1876 = vpop.f32.mrb[0].mxu0
        %v1877 = vadd.f32 %v1701, %v1876
        %v1878 = vpop.f32.mrb[0].mxu0
        %v1879 = vadd.f32 %v1705, %v1878
        %1880 = vmatprep.mubr.bf16.mxu0 0
        %1881 = vmatmul.mubr.bf16.gmra.mrb[0].mxu0 %v1670
        %v1882 = vpop.f32.mrb[0].mxu0
        %v1883 = vadd.f32 %v1701, %v1882
        %v1884 = vpop.f32.mrb[0].mxu0
        %v1885 = vadd.f32 %v1705, %v1884
        %v1886 = vpop.f32.mrb[0].mxu0
        %v1887 = vadd.f32 %v1701, %v1886
        %v1888 = vpop.f32.mrb[0].mxu0
        %v1889 = vadd.f32 %v1705, %v1888
        %1890 = vmatprep.mubr.bf16.mxu0 0
        %1891 = vmatmul.mubr.bf16.gmra.mrb[0].mxu0 %v1671
        %v1892 = vpop.f32.mrb[0].mxu0
        %v1893 = vadd.f32 %v1701, %v1892
        %v1894 = vpop.f32.mrb[0].mxu0
        %v1895 = vadd.f32 %v1705, %v1894
        %v1896 = vpop.f32.mrb[0].mxu0
        %v1897 = vadd.f32 %v1701, %v1896
        %v1898 = vpop.f32.mrb[0].mxu0
        %v1899 = vadd.f32 %v1705, %v1898
        %1900 = vmatprep.mubr.bf16.mxu0 0
        %1901 = vmatmul.mubr.bf16.gmra.mrb[0].mxu0 %v1672
        %v1902 = vpop.f32.mrb[0].mxu0
        %v1903 = vadd.f32 %v1701, %v1902
        %v1904 = vpop.f32.mrb[0].mxu0
        %v1905 = vadd.f32 %v1705, %v1904
        %v1906 = vpop.f32.mrb[0].mxu0
        %v1907 = vadd.f32 %v1701, %v1906
        %v1908 = vpop.f32.mrb[0].mxu0
        %v1909 = vadd.f32 %v1705, %v1908
        %1910 = vmatprep.mubr.bf16.mxu0 0
        %1911 = vmatmul.mubr.bf16.gmra.mrb[0].mxu0 %v1673
        %v1912 = vpop.f32.mrb[0].mxu0
        %v1913 = vadd.f32 %v1701, %v1912
        %v1914 = vpop.f32.mrb[0].mxu0
        %v1915 = vadd.f32 %v1705, %v1914
        %v1916 = vpop.f32.mrb[0].mxu0
        %v1917 = vadd.f32 %v1701, %v1916
        %v1918 = vpop.f32.mrb[0].mxu0
        %v1919 = vadd.f32 %v1705, %v1918
        %1920 = vmatprep.mubr.bf16.mxu0 0
        %1921 = vmatmul.mubr.bf16.gmra.mrb[0].mxu0 %v1674
        %v1922 = vpop.f32.mrb[0].mxu0
        %v1923 = vadd.f32 %v1701, %v1922
        %v1924 = vpop.f32.mrb[0].mxu0
        %v1925 = vadd.f32 %v1705, %v1924
        %v1926 = vpop.f32.mrb[0].mxu0
        %v1927 = vadd.f32 %v1701, %v1926
        %v1928 = vpop.f32.mrb[0].mxu0
        %v1929 = vadd.f32 %v1705, %v1928
        %1930 = vmatprep.mubr.bf16.mxu0 0
        %1931 = vmatmul.mubr.bf16.gmra.mrb[0].mxu0 %v1675
        %v1932 = vpop.f32.mrb[0].mxu0
        %v1933 = vadd.f32 %v1701, %v1932
        %v1934 = vpop.f32.mrb[0].mxu0
        %v1935 = vadd.f32 %v1705, %v1934
        %v1936 = vpop.f32.mrb[0].mxu0
        %v1937 = vadd.f32 %v1701, %v1936
        %v1938 = vpop.f32.mrb[0].mxu0
        %v1939 = vadd.f32 %v1705, %v1938
        %1940 = vmatprep.mubr.bf16.mxu0 0
        %1941 = vmatmul.mubr.bf16.gmra.mrb[0].mxu0 %v1676
        %v1942 = vpop.f32.mrb[0].mxu0
        %v1943 = vadd.f32 %v1701, %v1942
        %v1944 = vpop.f32.mrb[0].mxu0
        %v1945 = vadd.f32 %v1705, %v1944
        %v1946 = vpop.f32.mrb[0].mxu0
        %v1947 = vadd.f32 %v1701, %v1946
        %v1948 = vpop.f32.mrb[0].mxu0
        %v1949 = vadd.f32 %v1705, %v1948
        %1950 = vmatprep.mubr.bf16.mxu0 0
        %1951 = vmatmul.mubr.bf16.gmra.mrb[0].mxu0 %v1677
        %v1952 = vpop.f32.mrb[0].mxu0
        %v1953 = vadd.f32 %v1701, %v1952
        %v1954 = vpop.f32.mrb[0].mxu0
        %v1955 = vadd.f32 %v1705, %v1954
        %v1956 = vpop.f32.mrb[0].mxu0
        %v1957 = vadd.f32 %v1701, %v1956
        %v1958 = vpop.f32.mrb[0].mxu0
        %v1959 = vadd.f32 %v1705, %v1958
        %1960 = vmatprep.mubr.bf16.mxu0 0
        %1961 = vmatmul.mubr.bf16.gmra.mrb[0].mxu0 %v1678
        %v1962 = vpop.f32.mrb[0].mxu0
        %v1963 = vadd.f32 %v1701, %v1962
        %v1964 = vpop.f32.mrb[0].mxu0
        %v1965 = vadd.f32 %v1705, %v1964
        %v1966 = vpop.f32.mrb[0].mxu0
        %v1967 = vadd.f32 %v1701, %v1966
        %v1968 = vpop.f32.mrb[0].mxu0
        %v1969 = vadd.f32 %v1705, %v1968
        %1970 = vmatprep.mubr.bf16.mxu0 0
        %1971 = vmatmul.mubr.bf16.gmra.mrb[0].mxu0 %v1679
        %v1972 = vpop.f32.mrb[0].mxu0
        %v1973 = vadd.f32 %v1701, %v1972
        %v1974 = vpop.f32.mrb[0].mxu0
        %v1975 = vadd.f32 %v1705, %v1974
        %v1976 = vpop.f32.mrb[0].mxu0
        %v1977 = vadd.f32 %v1701, %v1976
        %v1978 = vpop.f32.mrb[0].mxu0
        %v1979 = vadd.f32 %v1705, %v1978
        %1980 = vdwg.mxu0
        %v1981 = vmax.f32 %v1823, 0.0
        %v1982 = vmax.f32 %v1825, 0.0
        %v1983 = vmax.f32 %v1827, 0.0
        %v1984 = vmax.f32 %v1829, 0.0
        %v1985 = vmax.f32 %v1833, 0.0
        %v1986 = vmax.f32 %v1835, 0.0
        %v1987 = vmax.f32 %v1837, 0.0
        %v1988 = vmax.f32 %v1839, 0.0
        %v1989 = vmax.f32 %v1843, 0.0
        %v1990 = vmax.f32 %v1845, 0.0
        %v1991 = vmax.f32 %v1847, 0.0
        %v1992 = vmax.f32 %v1849, 0.0
        %v1993 = vmax.f32 %v1853, 0.0
        %v1994 = vmax.f32 %v1855, 0.0
        %v1995 = vmax.f32 %v1857, 0.0
        %v1996 = vmax.f32 %v1859, 0.0
        %v1997 = vmax.f32 %v1863, 0.0
        %v1998 = vmax.f32 %v1865, 0.0
        %v1999 = vmax.f32 %v1867, 0.0
        %v2000 = vmax.f32 %v1869, 0.0
        %v2001 = vmax.f32 %v1873, 0.0
        %v2002 = vmax.f32 %v1875, 0.0
        %v2003 = vmax.f32 %v1877, 0.0
        %v2004 = vmax.f32 %v1879, 0.0
        %v2005 = vmax.f32 %v1883, 0.0
        %v2006 = vmax.f32 %v1885, 0.0
        %v2007 = vmax.f32 %v1887, 0.0
        %v2008 = vmax.f32 %v1889, 0.0
        %v2009 = vmax.f32 %v1893, 0.0
        %v2010 = vmax.f32 %v1895, 0.0
        %v2011 = vmax.f32 %v1897, 0.0
        %v2012 = vmax.f32 %v1899, 0.0
        %v2013 = vmax.f32 %v1903, 0.0
        %v2014 = vmax.f32 %v1905, 0.0
        %v2015 = vmax.f32 %v1907, 0.0
        %v2016 = vmax.f32 %v1909, 0.0
        %v2017 = vmax.f32 %v1913, 0.0
        %v2018 = vmax.f32 %v1915, 0.0
        %v2019 = vmax.f32 %v1917, 0.0
        %v2020 = vmax.f32 %v1919, 0.0
        %v2021 = vmax.f32 %v1923, 0.0
        %v2022 = vmax.f32 %v1925, 0.0
        %v2023 = vmax.f32 %v1927, 0.0
        %v2024 = vmax.f32 %v1929, 0.0
        %v2025 = vmax.f32 %v1933, 0.0
        %v2026 = vmax.f32 %v1935, 0.0
        %v2027 = vmax.f32 %v1937, 0.0
        %v2028 = vmax.f32 %v1939, 0.0
        %v2029 = vmax.f32 %v1943, 0.0
        %v2030 = vmax.f32 %v1945, 0.0
        %v2031 = vmax.f32 %v1947, 0.0
        %v2032 = vmax.f32 %v1949, 0.0
        %v2033 = vmax.f32 %v1953, 0.0
        %v2034 = vmax.f32 %v1955, 0.0
        %v2035 = vmax.f32 %v1957, 0.0
        %v2036 = vmax.f32 %v1959, 0.0
        %v2037 = vmax.f32 %v1963, 0.0
        %v2038 = vmax.f32 %v1965, 0.0
        %v2039 = vmax.f32 %v1967, 0.0
        %v2040 = vmax.f32 %v1969, 0.0
        %v2041 = vmax.f32 %v1973, 0.0
        %v2042 = vmax.f32 %v1975, 0.0
        %v2043 = vmax.f32 %v1977, 0.0
        %v2044 = vmax.f32 %v1979, 0.0
        %v2045 = vmax.f32 %v1981, 1e-06
        %v2046 = vmax.f32 %v1982, 1e-06
        %v2047 = vmax.f32 %v1983, 1e-06
        %v2048 = vmax.f32 %v1984, 1e-06
        %v2049 = vmax.f32 %v1985, 1e-06
        %v2050 = vmax.f32 %v1986, 1e-06
        %v2051 = vmax.f32 %v1987, 1e-06
        %v2052 = vmax.f32 %v1988, 1e-06
        %v2053 = vmax.f32 %v1989, 1e-06
        %v2054 = vmax.f32 %v1990, 1e-06
        %v2055 = vmax.f32 %v1991, 1e-06
        %v2056 = vmax.f32 %v1992, 1e-06
        %v2057 = vmax.f32 %v1993, 1e-06
        %v2058 = vmax.f32 %v1994, 1e-06
        %v2059 = vmax.f32 %v1995, 1e-06
        %v2060 = vmax.f32 %v1996, 1e-06
        %v2061 = vmax.f32 %v1997, 1e-06
        %v2062 = vmax.f32 %v1998, 1e-06
        %v2063 = vmax.f32 %v1999, 1e-06
        %v2064 = vmax.f32 %v2000, 1e-06
        %v2065 = vmax.f32 %v2001, 1e-06
        %v2066 = vmax.f32 %v2002, 1e-06
        %v2067 = vmax.f32 %v2003, 1e-06
        %v2068 = vmax.f32 %v2004, 1e-06
        %v2069 = vmax.f32 %v2005, 1e-06
        %v2070 = vmax.f32 %v2006, 1e-06
        %v2071 = vmax.f32 %v2007, 1e-06
        %v2072 = vmax.f32 %v2008, 1e-06
        %v2073 = vmax.f32 %v2009, 1e-06
        %v2074 = vmax.f32 %v2010, 1e-06
        %v2075 = vmax.f32 %v2011, 1e-06
        %v2076 = vmax.f32 %v2012, 1e-06
        %v2077 = vmax.f32 %v2013, 1e-06
        %v2078 = vmax.f32 %v2014, 1e-06
        %v2079 = vmax.f32 %v2015, 1e-06
        %v2080 = vmax.f32 %v2016, 1e-06
        %v2081 = vmax.f32 %v2017, 1e-06
        %v2082 = vmax.f32 %v2018, 1e-06
        %v2083 = vmax.f32 %v2019, 1e-06
        %v2084 = vmax.f32 %v2020, 1e-06
        %v2085 = vmax.f32 %v2021, 1e-06
        %v2086 = vmax.f32 %v2022, 1e-06
        %v2087 = vmax.f32 %v2023, 1e-06
        %v2088 = vmax.f32 %v2024, 1e-06
        %v2089 = vmax.f32 %v2025, 1e-06
        %v2090 = vmax.f32 %v2026, 1e-06
        %v2091 = vmax.f32 %v2027, 1e-06
        %v2092 = vmax.f32 %v2028, 1e-06
        %v2093 = vmax.f32 %v2029, 1e-06
        %v2094 = vmax.f32 %v2030, 1e-06
        %v2095 = vmax.f32 %v2031, 1e-06
        %v2096 = vmax.f32 %v2032, 1e-06
        %v2097 = vmax.f32 %v2033, 1e-06
        %v2098 = vmax.f32 %v2034, 1e-06
        %v2099 = vmax.f32 %v2035, 1e-06
        %v2100 = vmax.f32 %v2036, 1e-06
        %v2101 = vmax.f32 %v2037, 1e-06
        %v2102 = vmax.f32 %v2038, 1e-06
        %v2103 = vmax.f32 %v2039, 1e-06
        %v2104 = vmax.f32 %v2040, 1e-06
        %v2105 = vmax.f32 %v2041, 1e-06
        %v2106 = vmax.f32 %v2042, 1e-06
        %v2107 = vmax.f32 %v2043, 1e-06
        %v2108 = vmax.f32 %v2044, 1e-06
        %v2109 = vmul.f32 %v2045, %v2045
        %v2110 = vmul.f32 %v2046, %v2046
        %v2111 = vmul.f32 %v2047, %v2047
        %v2112 = vmul.f32 %v2048, %v2048
        %v2113 = vmul.f32 %v2049, %v2049
        %v2114 = vmul.f32 %v2050, %v2050
        %v2115 = vmul.f32 %v2051, %v2051
        %v2116 = vmul.f32 %v2052, %v2052
        %v2117 = vmul.f32 %v2053, %v2053
        %v2118 = vmul.f32 %v2054, %v2054
        %v2119 = vmul.f32 %v2055, %v2055
        %v2120 = vmul.f32 %v2056, %v2056
        %v2121 = vmul.f32 %v2057, %v2057
        %v2122 = vmul.f32 %v2058, %v2058
        %v2123 = vmul.f32 %v2059, %v2059
        %v2124 = vmul.f32 %v2060, %v2060
        %v2125 = vmul.f32 %v2061, %v2061
        %v2126 = vmul.f32 %v2062, %v2062
        %v2127 = vmul.f32 %v2063, %v2063
        %v2128 = vmul.f32 %v2064, %v2064
        %v2129 = vmul.f32 %v2065, %v2065
        %v2130 = vmul.f32 %v2066, %v2066
        %v2131 = vmul.f32 %v2067, %v2067
        %v2132 = vmul.f32 %v2068, %v2068
        %v2133 = vmul.f32 %v2069, %v2069
        %v2134 = vmul.f32 %v2070, %v2070
        %v2135 = vmul.f32 %v2071, %v2071
        %v2136 = vmul.f32 %v2072, %v2072
        %v2137 = vmul.f32 %v2073, %v2073
        %v2138 = vmul.f32 %v2074, %v2074
        %v2139 = vmul.f32 %v2075, %v2075
        %v2140 = vmul.f32 %v2076, %v2076
        %v2141 = vmul.f32 %v2077, %v2077
        %v2142 = vmul.f32 %v2078, %v2078
        %v2143 = vmul.f32 %v2079, %v2079
        %v2144 = vmul.f32 %v2080, %v2080
        %v2145 = vmul.f32 %v2081, %v2081
        %v2146 = vmul.f32 %v2082, %v2082
        %v2147 = vmul.f32 %v2083, %v2083
        %v2148 = vmul.f32 %v2084, %v2084
        %v2149 = vmul.f32 %v2085, %v2085
        %v2150 = vmul.f32 %v2086, %v2086
        %v2151 = vmul.f32 %v2087, %v2087
        %v2152 = vmul.f32 %v2088, %v2088
        %v2153 = vmul.f32 %v2089, %v2089
        %v2154 = vmul.f32 %v2090, %v2090
        %v2155 = vmul.f32 %v2091, %v2091
        %v2156 = vmul.f32 %v2092, %v2092
        %v2157 = vmul.f32 %v2093, %v2093
        %v2158 = vmul.f32 %v2094, %v2094
        %v2159 = vmul.f32 %v2095, %v2095
        %v2160 = vmul.f32 %v2096, %v2096
        %v2161 = vmul.f32 %v2097, %v2097
        %v2162 = vmul.f32 %v2098, %v2098
        %v2163 = vmul.f32 %v2099, %v2099
        %v2164 = vmul.f32 %v2100, %v2100
        %v2165 = vmul.f32 %v2101, %v2101
        %v2166 = vmul.f32 %v2102, %v2102
        %v2167 = vmul.f32 %v2103, %v2103
        %v2168 = vmul.f32 %v2104, %v2104
        %v2169 = vmul.f32 %v2105, %v2105
        %v2170 = vmul.f32 %v2106, %v2106
        %v2171 = vmul.f32 %v2107, %v2107
        %v2172 = vmul.f32 %v2108, %v2108
        %v2173 = vmul.f32 %v2045, %v2109
        %v2174 = vmul.f32 %v2046, %v2110
        %v2175 = vmul.f32 %v2047, %v2111
        %v2176 = vmul.f32 %v2048, %v2112
        %v2177 = vmul.f32 %v2049, %v2113
        %v2178 = vmul.f32 %v2050, %v2114
        %v2179 = vmul.f32 %v2051, %v2115
        %v2180 = vmul.f32 %v2052, %v2116
        %v2181 = vmul.f32 %v2053, %v2117
        %v2182 = vmul.f32 %v2054, %v2118
        %v2183 = vmul.f32 %v2055, %v2119
        %v2184 = vmul.f32 %v2056, %v2120
        %v2185 = vmul.f32 %v2057, %v2121
        %v2186 = vmul.f32 %v2058, %v2122
        %v2187 = vmul.f32 %v2059, %v2123
        %v2188 = vmul.f32 %v2060, %v2124
        %v2189 = vmul.f32 %v2061, %v2125
        %v2190 = vmul.f32 %v2062, %v2126
        %v2191 = vmul.f32 %v2063, %v2127
        %v2192 = vmul.f32 %v2064, %v2128
        %v2193 = vmul.f32 %v2065, %v2129
        %v2194 = vmul.f32 %v2066, %v2130
        %v2195 = vmul.f32 %v2067, %v2131
        %v2196 = vmul.f32 %v2068, %v2132
        %v2197 = vmul.f32 %v2069, %v2133
        %v2198 = vmul.f32 %v2070, %v2134
        %v2199 = vmul.f32 %v2071, %v2135
        %v2200 = vmul.f32 %v2072, %v2136
        %v2201 = vmul.f32 %v2073, %v2137
        %v2202 = vmul.f32 %v2074, %v2138
        %v2203 = vmul.f32 %v2075, %v2139
        %v2204 = vmul.f32 %v2076, %v2140
        %v2205 = vmul.f32 %v2077, %v2141
        %v2206 = vmul.f32 %v2078, %v2142
        %v2207 = vmul.f32 %v2079, %v2143
        %v2208 = vmul.f32 %v2080, %v2144
        %v2209 = vmul.f32 %v2081, %v2145
        %v2210 = vmul.f32 %v2082, %v2146
        %v2211 = vmul.f32 %v2083, %v2147
        %v2212 = vmul.f32 %v2084, %v2148
        %v2213 = vmul.f32 %v2085, %v2149
        %v2214 = vmul.f32 %v2086, %v2150
        %v2215 = vmul.f32 %v2087, %v2151
        %v2216 = vmul.f32 %v2088, %v2152
        %v2217 = vmul.f32 %v2089, %v2153
        %v2218 = vmul.f32 %v2090, %v2154
        %v2219 = vmul.f32 %v2091, %v2155
        %v2220 = vmul.f32 %v2092, %v2156
        %v2221 = vmul.f32 %v2093, %v2157
        %v2222 = vmul.f32 %v2094, %v2158
        %v2223 = vmul.f32 %v2095, %v2159
        %v2224 = vmul.f32 %v2096, %v2160
        %v2225 = vmul.f32 %v2097, %v2161
        %v2226 = vmul.f32 %v2098, %v2162
        %v2227 = vmul.f32 %v2099, %v2163
        %v2228 = vmul.f32 %v2100, %v2164
        %v2229 = vmul.f32 %v2101, %v2165
        %v2230 = vmul.f32 %v2102, %v2166
        %v2231 = vmul.f32 %v2103, %v2167
        %v2232 = vmul.f32 %v2104, %v2168
        %v2233 = vmul.f32 %v2105, %v2169
        %v2234 = vmul.f32 %v2106, %v2170
        %v2235 = vmul.f32 %v2107, %v2171
        %v2236 = vmul.f32 %v2108, %v2172
        %v2237 = vld [vmem:[#allocation2] sm:$0xf]
        %v2238 = vadd.f32 %v2173, %v2175
        %v2239 = vadd.f32 %v2238, %v2177
        %v2240 = vadd.f32 %v2239, %v2179
        %v2241 = vadd.f32 %v2240, %v2181
        %v2242 = vadd.f32 %v2241, %v2183
        %v2243 = vadd.f32 %v2242, %v2185
        %v2244 = vadd.f32 %v2243, %v2187
        %v2245 = vadd.f32 %v2244, %v2189
        %v2246 = vadd.f32 %v2245, %v2191
        %v2247 = vadd.f32 %v2246, %v2193
        %v2248 = vadd.f32 %v2247, %v2195
        %v2249 = vadd.f32 %v2248, %v2197
        %v2250 = vadd.f32 %v2249, %v2199
        %v2251 = vadd.f32 %v2250, %v2201
        %v2252 = vadd.f32 %v2251, %v2203
        %v2253 = vrot.slane %v2252, 4
        %v2254 = vadd.f32 %v2252, %v2253
        %v2255 = vrot.slane %v2254, 2
        %v2256 = vadd.f32 %v2254, %v2255
        %v2257 = vrot.slane %v2256, 1
        %v2258 = vadd.f32 %v2256, %v2257
        %v2259 = vadd.f32 %v2174, %v2176
        %v2260 = vadd.f32 %v2259, %v2178
        %v2261 = vadd.f32 %v2260, %v2180
        %v2262 = vadd.f32 %v2261, %v2182
        %v2263 = vadd.f32 %v2262, %v2184
        %v2264 = vadd.f32 %v2263, %v2186
        %v2265 = vadd.f32 %v2264, %v2188
        %v2266 = vadd.f32 %v2265, %v2190
        %v2267 = vadd.f32 %v2266, %v2192
        %v2268 = vadd.f32 %v2267, %v2194
        %v2269 = vadd.f32 %v2268, %v2196
        %v2270 = vadd.f32 %v2269, %v2198
        %v2271 = vadd.f32 %v2270, %v2200
        %v2272 = vadd.f32 %v2271, %v2202
        %v2273 = vadd.f32 %v2272, %v2204
        %v2274 = vrot.slane %v2273, 4
        %v2275 = vadd.f32 %v2273, %v2274
        %v2276 = vrot.slane %v2275, 2
        %v2277 = vadd.f32 %v2275, %v2276
        %v2278 = vrot.slane %v2277, 1
        %v2279 = vadd.f32 %v2277, %v2278
        %v2280 = vadd.f32 %v2205, %v2207
        %v2281 = vadd.f32 %v2280, %v2209
        %v2282 = vadd.f32 %v2281, %v2211
        %v2283 = vadd.f32 %v2282, %v2213
        %v2284 = vadd.f32 %v2283, %v2215
        %v2285 = vadd.f32 %v2284, %v2217
        %v2286 = vadd.f32 %v2285, %v2219
        %v2287 = vadd.f32 %v2286, %v2221
        %v2288 = vadd.f32 %v2287, %v2223
        %v2289 = vadd.f32 %v2288, %v2225
        %v2290 = vadd.f32 %v2289, %v2227
        %v2291 = vadd.f32 %v2290, %v2229
        %v2292 = vadd.f32 %v2291, %v2231
        %v2293 = vadd.f32 %v2292, %v2233
        %v2294 = vadd.f32 %v2293, %v2235
        %v2295 = vrot.slane %v2294, 4
        %v2296 = vadd.f32 %v2294, %v2295
        %v2297 = vrot.slane %v2296, 2
        %v2298 = vadd.f32 %v2296, %v2297
        %v2299 = vrot.slane %v2298, 1
        %v2300 = vadd.f32 %v2298, %v2299
        %v2301 = vadd.f32 %v2206, %v2208
        %v2302 = vadd.f32 %v2301, %v2210
        %v2303 = vadd.f32 %v2302, %v2212
        %v2304 = vadd.f32 %v2303, %v2214
        %v2305 = vadd.f32 %v2304, %v2216
        %v2306 = vadd.f32 %v2305, %v2218
        %v2307 = vadd.f32 %v2306, %v2220
        %v2308 = vadd.f32 %v2307, %v2222
        %v2309 = vadd.f32 %v2308, %v2224
        %v2310 = vadd.f32 %v2309, %v2226
        %v2311 = vadd.f32 %v2310, %v2228
        %v2312 = vadd.f32 %v2311, %v2230
        %v2313 = vadd.f32 %v2312, %v2232
        %v2314 = vadd.f32 %v2313, %v2234
        %v2315 = vadd.f32 %v2314, %v2236
        %v2316 = vrot.slane %v2315, 4
        %v2317 = vadd.f32 %v2315, %v2316
        %v2318 = vrot.slane %v2317, 2
        %v2319 = vadd.f32 %v2317, %v2318
        %v2320 = vrot.slane %v2319, 1
        %v2321 = vadd.f32 %v2319, %v2320
        %v2326 = vcombine.low %v2258, %v2279
        %v2328 = vunpack.c.l.s4 1983009808
        %v2329 = vunpack.c.0.s8 %v2328
        %v2330 = vlaneseq
        %v2331 = vshrl.u32 %v2330, 7
        %v2332 = vsub.s32 %v2329, %v2331
        %v2333 = vrot.slane %v2326, %v2332
        %v2334 = vcombine.low %v2300, %v2321
        %v2336 = vunpack.c.l.s4 1983009808
        %v2337 = vunpack.c.0.s8 %v2336
        %v2338 = vlaneseq
        %v2339 = vshrl.u32 %v2338, 7
        %v2340 = vsub.s32 %v2337, %v2339
        %v2341 = vrot.slane %v2334, %v2340
        %vm2342 = vcmask 1044484
        %v2343 = vsel %vm2342, %v2333, %v2333
        %vm2344 = vcmask 1046534
        %v2345 = vsel %vm2344, %v2333, %v2343
        %v2346 = vrot.slane %v2341, 7
        %vm2347 = vcmask 1041409
        %v2348 = vsel %vm2347, %v2346, %v2345
        %vm2349 = vcmask 1043459
        %v2350 = vsel %vm2349, %v2346, %v2348
        %vm2351 = vcmask 1045509
        %v2352 = vsel %vm2351, %v2346, %v2350
        %vm2353 = vcmask 1047559
        %v2354 = vsel %vm2353, %v2346, %v2352
        %v2356 = vadd.f32 %v2237, %v2354
        %2357 = vst [vmem:[#allocation2] sm:$0xf] %v2356
        // Predicated region
        $region77: #{tpu_custom_call.1} parent=71 // pred_check
          %p2358 = pneg %p468
        $region78: #{tpu_custom_call.1} parent=71 // pred_check_branch
          %2360 = sbr.rel (%p2358) target = $region80
        $region79: #{tpu_custom_call.1} parent=71 // pred_region
          %v2361 = vld [vmem:[#allocation2] sm:$0xf]
          %v2362 = vmul.f32 %v2361, 0.0078125
          %v2363 = vlog2.pop %v2362
          %v2364 = vmul.f32 %v2363, 0.6931472
          %v2365 = vmul.f32 %v2364, 0.33333334
          %v2366 = vmul.f32 %v2365, 1.442695
          %v2367 = vpow.pop %v2366
          %v2368 = vld [vmem:[%s11] sm:$0xff]
          %v2369 = vld [vmem:[%s11 + $0x8] sm:$0xff]
          %v2370 = vld [vmem:[%s11 + $0x10] sm:$0xff]
          %v2371 = vld [vmem:[%s11 + $0x18] sm:$0xff]
          %v2372 = vld [vmem:[%s11 + $0x20] sm:$0xff]
          %v2373 = vld [vmem:[%s11 + $0x28] sm:$0xff]
          %v2374 = vld [vmem:[%s11 + $0x30] sm:$0xff]
          %v2375 = vld [vmem:[%s11 + $0x38] sm:$0xff]
          %v2376 = vld [vmem:[%s11 + $0x40] sm:$0xff]
          %v2377 = vld [vmem:[%s11 + $0x48] sm:$0xff]
          %v2378 = vld [vmem:[%s11 + $0x50] sm:$0xff]
          %v2379 = vld [vmem:[%s11 + $0x58] sm:$0xff]
          %v2380 = vld [vmem:[%s11 + $0x60] sm:$0xff]
          %v2381 = vld [vmem:[%s11 + $0x68] sm:$0xff]
          %v2382 = vld [vmem:[%s11 + $0x70] sm:$0xff]
          %v2383 = vld [vmem:[%s11 + $0x78] sm:$0xff]
          %v2384 = vld [vmem:[%s11 + $0x80] sm:$0xff]
          %v2385 = vld [vmem:[%s11 + $0x88] sm:$0xff]
          %v2386 = vld [vmem:[%s11 + $0x90] sm:$0xff]
          %v2387 = vld [vmem:[%s11 + $0x98] sm:$0xff]
          %v2388 = vld [vmem:[%s11 + $0xa0] sm:$0xff]
          %v2389 = vld [vmem:[%s11 + $0xa8] sm:$0xff]
          %v2390 = vld [vmem:[%s11 + $0xb0] sm:$0xff]
          %v2391 = vld [vmem:[%s11 + $0xb8] sm:$0xff]
          %v2392 = vld [vmem:[%s11 + $0xc0] sm:$0xff]
          %v2393 = vld [vmem:[%s11 + $0xc8] sm:$0xff]
          %v2394 = vld [vmem:[%s11 + $0xd0] sm:$0xff]
          %v2395 = vld [vmem:[%s11 + $0xd8] sm:$0xff]
          %v2396 = vld [vmem:[%s11 + $0xe0] sm:$0xff]
          %v2397 = vld [vmem:[%s11 + $0xe8] sm:$0xff]
          %v2398 = vld [vmem:[%s11 + $0xf0] sm:$0xff]
          %v2399 = vld [vmem:[%s11 + $0xf8] sm:$0xff]
          %v2400 = vld [vmem:[%s12] sm:$0x1]
          %v2402 = vlaneseq
          %v2403 = vshrl.u32 %v2402, 7
          %v2404 = vsub.s32 0, %v2403
          %v2405 = vrot.slane %v2400, %v2404
          %v2409 = vunpack.c.l.s4 1983009808
          %v2410 = vunpack.c.0.s8 %v2409
          %v2411 = vlaneseq
          %v2412 = vshrl.u32 %v2411, 7
          %v2413 = vsub.s32 %v2410, %v2412
          %v2414 = vrot.slane %v2367, %v2413
          %v2415 = vcombine.high %v2414, %v2414
          %2418 = vmatprep.subr.mxu0 0.0
          %2419 = vmatpush1.msra.mxu0 %v2368
          %2420 = vmatprep.subr.mxu0 0.0
          %2421 = vmatpush1.msra.mxu0 %v2369
          %2422 = vmatprep.subr.mxu0 0.0
          %2423 = vmatpush1.msra.mxu0 %v2370
          %2424 = vmatprep.subr.mxu0 0.0
          %2425 = vmatpush1.msra.mxu0 %v2371
          %2426 = vmatprep.subr.mxu0 0.0
          %2427 = vmatpush1.msra.mxu0 %v2372
          %2428 = vmatprep.subr.mxu0 0.0
          %2429 = vmatpush1.msra.mxu0 %v2373
          %2430 = vmatprep.subr.mxu0 0.0
          %2431 = vmatpush1.msra.mxu0 %v2374
          %2432 = vmatprep.subr.mxu0 0.0
          %2433 = vmatpush1.msra.mxu0 %v2375
          %2434 = vmatprep.subr.mxu0 0.0
          %2435 = vmatpush1.msra.mxu0 %v2376
          %2436 = vmatprep.subr.mxu0 0.0
          %2437 = vmatpush1.msra.mxu0 %v2377
          %2438 = vmatprep.subr.mxu0 0.0
          %2439 = vmatpush1.msra.mxu0 %v2378
          %2440 = vmatprep.subr.mxu0 0.0
          %2441 = vmatpush1.msra.mxu0 %v2379
          %2442 = vmatprep.subr.mxu0 0.0
          %2443 = vmatpush1.msra.mxu0 %v2380
          %2444 = vmatprep.subr.mxu0 0.0
          %2445 = vmatpush1.msra.mxu0 %v2381
          %2446 = vmatprep.subr.mxu0 0.0
          %2447 = vmatpush1.msra.mxu0 %v2382
          %2448 = vmatprep.subr.mxu0 0.0
          %2449 = vmatpush1.msra.mxu0 %v2383
          %2450 = vmatprep.subr.mxu0 0.0
          %2451 = vmatpush1.msra.mxu0 %v2384
          %2452 = vmatprep.subr.mxu0 0.0
          %2453 = vmatpush1.msra.mxu0 %v2385
          %2454 = vmatprep.subr.mxu0 0.0
          %2455 = vmatpush1.msra.mxu0 %v2386
          %2456 = vmatprep.subr.mxu0 0.0
          %2457 = vmatpush1.msra.mxu0 %v2387
          %2458 = vmatprep.subr.mxu0 0.0
          %2459 = vmatpush1.msra.mxu0 %v2388
          %2460 = vmatprep.subr.mxu0 0.0
          %2461 = vmatpush1.msra.mxu0 %v2389
          %2462 = vmatprep.subr.mxu0 0.0
          %2463 = vmatpush1.msra.mxu0 %v2390
          %2464 = vmatprep.subr.mxu0 0.0
          %2465 = vmatpush1.msra.mxu0 %v2391
          %2466 = vmatprep.subr.mxu0 0.0
          %2467 = vmatpush1.msra.mxu0 %v2392
          %2468 = vmatprep.subr.mxu0 0.0
          %2469 = vmatpush1.msra.mxu0 %v2393
          %2470 = vmatprep.subr.mxu0 0.0
          %2471 = vmatpush1.msra.mxu0 %v2394
          %2472 = vmatprep.subr.mxu0 0.0
          %2473 = vmatpush1.msra.mxu0 %v2395
          %2474 = vmatprep.subr.mxu0 0.0
          %2475 = vmatpush1.msra.mxu0 %v2396
          %2476 = vmatprep.subr.mxu0 0.0
          %2477 = vmatpush1.msra.mxu0 %v2397
          %2478 = vmatprep.subr.mxu0 0.0
          %2479 = vmatpush1.msra.mxu0 %v2398
          %2480 = vmatprep.subr.mxu0 0.0
          %2481 = vmatpush1.msra.mxu0 %v2399
          %2482 = vmatprep.mubr.f32.mxu0 %v2415
          %2483 = vmatmul.mubr.f32.gmra.mrb[0].mxu0 %v2414
          %v2484 = vpop.f32.mrb[0].mxu0
          %v2485 = vadd.f32 %v2405, %v2484
          %v2486 = vpop.f32.mrb[0].mxu0
          %2487 = vdwg.mxu0
          %2488 = vst [vmem:[%s456] sm:$0x3] %v2485
        $region80: #{tpu_custom_call.1} parent=71 // pred_fallthru
          _
        %s2489 = sand.u32 %s327, 1
        %s2490 = scalar_lea.sflag [#allocation4], %s2489
        %s2491 = sand.u32 %s327, 1
        %s2492 = smul.addr %s2491, 2
        %s2493 = scalar_lea.vmem [#allocation3], %s2492
        // Predicated region
        $region81: #{tpu_custom_call.1} parent=71 // pred_check
          %p2494 = pneg %p337
        $region82: #{tpu_custom_call.1} parent=71 // pred_check_branch
          %2496 = sbr.rel (%p2494) target = $region84
        $region83: #{tpu_custom_call.1} parent=71 // pred_region
          %s2498 = ssub.s32 32, 32
          %2499 = vsyncadd %s2490, %s2498
          %s2500 = smul.addr %s31, 32
          %s2501 = scalar_lea.hbm %s13, %s2500
          %s2503 = sshll.u32 %s2493, 4
          %s2504 = int_to_ptr.vmem [resolvable:$true] %s2503
          %2506 = dma.vmem_to_hbm [thread:$0]  %s2504, 32, %s2501, %s2490
        $region84: #{tpu_custom_call.1} parent=71 // pred_fallthru
          _
      $region72: #{tpu_custom_call.1} parent=5 // pred_fallthru
        _
      %p2507 = scmp.le.s32.totalorder 2, %s22
      // Predicated region
      $region85: #{tpu_custom_call.1} parent=5 // pred_check
        %p2508 = pneg %p2507
      $region86: #{tpu_custom_call.1} parent=5 // pred_check_branch
        %2510 = sbr.rel (%p2508) target = $region88
      $region87: #{tpu_custom_call.1} parent=5 // pred_region
        %s2511 = ssub.s32 %s22, 2
        // Predicated region
        $region89: #{tpu_custom_call.1} parent=87 // pred_check
          %p2512 = pneg %p343
        $region90: #{tpu_custom_call.1} parent=87 // pred_check_branch
          %2514 = sbr.rel (%p2512) target = $region92
        $region91: #{tpu_custom_call.1} parent=87 // pred_region
          %s2515 = sand.u32 %s328, 1
          %s2516 = scalar_lea.sflag [#allocation4], %s2515
          %s2517 = sand.u32 %s328, 1
          %s2518 = smul.addr %s2517, 2
          %s2519 = scalar_lea.vmem [#allocation3], %s2518
          %2520 = dma.done %s2516, 32
        $region92: #{tpu_custom_call.1} parent=87 // pred_fallthru
          _
      $region88: #{tpu_custom_call.1} parent=5 // pred_fallthru
        _
    $region6: #{tpu_custom_call.1} parent=1 // loop_footer
      %s26 = sadd.s32 1, %s22
    $region7: #{tpu_custom_call.1} parent=1 // loop_footer_branch
      %21 = sbr.rel target = $region3
    $region8: #{tpu_custom_call.1} parent=1 // loop_exit
      _
    %2521 = vsyncpa [#allocation4], 1
    %s2522 = scalar_lea.sflag [#allocation4], 1
    %2523 = vsyncpa %s2522, 1

// kernel: tpu_custom_call.1
$region0: #{tpu_custom_call.1}
  #allocation0 [shape = 'u32[]', space=smem, size = 0x4, offset = 0x4, fixed_abs, tag = 'smem constant byte address 0x4 - core index']
  #allocation1 [shape = 'u32[144,128]{1,0:T(1,128)}', space=vmem, size = 0x12000, scoped, tag = 'internal scratch']
  #allocation2 [shape = 'f32[2,256]{1,0:T(2,128)}', space=vmem, size = 0x800, scoped, tag = 'scratch operand']
  %s0 = inlined_call_operand.vmem [shape: f32[2,2,128,8], index: 0, kind: input, shape index: {}]
  %s1 = inlined_call_operand.vmem [shape: bf16[8,64], index: 1, kind: input, shape index: {}]
  %s2 = inlined_call_operand.vmem [shape: f32[1,64], index: 2, kind: input, shape index: {}]
  %s3 = inlined_call_operand.vmem [shape: bf16[64,64], index: 3, kind: input, shape index: {}]
  %s4 = inlined_call_operand.vmem [shape: f32[1,64], index: 4, kind: input, shape index: {}]
  %s5 = inlined_call_operand.vmem [shape: bf16[64,64], index: 5, kind: input, shape index: {}]
  %s6 = inlined_call_operand.vmem [shape: f32[1,64], index: 6, kind: input, shape index: {}]
  %s7 = inlined_call_operand.vmem [shape: bf16[64,128], index: 7, kind: input, shape index: {}]
  %s8 = inlined_call_operand.vmem [shape: f32[1,128], index: 8, kind: input, shape index: {}]
  %s9 = inlined_call_operand.vmem [shape: bf16[128,256], index: 9, kind: input, shape index: {}]
  %s10 = inlined_call_operand.vmem [shape: f32[1,256], index: 10, kind: input, shape index: {}]
  %s11 = inlined_call_operand.vmem [shape: f32[256,128], index: 11, kind: input, shape index: {}]
  %s12 = inlined_call_operand.vmem [shape: f32[1,128], index: 12, kind: input, shape index: {}]
  %s13 = inlined_call_operand.hbm [shape: f32[2,2,128], index: 13, kind: output, shape index: {}]
  %s14 = sld [smem:[#allocation0]]
  $region93: #{tpu_custom_call.1} parent=0
    _
  %s16 = ssub.s32 1, %s14
  %s17 = scalar_select 0, %s16, %s14
  $region1: #{tpu_custom_call.1} parent=0
    #allocation3 [shape = 'u8[2048]{0}', space=vmem, size = 0x800, scoped, tag = 'output window, operand 0']
    #allocation4 [shape = 's32[2]{0}', space=sflag, size = 0x8, scoped, tag = 'scoped memory for tpu_custom_call.1']
    %18 = vsyncpa [#allocation4], 0
    %s19 = scalar_lea.sflag [#allocation4], 1
    %20 = vsyncpa %s19, 0
    loop: start=0, step=1, limit=4
    $region2: #{tpu_custom_call.1} parent=1 // loop_pre_header
      _
    $region3: #{tpu_custom_call.1} parent=1 // loop_header
      %s22 = sphi 0, %s26
      %p23 = scmp.ge.s32.totalorder %s22, 4
      %s29 = sphi 0, %s41
      %s30 = sphi 0, %s37
      %s31 = sphi 0, %s29
      %s32 = sphi 0, %s30
      %s33 = sphi 0, %s31
      %s34 = sphi 0, %s32
      %s46 = sphi 0, %s48
      %s49 = sphi 0, %s46
      %s50 = sphi 0, %s49
      %s66 = sphi 0, %s50
      %s70 = sphi 0, %s70
      %s72 = sphi 0, %s70
      %s73 = sphi 0, %s72
      %s87 = sphi 0, %s73
      %s91 = sphi 0, %s91
      %s93 = sphi 0, %s91
      %s94 = sphi 0, %s93
      %s108 = sphi 0, %s94
      %s112 = sphi 0, %s112
      %s114 = sphi 0, %s112
      %s115 = sphi 0, %s114
      %s129 = sphi 0, %s115
      %s133 = sphi 0, %s133
      %s135 = sphi 0, %s133
      %s136 = sphi 0, %s135
      %s150 = sphi 0, %s136
      %s154 = sphi 0, %s154
      %s156 = sphi 0, %s154
      %s157 = sphi 0, %s156
      %s171 = sphi 0, %s157
      %s175 = sphi 0, %s175
      %s177 = sphi 0, %s175
      %s178 = sphi 0, %s177
      %s192 = sphi 0, %s178
      %s196 = sphi 0, %s196
      %s198 = sphi 0, %s196
      %s199 = sphi 0, %s198
      %s213 = sphi 0, %s199
      %s217 = sphi 0, %s217
      %s219 = sphi 0, %s217
      %s220 = sphi 0, %s219
      %s234 = sphi 0, %s220
      %s238 = sphi 0, %s238
      %s240 = sphi 0, %s238
      %s241 = sphi 0, %s240
      %s255 = sphi 0, %s241
      %s259 = sphi 0, %s259
      %s261 = sphi 0, %s259
      %s262 = sphi 0, %s261
      %s276 = sphi 0, %s262
      %s280 = sphi 0, %s280
      %s282 = sphi 0, %s280
      %s283 = sphi 0, %s282
      %s297 = sphi 0, %s283
      %s301 = sphi 0, %s301
      %s303 = sphi 0, %s301
      %s304 = sphi 0, %s303
      %s318 = sphi 0, %s304
      %s324 = sphi 0, %s326
      %s327 = sphi 0, %s324
      %s328 = sphi 0, %s327
      %s344 = sphi 0, %s328
    $region4: #{tpu_custom_call.1} parent=1 // loop_header_branch
      %25 = sbr.rel (%p23) target = $region8
    $region5: #{tpu_custom_call.1} parent=1 // loop_body
      %s27 = ssub.s32 %s22, 1
      %s28 = ssub.s32 %s22, 2
      %s35 = sadd.s32 1, %s30
      %p36 = scmp.ge.s32.totalorder %s35, 1
      %s37 = scalar_select %p36, 0, %s35
      %s38 = sadd.s32 1, %s29
      %s39 = scalar_select %p36, %s38, %s29
      %p40 = scmp.ge.s32.totalorder %s39, 2
      %s41 = scalar_select %p40, 0, %s39
      %s42 = ssub.s32 %s29, %s41
      %s43 = ssub.s32 %s30, %s37
      %s44 = sor.u32 %s42, %s43
      %p45 = scmp.eq.s32.totalorder %s44, 0
      %s47 = sadd.s32 %s46, 1
      %s48 = scalar_select %p45, %s46, %s47
      %p51 = pneg %p45
      %p52 = scmp.eq.s32.totalorder %s22, 1
      %p53 = por %p51, %p52
      %p54 = scmp.ne.s32.totalorder %s46, %s49
      %p55 = scmp.eq.s32.totalorder %s22, 0
      %p56 = por %p54, %p55
      %p57 = scmp.ne.s32.totalorder %s46, %s49
      %p58 = scmp.eq.s32.totalorder %s27, 1
      %p59 = por %p57, %p58
      %p60 = scmp.ne.s32.totalorder %s49, %s50
      %p61 = scmp.eq.s32.totalorder %s27, 0
      %p62 = por %p60, %p61
      %p63 = scmp.ne.s32.totalorder %s49, %s50
      %p64 = scmp.eq.s32.totalorder %s28, 1
      %p65 = por %p63, %p64
      %p67 = scmp.ne.s32.totalorder %s50, %s66
      %p68 = scmp.eq.s32.totalorder %s28, 0
      %p69 = por %p67, %p68
      %s71 = sadd.s32 %s70, 1
      %p74 = scmp.eq.s32.totalorder %s22, 1
      %p75 = scmp.ne.s32.totalorder %s70, %s72
      %p76 = scmp.eq.s32.totalorder %s22, 0
      %p77 = por %p75, %p76
      %p78 = scmp.ne.s32.totalorder %s70, %s72
      %p79 = scmp.eq.s32.totalorder %s27, 1
      %p80 = por %p78, %p79
      %p81 = scmp.ne.s32.totalorder %s72, %s73
      %p82 = scmp.eq.s32.totalorder %s27, 0
      %p83 = por %p81, %p82
      %p84 = scmp.ne.s32.totalorder %s72, %s73
      %p85 = scmp.eq.s32.totalorder %s28, 1
      %p86 = por %p84, %p85
      %p88 = scmp.ne.s32.totalorder %s73, %s87
      %p89 = scmp.eq.s32.totalorder %s28, 0
      %p90 = por %p88, %p89
      %s92 = sadd.s32 %s91, 1
      %p95 = scmp.eq.s32.totalorder %s22, 1
      %p96 = scmp.ne.s32.totalorder %s91, %s93
      %p97 = scmp.eq.s32.totalorder %s22, 0
      %p98 = por %p96, %p97
      %p99 = scmp.ne.s32.totalorder %s91, %s93
      %p100 = scmp.eq.s32.totalorder %s27, 1
      %p101 = por %p99, %p100
      %p102 = scmp.ne.s32.totalorder %s93, %s94
      %p103 = scmp.eq.s32.totalorder %s27, 0
      %p104 = por %p102, %p103
      %p105 = scmp.ne.s32.totalorder %s93, %s94
      %p106 = scmp.eq.s32.totalorder %s28, 1
      %p107 = por %p105, %p106
      %p109 = scmp.ne.s32.totalorder %s94, %s108
      %p110 = scmp.eq.s32.totalorder %s28, 0
      %p111 = por %p109, %p110
      %s113 = sadd.s32 %s112, 1
      %p116 = scmp.eq.s32.totalorder %s22, 1
      %p117 = scmp.ne.s32.totalorder %s112, %s114
      %p118 = scmp.eq.s32.totalorder %s22, 0
      %p119 = por %p117, %p118
      %p120 = scmp.ne.s32.totalorder %s112, %s114
      %p121 = scmp.eq.s32.totalorder %s27, 1
      %p122 = por %p120, %p121
      %p123 = scmp.ne.s32.totalorder %s114, %s115
      %p124 = scmp.eq.s32.totalorder %s27, 0
      %p125 = por %p123, %p124
      %p126 = scmp.ne.s32.totalorder %s114, %s115
      %p127 = scmp.eq.s32.totalorder %s28, 1
      %p128 = por %p126, %p127
      %p130 = scmp.ne.s32.totalorder %s115, %s129
      %p131 = scmp.eq.s32.totalorder %s28, 0
      %p132 = por %p130, %p131
      %s134 = sadd.s32 %s133, 1
      %p137 = scmp.eq.s32.totalorder %s22, 1
      %p138 = scmp.ne.s32.totalorder %s133, %s135
      %p139 = scmp.eq.s32.totalorder %s22, 0
      %p140 = por %p138, %p139
      %p141 = scmp.ne.s32.totalorder %s133, %s135
      %p142 = scmp.eq.s32.totalorder %s27, 1
      %p143 = por %p141, %p142
      %p144 = scmp.ne.s32.totalorder %s135, %s136
      %p145 = scmp.eq.s32.totalorder %s27, 0
      %p146 = por %p144, %p145
      %p147 = scmp.ne.s32.totalorder %s135, %s136
      %p148 = scmp.eq.s32.totalorder %s28, 1
      %p149 = por %p147, %p148
      %p151 = scmp.ne.s32.totalorder %s136, %s150
      %p152 = scmp.eq.s32.totalorder %s28, 0
      %p153 = por %p151, %p152
      %s155 = sadd.s32 %s154, 1
      %p158 = scmp.eq.s32.totalorder %s22, 1
      %p159 = scmp.ne.s32.totalorder %s154, %s156
      %p160 = scmp.eq.s32.totalorder %s22, 0
      %p161 = por %p159, %p160
      %p162 = scmp.ne.s32.totalorder %s154, %s156
      %p163 = scmp.eq.s32.totalorder %s27, 1
      %p164 = por %p162, %p163
      %p165 = scmp.ne.s32.totalorder %s156, %s157
      %p166 = scmp.eq.s32.totalorder %s27, 0
      %p167 = por %p165, %p166
      %p168 = scmp.ne.s32.totalorder %s156, %s157
      %p169 = scmp.eq.s32.totalorder %s28, 1
      %p170 = por %p168, %p169
      %p172 = scmp.ne.s32.totalorder %s157, %s171
      %p173 = scmp.eq.s32.totalorder %s28, 0
      %p174 = por %p172, %p173
      %s176 = sadd.s32 %s175, 1
      %p179 = scmp.eq.s32.totalorder %s22, 1
      %p180 = scmp.ne.s32.totalorder %s175, %s177
      %p181 = scmp.eq.s32.totalorder %s22, 0
      %p182 = por %p180, %p181
      %p183 = scmp.ne.s32.totalorder %s175, %s177
      %p184 = scmp.eq.s32.totalorder %s27, 1
      %p185 = por %p183, %p184
      %p186 = scmp.ne.s32.totalorder %s177, %s178
      %p187 = scmp.eq.s32.totalorder %s27, 0
      %p188 = por %p186, %p187
      %p189 = scmp.ne.s32.totalorder %s177, %s178
      %p190 = scmp.eq.s32.totalorder %s28, 1
      %p191 = por %p189, %p190
      %p193 = scmp.ne.s32.totalorder %s178, %s192
      %p194 = scmp.eq.s32.totalorder %s28, 0
      %p195 = por %p193, %p194
      %s197 = sadd.s32 %s196, 1
      %p200 = scmp.eq.s32.totalorder %s22, 1
      %p201 = scmp.ne.s32.totalorder %s196, %s198
      %p202 = scmp.eq.s32.totalorder %s22, 0
      %p203 = por %p201, %p202
      %p204 = scmp.ne.s32.totalorder %s196, %s198
      %p205 = scmp.eq.s32.totalorder %s27, 1
      %p206 = por %p204, %p205
      %p207 = scmp.ne.s32.totalorder %s198, %s199
      %p208 = scmp.eq.s32.totalorder %s27, 0
      %p209 = por %p207, %p208
      %p210 = scmp.ne.s32.totalorder %s198, %s199
      %p211 = scmp.eq.s32.totalorder %s28, 1
      %p212 = por %p210, %p211
      %p214 = scmp.ne.s32.totalorder %s199, %s213
      %p215 = scmp.eq.s32.totalorder %s28, 0
      %p216 = por %p214, %p215
      %s218 = sadd.s32 %s217, 1
      %p221 = scmp.eq.s32.totalorder %s22, 1
      %p222 = scmp.ne.s32.totalorder %s217, %s219
      %p223 = scmp.eq.s32.totalorder %s22, 0
      %p224 = por %p222, %p223
      %p225 = scmp.ne.s32.totalorder %s217, %s219
      %p226 = scmp.eq.s32.totalorder %s27, 1
      %p227 = por %p225, %p226
      %p228 = scmp.ne.s32.totalorder %s219, %s220
      %p229 = scmp.eq.s32.totalorder %s27, 0
      %p230 = por %p228, %p229
      %p231 = scmp.ne.s32.totalorder %s219, %s220
      %p232 = scmp.eq.s32.totalorder %s28, 1
      %p233 = por %p231, %p232
      %p235 = scmp.ne.s32.totalorder %s220, %s234
      %p236 = scmp.eq.s32.totalorder %s28, 0
      %p237 = por %p235, %p236
      %s239 = sadd.s32 %s238, 1
      %p242 = scmp.eq.s32.totalorder %s22, 1
      %p243 = scmp.ne.s32.totalorder %s238, %s240
      %p244 = scmp.eq.s32.totalorder %s22, 0
      %p245 = por %p243, %p244
      %p246 = scmp.ne.s32.totalorder %s238, %s240
      %p247 = scmp.eq.s32.totalorder %s27, 1
      %p248 = por %p246, %p247
      %p249 = scmp.ne.s32.totalorder %s240, %s241
      %p250 = scmp.eq.s32.totalorder %s27, 0
      %p251 = por %p249, %p250
      %p252 = scmp.ne.s32.totalorder %s240, %s241
      %p253 = scmp.eq.s32.totalorder %s28, 1
      %p254 = por %p252, %p253
      %p256 = scmp.ne.s32.totalorder %s241, %s255
      %p257 = scmp.eq.s32.totalorder %s28, 0
      %p258 = por %p256, %p257
      %s260 = sadd.s32 %s259, 1
      %p263 = scmp.eq.s32.totalorder %s22, 1
      %p264 = scmp.ne.s32.totalorder %s259, %s261
      %p265 = scmp.eq.s32.totalorder %s22, 0
      %p266 = por %p264, %p265
      %p267 = scmp.ne.s32.totalorder %s259, %s261
      %p268 = scmp.eq.s32.totalorder %s27, 1
      %p269 = por %p267, %p268
      %p270 = scmp.ne.s32.totalorder %s261, %s262
      %p271 = scmp.eq.s32.totalorder %s27, 0
      %p272 = por %p270, %p271
      %p273 = scmp.ne.s32.totalorder %s261, %s262
      %p274 = scmp.eq.s32.totalorder %s28, 1
      %p275 = por %p273, %p274
      %p277 = scmp.ne.s32.totalorder %s262, %s276
      %p278 = scmp.eq.s32.totalorder %s28, 0
      %p279 = por %p277, %p278
      %s281 = sadd.s32 %s280, 1
      %p284 = scmp.eq.s32.totalorder %s22, 1
      %p285 = scmp.ne.s32.totalorder %s280, %s282
      %p286 = scmp.eq.s32.totalorder %s22, 0
      %p287 = por %p285, %p286
      %p288 = scmp.ne.s32.totalorder %s280, %s282
      %p289 = scmp.eq.s32.totalorder %s27, 1
      %p290 = por %p288, %p289
      %p291 = scmp.ne.s32.totalorder %s282, %s283
      %p292 = scmp.eq.s32.totalorder %s27, 0
      %p293 = por %p291, %p292
      %p294 = scmp.ne.s32.totalorder %s282, %s283
      %p295 = scmp.eq.s32.totalorder %s28, 1
      %p296 = por %p294, %p295
      %p298 = scmp.ne.s32.totalorder %s283, %s297
      %p299 = scmp.eq.s32.totalorder %s28, 0
      %p300 = por %p298, %p299
      %s302 = sadd.s32 %s301, 1
      %p305 = scmp.eq.s32.totalorder %s22, 1
      %p306 = scmp.ne.s32.totalorder %s301, %s303
      %p307 = scmp.eq.s32.totalorder %s22, 0
      %p308 = por %p306, %p307
      %p309 = scmp.ne.s32.totalorder %s301, %s303
      %p310 = scmp.eq.s32.totalorder %s27, 1
      %p311 = por %p309, %p310
      %p312 = scmp.ne.s32.totalorder %s303, %s304
      %p313 = scmp.eq.s32.totalorder %s27, 0
      %p314 = por %p312, %p313
      %p315 = scmp.ne.s32.totalorder %s303, %s304
      %p316 = scmp.eq.s32.totalorder %s28, 1
      %p317 = por %p315, %p316
      %p319 = scmp.ne.s32.totalorder %s304, %s318
      %p320 = scmp.eq.s32.totalorder %s28, 0
      %p321 = por %p319, %p320
      %s322 = ssub.s32 %s29, %s41
      %p323 = scmp.eq.s32.totalorder %s322, 0
      %s325 = sadd.s32 %s324, 1
      %s326 = scalar_select %p323, %s324, %s325
      %p329 = pneg %p323
      %p330 = scmp.eq.s32.totalorder %s22, 1
      %p331 = por %p329, %p330
      %p332 = scmp.ne.s32.totalorder %s324, %s327
      %p333 = scmp.eq.s32.totalorder %s22, 0
      %p334 = por %p332, %p333
      %p335 = scmp.ne.s32.totalorder %s324, %s327
      %p336 = scmp.eq.s32.totalorder %s27, 1
      %p337 = por %p335, %p336
      %p338 = scmp.ne.s32.totalorder %s327, %s328
      %p339 = scmp.eq.s32.totalorder %s27, 0
      %p340 = por %p338, %p339
      %p341 = scmp.ne.s32.totalorder %s327, %s328
      %p342 = scmp.eq.s32.totalorder %s28, 1
      %p343 = por %p341, %p342
      %p345 = scmp.ne.s32.totalorder %s328, %s344
      %p346 = scmp.eq.s32.totalorder %s28, 0
      %p347 = por %p345, %p346
      %p348 = scmp.le.s32.totalorder 1, %s22
      %p349 = scmp.lt.s32.totalorder %s22, 3
      %p350 = pnand %p348, %p349
      %p351 = pneg %p350
      // Predicated region
      $region9: #{tpu_custom_call.1} parent=5 // pred_check
        _
      $region10: #{tpu_custom_call.1} parent=5 // pred_check_branch
        %353 = sbr.rel (%p350) target = $region12
      $region11: #{tpu_custom_call.1} parent=5 // pred_region
        %s354 = ssub.s32 %s22, 1
        // Predicated region
        $region13: #{tpu_custom_call.1} parent=11 // pred_check
          %p355 = pneg %p83
        $region14: #{tpu_custom_call.1} parent=11 // pred_check_branch
          %357 = sbr.rel (%p355) target = $region16
        $region15: #{tpu_custom_call.1} parent=11 // pred_region
          _
        $region16: #{tpu_custom_call.1} parent=11 // pred_fallthru
          _
        // Predicated region
        $region17: #{tpu_custom_call.1} parent=11 // pred_check
          %p358 = pneg %p104
        $region18: #{tpu_custom_call.1} parent=11 // pred_check_branch
          %360 = sbr.rel (%p358) target = $region20
        $region19: #{tpu_custom_call.1} parent=11 // pred_region
          _
        $region20: #{tpu_custom_call.1} parent=11 // pred_fallthru
          _
        // Predicated region
        $region21: #{tpu_custom_call.1} parent=11 // pred_check
          %p361 = pneg %p125
        $region22: #{tpu_custom_call.1} parent=11 // pred_check_branch
          %363 = sbr.rel (%p361) target = $region24
        $region23: #{tpu_custom_call.1} parent=11 // pred_region
          _
        $region24: #{tpu_custom_call.1} parent=11 // pred_fallthru
          _
        // Predicated region
        $region25: #{tpu_custom_call.1} parent=11 // pred_check
          %p364 = pneg %p146
        $region26: #{tpu_custom_call.1} parent=11 // pred_check_branch
          %366 = sbr.rel (%p364) target = $region28
        $region27: #{tpu_custom_call.1} parent=11 // pred_region
          _
        $region28: #{tpu_custom_call.1} parent=11 // pred_fallthru
          _
        // Predicated region
        $region29: #{tpu_custom_call.1} parent=11 // pred_check
          %p367 = pneg %p167
        $region30: #{tpu_custom_call.1} parent=11 // pred_check_branch
          %369 = sbr.rel (%p367) target = $region32
        $region31: #{tpu_custom_call.1} parent=11 // pred_region
          _
        $region32: #{tpu_custom_call.1} parent=11 // pred_fallthru
          _
        // Predicated region
        $region33: #{tpu_custom_call.1} parent=11 // pred_check
          %p370 = pneg %p188
        $region34: #{tpu_custom_call.1} parent=11 // pred_check_branch
          %372 = sbr.rel (%p370) target = $region36
        $region35: #{tpu_custom_call.1} parent=11 // pred_region
          _
        $region36: #{tpu_custom_call.1} parent=11 // pred_fallthru
          _
        // Predicated region
        $region37: #{tpu_custom_call.1} parent=11 // pred_check
          %p373 = pneg %p209
        $region38: #{tpu_custom_call.1} parent=11 // pred_check_branch
          %375 = sbr.rel (%p373) target = $region40
        $region39: #{tpu_custom_call.1} parent=11 // pred_region
          _
        $region40: #{tpu_custom_call.1} parent=11 // pred_fallthru
          _
        // Predicated region
        $region41: #{tpu_custom_call.1} parent=11 // pred_check
          %p376 = pneg %p230
        $region42: #{tpu_custom_call.1} parent=11 // pred_check_branch
          %378 = sbr.rel (%p376) target = $region44
        $region43: #{tpu_custom_call.1} parent=11 // pred_region
          _
        $region44: #{tpu_custom_call.1} parent=11 // pred_fallthru
          _
        // Predicated region
        $region45: #{tpu_custom_call.1} parent=11 // pred_check
          %p379 = pneg %p251
        $region46: #{tpu_custom_call.1} parent=11 // pred_check_branch
          %381 = sbr.rel (%p379) target = $region48
        $region47: #{tpu_custom_call.1} parent=11 // pred_region
          _
        $region48: #{tpu_custom_call.1} parent=11 // pred_fallthru
          _
        // Predicated region
        $region49: #{tpu_custom_call.1} parent=11 // pred_check
          %p382 = pneg %p272
        $region50: #{tpu_custom_call.1} parent=11 // pred_check_branch
          %384 = sbr.rel (%p382) target = $region52
        $region51: #{tpu_custom_call.1} parent=11 // pred_region
          _
        $region52: #{tpu_custom_call.1} parent=11 // pred_fallthru
          _
        // Predicated region
        $region53: #{tpu_custom_call.1} parent=11 // pred_check
          %p385 = pneg %p293
        $region54: #{tpu_custom_call.1} parent=11 // pred_check_branch
          %387 = sbr.rel (%p385) target = $region56
        $region55: #{tpu_custom_call.1} parent=11 // pred_region
          _
        $region56: #{tpu_custom_call.1} parent=11 // pred_fallthru
          _
        // Predicated region
        $region57: #{tpu_custom_call.1} parent=11 // pred_check
          %p388 = pneg %p314
        $region58: #{tpu_custom_call.1} parent=11 // pred_check_branch
          %390 = sbr.rel (%p388) target = $region60
        $region59: #{tpu_custom_call.1} parent=11 // pred_region
          _
        $region60: #{tpu_custom_call.1} parent=11 // pred_fallthru
          _
      $region12: #{tpu_custom_call.1} parent=5 // pred_fallthru
        _
      %p391 = scmp.lt.s32.totalorder %s22, 2
      // Predicated region
      $region61: #{tpu_custom_call.1} parent=5 // pred_check
        %p392 = pneg %p391
      $region62: #{tpu_custom_call.1} parent=5 // pred_check_branch
        %394 = sbr.rel (%p392) target = $region64
      $region63: #{tpu_custom_call.1} parent=5 // pred_region
        // Predicated region
        $region65: #{tpu_custom_call.1} parent=63 // pred_check
          %p395 = pneg %p56
        $region66: #{tpu_custom_call.1} parent=63 // pred_check_branch
          %397 = sbr.rel (%p395) target = $region68
        $region67: #{tpu_custom_call.1} parent=63 // pred_region
          %s398 = smul.u32 16, %s30
          %p399 = scmp.lt.s32.totalorder %s29, 1
          %s400 = scalar_select %p399, %s29, 1
          %p401 = scmp.lt.s32.totalorder %s398, 15
          %s402 = scalar_select %p401, %s398, 15
          %s403 = smul.addr %s400, 32
          %s404 = sadd.s32 %s402, %s403
          %s405 = smul.addr %s404, 8
          %s406 = scalar_lea.vmem %s0, %s405
          %s407 = smul.u32 16, %s30
        $region68: #{tpu_custom_call.1} parent=63 // pred_fallthru
          _
      $region64: #{tpu_custom_call.1} parent=5 // pred_fallthru
        _
      %p408 = scmp.le.s32.totalorder 1, %s22
      %p409 = scmp.lt.s32.totalorder %s22, 3
      %p410 = pnand %p408, %p409
      %p411 = pneg %p410
      // Predicated region
      $region69: #{tpu_custom_call.1} parent=5 // pred_check
        _
      $region70: #{tpu_custom_call.1} parent=5 // pred_check_branch
        %413 = sbr.rel (%p410) target = $region72
      $region71: #{tpu_custom_call.1} parent=5 // pred_region
        %s414 = ssub.s32 %s22, 1
        %s415 = smul.u32 16, %s32
        %p416 = scmp.lt.s32.totalorder %s31, 1
        %s417 = scalar_select %p416, %s31, 1
        %p418 = scmp.lt.s32.totalorder %s415, 15
        %s419 = scalar_select %p418, %s415, 15
        %s420 = smul.addr %s417, 32
        %s421 = sadd.s32 %s419, %s420
        %s422 = smul.addr %s421, 8
        %s423 = scalar_lea.vmem %s0, %s422
        %p424 = pneg %p62
        %p425 = pneg %p59
        %p426 = pneg %p83
        %p427 = pneg %p80
        %p428 = pneg %p104
        %p429 = pneg %p101
        %p430 = pneg %p125
        %p431 = pneg %p122
        %p432 = pneg %p146
        %p433 = pneg %p143
        %p434 = pneg %p167
        %p435 = pneg %p164
        %p436 = pneg %p188
        %p437 = pneg %p185
        %p438 = pneg %p209
        %p439 = pneg %p206
        %p440 = pneg %p230
        %p441 = pneg %p227
        %p442 = pneg %p251
        %p443 = pneg %p248
        %p444 = pneg %p272
        %p445 = pneg %p269
        %p446 = pneg %p293
        %p447 = pneg %p290
        %p448 = pneg %p314
        %p449 = pneg %p311
        %p450 = pneg %p340
        %p451 = pneg %p337
        %s452 = sand.u32 %s327, 1
        %s453 = scalar_lea.sflag [#allocation4], %s452
        %s454 = sand.u32 %s327, 1
        %s455 = smul.addr %s454, 2
        %s456 = scalar_lea.vmem [#allocation3], %s455
        %s457 = smul.u32 16, %s32
        %p458 = scmp.lt.s32.totalorder %s31, 1
        %s459 = scalar_select %p458, %s31, 1
        %p460 = scmp.lt.s32.totalorder %s457, 15
        %s461 = scalar_select %p460, %s457, 15
        %s462 = smul.addr %s459, 32
        %s463 = sadd.s32 %s461, %s462
        %s464 = smul.addr %s463, 8
        %s465 = scalar_lea.vmem %s0, %s464
        %s466 = smul.u32 16, %s32
        %p468 = scmp.eq.s32.totalorder %s32, 0
        // Predicated region
        $region73: #{tpu_custom_call.1} parent=71 // pred_check
          %p469 = pneg %p468
        $region74: #{tpu_custom_call.1} parent=71 // pred_check_branch
          %471 = sbr.rel (%p469) target = $region76
        $region75: #{tpu_custom_call.1} parent=71 // pred_region
          %472 = vst [vmem:[#allocation2] sm:$0xf] 0.0
        $region76: #{tpu_custom_call.1} parent=71 // pred_fallthru
          _
        %v473 = vld [vmem:[%s465] sm:$0xff]
        %v474 = vld [vmem:[%s465 + $0x8] sm:$0xff]
        %v475 = vld [vmem:[%s465 + $0x10] sm:$0xff]
        %v476 = vld [vmem:[%s465 + $0x18] sm:$0xff]
        %v477 = vld [vmem:[%s465 + $0x20] sm:$0xff]
        %v478 = vld [vmem:[%s465 + $0x28] sm:$0xff]
        %v479 = vld [vmem:[%s465 + $0x30] sm:$0xff]
        %v480 = vld [vmem:[%s465 + $0x38] sm:$0xff]
        %v481 = vld [vmem:[%s465 + $0x40] sm:$0xff]
        %v482 = vld [vmem:[%s465 + $0x48] sm:$0xff]
        %v483 = vld [vmem:[%s465 + $0x50] sm:$0xff]
        %v484 = vld [vmem:[%s465 + $0x58] sm:$0xff]
        %v485 = vld [vmem:[%s465 + $0x60] sm:$0xff]
        %v486 = vld [vmem:[%s465 + $0x68] sm:$0xff]
        %v487 = vld [vmem:[%s465 + $0x70] sm:$0xff]
        %v488 = vld [vmem:[%s465 + $0x78] sm:$0xff]
        %v489 = vld [vmem:[%s465 + $0x80] sm:$0xff]
        %v490 = vld [vmem:[%s465 + $0x88] sm:$0xff]
        %v491 = vld [vmem:[%s465 + $0x90] sm:$0xff]
        %v492 = vld [vmem:[%s465 + $0x98] sm:$0xff]
        %v493 = vld [vmem:[%s465 + $0xa0] sm:$0xff]
        %v494 = vld [vmem:[%s465 + $0xa8] sm:$0xff]
        %v495 = vld [vmem:[%s465 + $0xb0] sm:$0xff]
        %v496 = vld [vmem:[%s465 + $0xb8] sm:$0xff]
        %v497 = vld [vmem:[%s465 + $0xc0] sm:$0xff]
        %v498 = vld [vmem:[%s465 + $0xc8] sm:$0xff]
        %v499 = vld [vmem:[%s465 + $0xd0] sm:$0xff]
        %v500 = vld [vmem:[%s465 + $0xd8] sm:$0xff]
        %v501 = vld [vmem:[%s465 + $0xe0] sm:$0xff]
        %v502 = vld [vmem:[%s465 + $0xe8] sm:$0xff]
        %v503 = vld [vmem:[%s465 + $0xf0] sm:$0xff]
        %v504 = vld [vmem:[%s465 + $0xf8] sm:$0xff]
        %v505 = vpack.c.bf16 %v474, %v473
        %v506 = vpack.c.bf16 %v476, %v475
        %v507 = vpack.c.bf16 %v478, %v477
        %v508 = vpack.c.bf16 %v480, %v479
        %v509 = vpack.c.bf16 %v482, %v481
        %v510 = vpack.c.bf16 %v484, %v483
        %v511 = vpack.c.bf16 %v486, %v485
        %v512 = vpack.c.bf16 %v488, %v487
        %v513 = vpack.c.bf16 %v490, %v489
        %v514 = vpack.c.bf16 %v492, %v491
        %v515 = vpack.c.bf16 %v494, %v493
        %v516 = vpack.c.bf16 %v496, %v495
        %v517 = vpack.c.bf16 %v498, %v497
        %v518 = vpack.c.bf16 %v500, %v499
        %v519 = vpack.c.bf16 %v502, %v501
        %v520 = vpack.c.bf16 %v504, %v503
        %v521 = vld [vmem:[%s1] sm:$0xf]
        %v522 = vld [vmem:[%s2] sm:$0x1]
        %v524 = vlaneseq
        %v525 = vshrl.u32 %v524, 7
        %v526 = vsub.s32 0, %v525
        %v527 = vrot.slane %v522, %v526
        %vm529 = vcmask 64512
        %v531 = vsel %vm529, %v505, 0
        %v534 = vsel %vm529, %v506, 0
        %v537 = vsel %vm529, %v507, 0
        %v540 = vsel %vm529, %v508, 0
        %v543 = vsel %vm529, %v509, 0
        %v546 = vsel %vm529, %v510, 0
        %v549 = vsel %vm529, %v511, 0
        %v552 = vsel %vm529, %v512, 0
        %v555 = vsel %vm529, %v513, 0
        %v558 = vsel %vm529, %v514, 0
        %v561 = vsel %vm529, %v515, 0
        %v564 = vsel %vm529, %v516, 0
        %v567 = vsel %vm529, %v517, 0
        %v570 = vsel %vm529, %v518, 0
        %v573 = vsel %vm529, %v519, 0
        %v576 = vsel %vm529, %v520, 0
        %vm578 = vcmask 1043456
        %v580 = vsel %vm578, %v521, 0
        %582 = vmatprep.subr.bf16.mxu0 0
        %583 = vmatpush1.bf16.msra.mxu0 %v580
        %584 = vmatprep.subr.bf16.mxu0 0
        %585 = vmatpush1.bf16.msra.mxu0 0
        %586 = vmatprep.subr.bf16.mxu0 0
        %587 = vmatpush1.bf16.msra.mxu0 0
        %588 = vmatprep.subr.bf16.mxu0 0
        %589 = vmatpush1.bf16.msra.mxu0 0
        %590 = vmatprep.subr.bf16.mxu0 0
        %591 = vmatpush1.bf16.msra.mxu0 0
        %592 = vmatprep.subr.bf16.mxu0 0
        %593 = vmatpush1.bf16.msra.mxu0 0
        %594 = vmatprep.subr.bf16.mxu0 0
        %595 = vmatpush1.bf16.msra.mxu0 0
        %596 = vmatprep.subr.bf16.mxu0 0
        %597 = vmatpush1.bf16.msra.mxu0 0
        %598 = vmatprep.subr.bf16.mxu0 0
        %599 = vmatpush1.bf16.msra.mxu0 0
        %600 = vmatprep.subr.bf16.mxu0 0
        %601 = vmatpush1.bf16.msra.mxu0 0
        %602 = vmatprep.subr.bf16.mxu0 0
        %603 = vmatpush1.bf16.msra.mxu0 0
        %604 = vmatprep.subr.bf16.mxu0 0
        %605 = vmatpush1.bf16.msra.mxu0 0
        %606 = vmatprep.subr.bf16.mxu0 0
        %607 = vmatpush1.bf16.msra.mxu0 0
        %608 = vmatprep.subr.bf16.mxu0 0
        %609 = vmatpush1.bf16.msra.mxu0 0
        %610 = vmatprep.subr.bf16.mxu0 0
        %611 = vmatpush1.bf16.msra.mxu0 0
        %612 = vmatprep.subr.bf16.mxu0 0
        %613 = vmatpush1.bf16.msra.mxu0 0
        %614 = vmatprep.mubr.bf16.mxu0 0
        %615 = vmatmul.mubr.bf16.gmra.mrb[0].mxu0 %v531
        %v616 = vpop.f32.mrb[0].mxu0
        %v617 = vadd.f32 %v527, %v616
        %v618 = vpop.f32.mrb[0].mxu0
        %v619 = vpop.f32.mrb[0].mxu0
        %v620 = vadd.f32 %v527, %v619
        %v621 = vpop.f32.mrb[0].mxu0
        %622 = vmatprep.mubr.bf16.mxu0 0
        %623 = vmatmul.mubr.bf16.gmra.mrb[0].mxu0 %v534
        %v624 = vpop.f32.mrb[0].mxu0
        %v625 = vadd.f32 %v527, %v624
        %v626 = vpop.f32.mrb[0].mxu0
        %v627 = vpop.f32.mrb[0].mxu0
        %v628 = vadd.f32 %v527, %v627
        %v629 = vpop.f32.mrb[0].mxu0
        %630 = vmatprep.mubr.bf16.mxu0 0
        %631 = vmatmul.mubr.bf16.gmra.mrb[0].mxu0 %v537
        %v632 = vpop.f32.mrb[0].mxu0
        %v633 = vadd.f32 %v527, %v632
        %v634 = vpop.f32.mrb[0].mxu0
        %v635 = vpop.f32.mrb[0].mxu0
        %v636 = vadd.f32 %v527, %v635
        %v637 = vpop.f32.mrb[0].mxu0
        %638 = vmatprep.mubr.bf16.mxu0 0
        %639 = vmatmul.mubr.bf16.gmra.mrb[0].mxu0 %v540
        %v640 = vpop.f32.mrb[0].mxu0
        %v641 = vadd.f32 %v527, %v640
        %v642 = vpop.f32.mrb[0].mxu0
        %v643 = vpop.f32.mrb[0].mxu0
        %v644 = vadd.f32 %v527, %v643
        %v645 = vpop.f32.mrb[0].mxu0
        %646 = vmatprep.mubr.bf16.mxu0 0
        %647 = vmatmul.mubr.bf16.gmra.mrb[0].mxu0 %v543
        %v648 = vpop.f32.mrb[0].mxu0
        %v649 = vadd.f32 %v527, %v648
        %v650 = vpop.f32.mrb[0].mxu0
        %v651 = vpop.f32.mrb[0].mxu0
        %v652 = vadd.f32 %v527, %v651
        %v653 = vpop.f32.mrb[0].mxu0
        %654 = vmatprep.mubr.bf16.mxu0 0
        %655 = vmatmul.mubr.bf16.gmra.mrb[0].mxu0 %v546
        %v656 = vpop.f32.mrb[0].mxu0
        %v657 = vadd.f32 %v527, %v656
        %v658 = vpop.f32.mrb[0].mxu0
        %v659 = vpop.f32.mrb[0].mxu0
        %v660 = vadd.f32 %v527, %v659
        %v661 = vpop.f32.mrb[0].mxu0
        %662 = vmatprep.mubr.bf16.mxu0 0
        %663 = vmatmul.mubr.bf16.gmra.mrb[0].mxu0 %v549
        %v664 = vpop.f32.mrb[0].mxu0
        %v665 = vadd.f32 %v527, %v664
        %v666 = vpop.f32.mrb[0].mxu0
        %v667 = vpop.f32.mrb[0].mxu0
        %v668 = vadd.f32 %v527, %v667
        %v669 = vpop.f32.mrb[0].mxu0
        %670 = vmatprep.mubr.bf16.mxu0 0
        %671 = vmatmul.mubr.bf16.gmra.mrb[0].mxu0 %v552
        %v672 = vpop.f32.mrb[0].mxu0
        %v673 = vadd.f32 %v527, %v672
        %v674 = vpop.f32.mrb[0].mxu0
        %v675 = vpop.f32.mrb[0].mxu0
        %v676 = vadd.f32 %v527, %v675
        %v677 = vpop.f32.mrb[0].mxu0
        %678 = vmatprep.mubr.bf16.mxu0 0
        %679 = vmatmul.mubr.bf16.gmra.mrb[0].mxu0 %v555
        %v680 = vpop.f32.mrb[0].mxu0
        %v681 = vadd.f32 %v527, %v680
        %v682 = vpop.f32.mrb[0].mxu0
        %v683 = vpop.f32.mrb[0].mxu0
        %v684 = vadd.f32 %v527, %v683
        %v685 = vpop.f32.mrb[0].mxu0
        %686 = vmatprep.mubr.bf16.mxu0 0
        %687 = vmatmul.mubr.bf16.gmra.mrb[0].mxu0 %v558
        %v688 = vpop.f32.mrb[0].mxu0
        %v689 = vadd.f32 %v527, %v688
        %v690 = vpop.f32.mrb[0].mxu0
        %v691 = vpop.f32.mrb[0].mxu0
        %v692 = vadd.f32 %v527, %v691
        %v693 = vpop.f32.mrb[0].mxu0
        %694 = vmatprep.mubr.bf16.mxu0 0
        %695 = vmatmul.mubr.bf16.gmra.mrb[0].mxu0 %v561
        %v696 = vpop.f32.mrb[0].mxu0
        %v697 = vadd.f32 %v527, %v696
        %v698 = vpop.f32.mrb[0].mxu0
        %v699 = vpop.f32.mrb[0].mxu0
        %v700 = vadd.f32 %v527, %v699
        %v701 = vpop.f32.mrb[0].mxu0
        %702 = vmatprep.mubr.bf16.mxu0 0
        %703 = vmatmul.mubr.bf16.gmra.mrb[0].mxu0 %v564
        %v704 = vpop.f32.mrb[0].mxu0
        %v705 = vadd.f32 %v527, %v704
        %v706 = vpop.f32.mrb[0].mxu0
        %v707 = vpop.f32.mrb[0].mxu0
        %v708 = vadd.f32 %v527, %v707
        %v709 = vpop.f32.mrb[0].mxu0
        %710 = vmatprep.mubr.bf16.mxu0 0
        %711 = vmatmul.mubr.bf16.gmra.mrb[0].mxu0 %v567
        %v712 = vpop.f32.mrb[0].mxu0
        %v713 = vadd.f32 %v527, %v712
        %v714 = vpop.f32.mrb[0].mxu0
        %v715 = vpop.f32.mrb[0].mxu0
        %v716 = vadd.f32 %v527, %v715
        %v717 = vpop.f32.mrb[0].mxu0
        %718 = vmatprep.mubr.bf16.mxu0 0
        %719 = vmatmul.mubr.bf16.gmra.mrb[0].mxu0 %v570
        %v720 = vpop.f32.mrb[0].mxu0
        %v721 = vadd.f32 %v527, %v720
        %v722 = vpop.f32.mrb[0].mxu0
        %v723 = vpop.f32.mrb[0].mxu0
        %v724 = vadd.f32 %v527, %v723
        %v725 = vpop.f32.mrb[0].mxu0
        %726 = vmatprep.mubr.bf16.mxu0 0
        %727 = vmatmul.mubr.bf16.gmra.mrb[0].mxu0 %v573
        %v728 = vpop.f32.mrb[0].mxu0
        %v729 = vadd.f32 %v527, %v728
        %v730 = vpop.f32.mrb[0].mxu0
        %v731 = vpop.f32.mrb[0].mxu0
        %v732 = vadd.f32 %v527, %v731
        %v733 = vpop.f32.mrb[0].mxu0
        %734 = vmatprep.mubr.bf16.mxu0 0
        %735 = vmatmul.mubr.bf16.gmra.mrb[0].mxu0 %v576
        %v736 = vpop.f32.mrb[0].mxu0
        %v737 = vadd.f32 %v527, %v736
        %v738 = vpop.f32.mrb[0].mxu0
        %v739 = vpop.f32.mrb[0].mxu0
        %v740 = vadd.f32 %v527, %v739
        %v741 = vpop.f32.mrb[0].mxu0
        %742 = vdwg.mxu0
        %v743 = vmax.f32 %v617, 0.0
        %v744 = vmax.f32 %v620, 0.0
        %v745 = vmax.f32 %v625, 0.0
        %v746 = vmax.f32 %v628, 0.0
        %v747 = vmax.f32 %v633, 0.0
        %v748 = vmax.f32 %v636, 0.0
        %v749 = vmax.f32 %v641, 0.0
        %v750 = vmax.f32 %v644, 0.0
        %v751 = vmax.f32 %v649, 0.0
        %v752 = vmax.f32 %v652, 0.0
        %v753 = vmax.f32 %v657, 0.0
        %v754 = vmax.f32 %v660, 0.0
        %v755 = vmax.f32 %v665, 0.0
        %v756 = vmax.f32 %v668, 0.0
        %v757 = vmax.f32 %v673, 0.0
        %v758 = vmax.f32 %v676, 0.0
        %v759 = vmax.f32 %v681, 0.0
        %v760 = vmax.f32 %v684, 0.0
        %v761 = vmax.f32 %v689, 0.0
        %v762 = vmax.f32 %v692, 0.0
        %v763 = vmax.f32 %v697, 0.0
        %v764 = vmax.f32 %v700, 0.0
        %v765 = vmax.f32 %v705, 0.0
        %v766 = vmax.f32 %v708, 0.0
        %v767 = vmax.f32 %v713, 0.0
        %v768 = vmax.f32 %v716, 0.0
        %v769 = vmax.f32 %v721, 0.0
        %v770 = vmax.f32 %v724, 0.0
        %v771 = vmax.f32 %v729, 0.0
        %v772 = vmax.f32 %v732, 0.0
        %v773 = vmax.f32 %v737, 0.0
        %v774 = vmax.f32 %v740, 0.0
        %v775 = vpack.c.bf16 %v744, %v743
        %v776 = vpack.c.bf16 %v746, %v745
        %v777 = vpack.c.bf16 %v748, %v747
        %v778 = vpack.c.bf16 %v750, %v749
        %v779 = vpack.c.bf16 %v752, %v751
        %v780 = vpack.c.bf16 %v754, %v753
        %v781 = vpack.c.bf16 %v756, %v755
        %v782 = vpack.c.bf16 %v758, %v757
        %v783 = vpack.c.bf16 %v760, %v759
        %v784 = vpack.c.bf16 %v762, %v761
        %v785 = vpack.c.bf16 %v764, %v763
        %v786 = vpack.c.bf16 %v766, %v765
        %v787 = vpack.c.bf16 %v768, %v767
        %v788 = vpack.c.bf16 %v770, %v769
        %v789 = vpack.c.bf16 %v772, %v771
        %v790 = vpack.c.bf16 %v774, %v773
        %v791 = vld [vmem:[%s3] sm:$0xf]
        %v792 = vld [vmem:[%s3 + $0x4] sm:$0xf]
        %v793 = vld [vmem:[%s3 + $0x8] sm:$0xf]
        %v794 = vld [vmem:[%s3 + $0xc] sm:$0xf]
        %v795 = vld [vmem:[%s3 + $0x10] sm:$0xf]
        %v796 = vld [vmem:[%s3 + $0x14] sm:$0xf]
        %v797 = vld [vmem:[%s3 + $0x18] sm:$0xf]
        %v798 = vld [vmem:[%s3 + $0x1c] sm:$0xf]
        %v799 = vld [vmem:[%s4] sm:$0x1]
        %v801 = vlaneseq
        %v802 = vshrl.u32 %v801, 7
        %v803 = vsub.s32 0, %v802
        %v804 = vrot.slane %v799, %v803
        %v814 = vunpack.c.l.b16 %v791
        %v815 = vunpack.c.l.b16 %v792
        %v816 = vunpack.c.l.b16 %v793
        %v817 = vunpack.c.l.b16 %v794
        %v818 = vunpack.c.l.b16 %v795
        %v819 = vunpack.c.l.b16 %v796
        %v820 = vunpack.c.l.b16 %v797
        %v821 = vunpack.c.l.b16 %v798
        %v822 = vpack.c.b16 %v815, %v814
        %v823 = vpack.c.b16 %v817, %v816
        %v824 = vpack.c.b16 %v819, %v818
        %v825 = vpack.c.b16 %v821, %v820
        %vm830 = vcmask 523264
        %v832 = vsel %vm830, %v775, 0
        %v835 = vsel %vm830, %v776, 0
        %v838 = vsel %vm830, %v777, 0
        %v841 = vsel %vm830, %v778, 0
        %v844 = vsel %vm830, %v779, 0
        %v847 = vsel %vm830, %v780, 0
        %v850 = vsel %vm830, %v781, 0
        %v853 = vsel %vm830, %v782, 0
        %v856 = vsel %vm830, %v783, 0
        %v859 = vsel %vm830, %v784, 0
        %v862 = vsel %vm830, %v785, 0
        %v865 = vsel %vm830, %v786, 0
        %v868 = vsel %vm830, %v787, 0
        %v871 = vsel %vm830, %v788, 0
        %v874 = vsel %vm830, %v789, 0
        %v877 = vsel %vm830, %v790, 0
        %879 = vmatprep.subr.bf16.mxu0 0
        %880 = vmatpush1.bf16.msra.mxu0 %v822
        %881 = vmatprep.subr.bf16.mxu0 0
        %882 = vmatpush1.bf16.msra.mxu0 %v823
        %883 = vmatprep.subr.bf16.mxu0 0
        %884 = vmatpush1.bf16.msra.mxu0 %v824
        %885 = vmatprep.subr.bf16.mxu0 0
        %886 = vmatpush1.bf16.msra.mxu0 %v825
        %887 = vmatprep.subr.bf16.mxu0 0
        %888 = vmatpush1.bf16.msra.mxu0 0
        %889 = vmatprep.subr.bf16.mxu0 0
        %890 = vmatpush1.bf16.msra.mxu0 0
        %891 = vmatprep.subr.bf16.mxu0 0
        %892 = vmatpush1.bf16.msra.mxu0 0
        %893 = vmatprep.subr.bf16.mxu0 0
        %894 = vmatpush1.bf16.msra.mxu0 0
        %895 = vmatprep.subr.bf16.mxu0 0
        %896 = vmatpush1.bf16.msra.mxu0 0
        %897 = vmatprep.subr.bf16.mxu0 0
        %898 = vmatpush1.bf16.msra.mxu0 0
        %899 = vmatprep.subr.bf16.mxu0 0
        %900 = vmatpush1.bf16.msra.mxu0 0
        %901 = vmatprep.subr.bf16.mxu0 0
        %902 = vmatpush1.bf16.msra.mxu0 0
        %903 = vmatprep.subr.bf16.mxu0 0
        %904 = vmatpush1.bf16.msra.mxu0 0
        %905 = vmatprep.subr.bf16.mxu0 0
        %906 = vmatpush1.bf16.msra.mxu0 0
        %907 = vmatprep.subr.bf16.mxu0 0
        %908 = vmatpush1.bf16.msra.mxu0 0
        %909 = vmatprep.subr.bf16.mxu0 0
        %910 = vmatpush1.bf16.msra.mxu0 0
        %911 = vmatprep.mubr.bf16.mxu0 0
        %912 = vmatmul.mubr.bf16.gmra.mrb[0].mxu0 %v832
        %v913 = vpop.f32.mrb[0].mxu0
        %v914 = vadd.f32 %v804, %v913
        %v915 = vpop.f32.mrb[0].mxu0
        %v916 = vpop.f32.mrb[0].mxu0
        %v917 = vadd.f32 %v804, %v916
        %v918 = vpop.f32.mrb[0].mxu0
        %919 = vmatprep.mubr.bf16.mxu0 0
        %920 = vmatmul.mubr.bf16.gmra.mrb[0].mxu0 %v835
        %v921 = vpop.f32.mrb[0].mxu0
        %v922 = vadd.f32 %v804, %v921
        %v923 = vpop.f32.mrb[0].mxu0
        %v924 = vpop.f32.mrb[0].mxu0
        %v925 = vadd.f32 %v804, %v924
        %v926 = vpop.f32.mrb[0].mxu0
        %927 = vmatprep.mubr.bf16.mxu0 0
        %928 = vmatmul.mubr.bf16.gmra.mrb[0].mxu0 %v838
        %v929 = vpop.f32.mrb[0].mxu0
        %v930 = vadd.f32 %v804, %v929
        %v931 = vpop.f32.mrb[0].mxu0
        %v932 = vpop.f32.mrb[0].mxu0
        %v933 = vadd.f32 %v804, %v932
        %v934 = vpop.f32.mrb[0].mxu0
        %935 = vmatprep.mubr.bf16.mxu0 0
        %936 = vmatmul.mubr.bf16.gmra.mrb[0].mxu0 %v841
        %v937 = vpop.f32.mrb[0].mxu0
        %v938 = vadd.f32 %v804, %v937
        %v939 = vpop.f32.mrb[0].mxu0
        %v940 = vpop.f32.mrb[0].mxu0
        %v941 = vadd.f32 %v804, %v940
        %v942 = vpop.f32.mrb[0].mxu0
        %943 = vmatprep.mubr.bf16.mxu0 0
        %944 = vmatmul.mubr.bf16.gmra.mrb[0].mxu0 %v844
        %v945 = vpop.f32.mrb[0].mxu0
        %v946 = vadd.f32 %v804, %v945
        %v947 = vpop.f32.mrb[0].mxu0
        %v948 = vpop.f32.mrb[0].mxu0
        %v949 = vadd.f32 %v804, %v948
        %v950 = vpop.f32.mrb[0].mxu0
        %951 = vmatprep.mubr.bf16.mxu0 0
        %952 = vmatmul.mubr.bf16.gmra.mrb[0].mxu0 %v847
        %v953 = vpop.f32.mrb[0].mxu0
        %v954 = vadd.f32 %v804, %v953
        %v955 = vpop.f32.mrb[0].mxu0
        %v956 = vpop.f32.mrb[0].mxu0
        %v957 = vadd.f32 %v804, %v956
        %v958 = vpop.f32.mrb[0].mxu0
        %959 = vmatprep.mubr.bf16.mxu0 0
        %960 = vmatmul.mubr.bf16.gmra.mrb[0].mxu0 %v850
        %v961 = vpop.f32.mrb[0].mxu0
        %v962 = vadd.f32 %v804, %v961
        %v963 = vpop.f32.mrb[0].mxu0
        %v964 = vpop.f32.mrb[0].mxu0
        %v965 = vadd.f32 %v804, %v964
        %v966 = vpop.f32.mrb[0].mxu0
        %967 = vmatprep.mubr.bf16.mxu0 0
        %968 = vmatmul.mubr.bf16.gmra.mrb[0].mxu0 %v853
        %v969 = vpop.f32.mrb[0].mxu0
        %v970 = vadd.f32 %v804, %v969
        %v971 = vpop.f32.mrb[0].mxu0
        %v972 = vpop.f32.mrb[0].mxu0
        %v973 = vadd.f32 %v804, %v972
        %v974 = vpop.f32.mrb[0].mxu0
        %975 = vmatprep.mubr.bf16.mxu0 0
        %976 = vmatmul.mubr.bf16.gmra.mrb[0].mxu0 %v856
        %v977 = vpop.f32.mrb[0].mxu0
        %v978 = vadd.f32 %v804, %v977
        %v979 = vpop.f32.mrb[0].mxu0
        %v980 = vpop.f32.mrb[0].mxu0
        %v981 = vadd.f32 %v804, %v980
        %v982 = vpop.f32.mrb[0].mxu0
        %983 = vmatprep.mubr.bf16.mxu0 0
        %984 = vmatmul.mubr.bf16.gmra.mrb[0].mxu0 %v859
        %v985 = vpop.f32.mrb[0].mxu0
        %v986 = vadd.f32 %v804, %v985
        %v987 = vpop.f32.mrb[0].mxu0
        %v988 = vpop.f32.mrb[0].mxu0
        %v989 = vadd.f32 %v804, %v988
        %v990 = vpop.f32.mrb[0].mxu0
        %991 = vmatprep.mubr.bf16.mxu0 0
        %992 = vmatmul.mubr.bf16.gmra.mrb[0].mxu0 %v862
        %v993 = vpop.f32.mrb[0].mxu0
        %v994 = vadd.f32 %v804, %v993
        %v995 = vpop.f32.mrb[0].mxu0
        %v996 = vpop.f32.mrb[0].mxu0
        %v997 = vadd.f32 %v804, %v996
        %v998 = vpop.f32.mrb[0].mxu0
        %999 = vmatprep.mubr.bf16.mxu0 0
        %1000 = vmatmul.mubr.bf16.gmra.mrb[0].mxu0 %v865
        %v1001 = vpop.f32.mrb[0].mxu0
        %v1002 = vadd.f32 %v804, %v1001
        %v1003 = vpop.f32.mrb[0].mxu0
        %v1004 = vpop.f32.mrb[0].mxu0
        %v1005 = vadd.f32 %v804, %v1004
        %v1006 = vpop.f32.mrb[0].mxu0
        %1007 = vmatprep.mubr.bf16.mxu0 0
        %1008 = vmatmul.mubr.bf16.gmra.mrb[0].mxu0 %v868
        %v1009 = vpop.f32.mrb[0].mxu0
        %v1010 = vadd.f32 %v804, %v1009
        %v1011 = vpop.f32.mrb[0].mxu0
        %v1012 = vpop.f32.mrb[0].mxu0
        %v1013 = vadd.f32 %v804, %v1012
        %v1014 = vpop.f32.mrb[0].mxu0
        %1015 = vmatprep.mubr.bf16.mxu0 0
        %1016 = vmatmul.mubr.bf16.gmra.mrb[0].mxu0 %v871
        %v1017 = vpop.f32.mrb[0].mxu0
        %v1018 = vadd.f32 %v804, %v1017
        %v1019 = vpop.f32.mrb[0].mxu0
        %v1020 = vpop.f32.mrb[0].mxu0
        %v1021 = vadd.f32 %v804, %v1020
        %v1022 = vpop.f32.mrb[0].mxu0
        %1023 = vmatprep.mubr.bf16.mxu0 0
        %1024 = vmatmul.mubr.bf16.gmra.mrb[0].mxu0 %v874
        %v1025 = vpop.f32.mrb[0].mxu0
        %v1026 = vadd.f32 %v804, %v1025
        %v1027 = vpop.f32.mrb[0].mxu0
        %v1028 = vpop.f32.mrb[0].mxu0
        %v1029 = vadd.f32 %v804, %v1028
        %v1030 = vpop.f32.mrb[0].mxu0
        %1031 = vmatprep.mubr.bf16.mxu0 0
        %1032 = vmatmul.mubr.bf16.gmra.mrb[0].mxu0 %v877
        %v1033 = vpop.f32.mrb[0].mxu0
        %v1034 = vadd.f32 %v804, %v1033
        %v1035 = vpop.f32.mrb[0].mxu0
        %v1036 = vpop.f32.mrb[0].mxu0
        %v1037 = vadd.f32 %v804, %v1036
        %v1038 = vpop.f32.mrb[0].mxu0
        %1039 = vdwg.mxu0
        %v1040 = vmax.f32 %v914, 0.0
        %v1041 = vmax.f32 %v917, 0.0
        %v1042 = vmax.f32 %v922, 0.0
        %v1043 = vmax.f32 %v925, 0.0
        %v1044 = vmax.f32 %v930, 0.0
        %v1045 = vmax.f32 %v933, 0.0
        %v1046 = vmax.f32 %v938, 0.0
        %v1047 = vmax.f32 %v941, 0.0
        %v1048 = vmax.f32 %v946, 0.0
        %v1049 = vmax.f32 %v949, 0.0
        %v1050 = vmax.f32 %v954, 0.0
        %v1051 = vmax.f32 %v957, 0.0
        %v1052 = vmax.f32 %v962, 0.0
        %v1053 = vmax.f32 %v965, 0.0
        %v1054 = vmax.f32 %v970, 0.0
        %v1055 = vmax.f32 %v973, 0.0
        %v1056 = vmax.f32 %v978, 0.0
        %v1057 = vmax.f32 %v981, 0.0
        %v1058 = vmax.f32 %v986, 0.0
        %v1059 = vmax.f32 %v989, 0.0
        %v1060 = vmax.f32 %v994, 0.0
        %v1061 = vmax.f32 %v997, 0.0
        %v1062 = vmax.f32 %v1002, 0.0
        %v1063 = vmax.f32 %v1005, 0.0
        %v1064 = vmax.f32 %v1010, 0.0
        %v1065 = vmax.f32 %v1013, 0.0
        %v1066 = vmax.f32 %v1018, 0.0
        %v1067 = vmax.f32 %v1021, 0.0
        %v1068 = vmax.f32 %v1026, 0.0
        %v1069 = vmax.f32 %v1029, 0.0
        %v1070 = vmax.f32 %v1034, 0.0
        %v1071 = vmax.f32 %v1037, 0.0
        %v1072 = vpack.c.bf16 %v1041, %v1040
        %v1073 = vpack.c.bf16 %v1043, %v1042
        %v1074 = vpack.c.bf16 %v1045, %v1044
        %v1075 = vpack.c.bf16 %v1047, %v1046
        %v1076 = vpack.c.bf16 %v1049, %v1048
        %v1077 = vpack.c.bf16 %v1051, %v1050
        %v1078 = vpack.c.bf16 %v1053, %v1052
        %v1079 = vpack.c.bf16 %v1055, %v1054
        %v1080 = vpack.c.bf16 %v1057, %v1056
        %v1081 = vpack.c.bf16 %v1059, %v1058
        %v1082 = vpack.c.bf16 %v1061, %v1060
        %v1083 = vpack.c.bf16 %v1063, %v1062
        %v1084 = vpack.c.bf16 %v1065, %v1064
        %v1085 = vpack.c.bf16 %v1067, %v1066
        %v1086 = vpack.c.bf16 %v1069, %v1068
        %v1087 = vpack.c.bf16 %v1071, %v1070
        %v1088 = vld [vmem:[%s5] sm:$0xf]
        %v1089 = vld [vmem:[%s5 + $0x4] sm:$0xf]
        %v1090 = vld [vmem:[%s5 + $0x8] sm:$0xf]
        %v1091 = vld [vmem:[%s5 + $0xc] sm:$0xf]
        %v1092 = vld [vmem:[%s5 + $0x10] sm:$0xf]
        %v1093 = vld [vmem:[%s5 + $0x14] sm:$0xf]
        %v1094 = vld [vmem:[%s5 + $0x18] sm:$0xf]
        %v1095 = vld [vmem:[%s5 + $0x1c] sm:$0xf]
        %v1096 = vld [vmem:[%s6] sm:$0x1]
        %v1098 = vlaneseq
        %v1099 = vshrl.u32 %v1098, 7
        %v1100 = vsub.s32 0, %v1099
        %v1101 = vrot.slane %v1096, %v1100
        %v1111 = vunpack.c.l.b16 %v1088
        %v1112 = vunpack.c.l.b16 %v1089
        %v1113 = vunpack.c.l.b16 %v1090
        %v1114 = vunpack.c.l.b16 %v1091
        %v1115 = vunpack.c.l.b16 %v1092
        %v1116 = vunpack.c.l.b16 %v1093
        %v1117 = vunpack.c.l.b16 %v1094
        %v1118 = vunpack.c.l.b16 %v1095
        %v1119 = vpack.c.b16 %v1112, %v1111
        %v1120 = vpack.c.b16 %v1114, %v1113
        %v1121 = vpack.c.b16 %v1116, %v1115
        %v1122 = vpack.c.b16 %v1118, %v1117
        %v1128 = vsel %vm830, %v1072, 0
        %v1131 = vsel %vm830, %v1073, 0
        %v1134 = vsel %vm830, %v1074, 0
        %v1137 = vsel %vm830, %v1075, 0
        %v1140 = vsel %vm830, %v1076, 0
        %v1143 = vsel %vm830, %v1077, 0
        %v1146 = vsel %vm830, %v1078, 0
        %v1149 = vsel %vm830, %v1079, 0
        %v1152 = vsel %vm830, %v1080, 0
        %v1155 = vsel %vm830, %v1081, 0
        %v1158 = vsel %vm830, %v1082, 0
        %v1161 = vsel %vm830, %v1083, 0
        %v1164 = vsel %vm830, %v1084, 0
        %v1167 = vsel %vm830, %v1085, 0
        %v1170 = vsel %vm830, %v1086, 0
        %v1173 = vsel %vm830, %v1087, 0
        %1175 = vmatprep.subr.bf16.mxu0 0
        %1176 = vmatpush1.bf16.msra.mxu0 %v1119
        %1177 = vmatprep.subr.bf16.mxu0 0
        %1178 = vmatpush1.bf16.msra.mxu0 %v1120
        %1179 = vmatprep.subr.bf16.mxu0 0
        %1180 = vmatpush1.bf16.msra.mxu0 %v1121
        %1181 = vmatprep.subr.bf16.mxu0 0
        %1182 = vmatpush1.bf16.msra.mxu0 %v1122
        %1183 = vmatprep.subr.bf16.mxu0 0
        %1184 = vmatpush1.bf16.msra.mxu0 0
        %1185 = vmatprep.subr.bf16.mxu0 0
        %1186 = vmatpush1.bf16.msra.mxu0 0
        %1187 = vmatprep.subr.bf16.mxu0 0
        %1188 = vmatpush1.bf16.msra.mxu0 0
        %1189 = vmatprep.subr.bf16.mxu0 0
        %1190 = vmatpush1.bf16.msra.mxu0 0
        %1191 = vmatprep.subr.bf16.mxu0 0
        %1192 = vmatpush1.bf16.msra.mxu0 0
        %1193 = vmatprep.subr.bf16.mxu0 0
        %1194 = vmatpush1.bf16.msra.mxu0 0
        %1195 = vmatprep.subr.bf16.mxu0 0
        %1196 = vmatpush1.bf16.msra.mxu0 0
        %1197 = vmatprep.subr.bf16.mxu0 0
        %1198 = vmatpush1.bf16.msra.mxu0 0
        %1199 = vmatprep.subr.bf16.mxu0 0
        %1200 = vmatpush1.bf16.msra.mxu0 0
        %1201 = vmatprep.subr.bf16.mxu0 0
        %1202 = vmatpush1.bf16.msra.mxu0 0
        %1203 = vmatprep.subr.bf16.mxu0 0
        %1204 = vmatpush1.bf16.msra.mxu0 0
        %1205 = vmatprep.subr.bf16.mxu0 0
        %1206 = vmatpush1.bf16.msra.mxu0 0
        %1207 = vmatprep.mubr.bf16.mxu0 0
        %1208 = vmatmul.mubr.bf16.gmra.mrb[0].mxu0 %v1128
        %v1209 = vpop.f32.mrb[0].mxu0
        %v1210 = vadd.f32 %v1101, %v1209
        %v1211 = vpop.f32.mrb[0].mxu0
        %v1212 = vpop.f32.mrb[0].mxu0
        %v1213 = vadd.f32 %v1101, %v1212
        %v1214 = vpop.f32.mrb[0].mxu0
        %1215 = vmatprep.mubr.bf16.mxu0 0
        %1216 = vmatmul.mubr.bf16.gmra.mrb[0].mxu0 %v1131
        %v1217 = vpop.f32.mrb[0].mxu0
        %v1218 = vadd.f32 %v1101, %v1217
        %v1219 = vpop.f32.mrb[0].mxu0
        %v1220 = vpop.f32.mrb[0].mxu0
        %v1221 = vadd.f32 %v1101, %v1220
        %v1222 = vpop.f32.mrb[0].mxu0
        %1223 = vmatprep.mubr.bf16.mxu0 0
        %1224 = vmatmul.mubr.bf16.gmra.mrb[0].mxu0 %v1134
        %v1225 = vpop.f32.mrb[0].mxu0
        %v1226 = vadd.f32 %v1101, %v1225
        %v1227 = vpop.f32.mrb[0].mxu0
        %v1228 = vpop.f32.mrb[0].mxu0
        %v1229 = vadd.f32 %v1101, %v1228
        %v1230 = vpop.f32.mrb[0].mxu0
        %1231 = vmatprep.mubr.bf16.mxu0 0
        %1232 = vmatmul.mubr.bf16.gmra.mrb[0].mxu0 %v1137
        %v1233 = vpop.f32.mrb[0].mxu0
        %v1234 = vadd.f32 %v1101, %v1233
        %v1235 = vpop.f32.mrb[0].mxu0
        %v1236 = vpop.f32.mrb[0].mxu0
        %v1237 = vadd.f32 %v1101, %v1236
        %v1238 = vpop.f32.mrb[0].mxu0
        %1239 = vmatprep.mubr.bf16.mxu0 0
        %1240 = vmatmul.mubr.bf16.gmra.mrb[0].mxu0 %v1140
        %v1241 = vpop.f32.mrb[0].mxu0
        %v1242 = vadd.f32 %v1101, %v1241
        %v1243 = vpop.f32.mrb[0].mxu0
        %v1244 = vpop.f32.mrb[0].mxu0
        %v1245 = vadd.f32 %v1101, %v1244
        %v1246 = vpop.f32.mrb[0].mxu0
        %1247 = vmatprep.mubr.bf16.mxu0 0
        %1248 = vmatmul.mubr.bf16.gmra.mrb[0].mxu0 %v1143
        %v1249 = vpop.f32.mrb[0].mxu0
        %v1250 = vadd.f32 %v1101, %v1249
        %v1251 = vpop.f32.mrb[0].mxu0
        %v1252 = vpop.f32.mrb[0].mxu0
        %v1253 = vadd.f32 %v1101, %v1252
        %v1254 = vpop.f32.mrb[0].mxu0
        %1255 = vmatprep.mubr.bf16.mxu0 0
        %1256 = vmatmul.mubr.bf16.gmra.mrb[0].mxu0 %v1146
        %v1257 = vpop.f32.mrb[0].mxu0
        %v1258 = vadd.f32 %v1101, %v1257
        %v1259 = vpop.f32.mrb[0].mxu0
        %v1260 = vpop.f32.mrb[0].mxu0
        %v1261 = vadd.f32 %v1101, %v1260
        %v1262 = vpop.f32.mrb[0].mxu0
        %1263 = vmatprep.mubr.bf16.mxu0 0
        %1264 = vmatmul.mubr.bf16.gmra.mrb[0].mxu0 %v1149
        %v1265 = vpop.f32.mrb[0].mxu0
        %v1266 = vadd.f32 %v1101, %v1265
        %v1267 = vpop.f32.mrb[0].mxu0
        %v1268 = vpop.f32.mrb[0].mxu0
        %v1269 = vadd.f32 %v1101, %v1268
        %v1270 = vpop.f32.mrb[0].mxu0
        %1271 = vmatprep.mubr.bf16.mxu0 0
        %1272 = vmatmul.mubr.bf16.gmra.mrb[0].mxu0 %v1152
        %v1273 = vpop.f32.mrb[0].mxu0
        %v1274 = vadd.f32 %v1101, %v1273
        %v1275 = vpop.f32.mrb[0].mxu0
        %v1276 = vpop.f32.mrb[0].mxu0
        %v1277 = vadd.f32 %v1101, %v1276
        %v1278 = vpop.f32.mrb[0].mxu0
        %1279 = vmatprep.mubr.bf16.mxu0 0
        %1280 = vmatmul.mubr.bf16.gmra.mrb[0].mxu0 %v1155
        %v1281 = vpop.f32.mrb[0].mxu0
        %v1282 = vadd.f32 %v1101, %v1281
        %v1283 = vpop.f32.mrb[0].mxu0
        %v1284 = vpop.f32.mrb[0].mxu0
        %v1285 = vadd.f32 %v1101, %v1284
        %v1286 = vpop.f32.mrb[0].mxu0
        %1287 = vmatprep.mubr.bf16.mxu0 0
        %1288 = vmatmul.mubr.bf16.gmra.mrb[0].mxu0 %v1158
        %v1289 = vpop.f32.mrb[0].mxu0
        %v1290 = vadd.f32 %v1101, %v1289
        %v1291 = vpop.f32.mrb[0].mxu0
        %v1292 = vpop.f32.mrb[0].mxu0
        %v1293 = vadd.f32 %v1101, %v1292
        %v1294 = vpop.f32.mrb[0].mxu0
        %1295 = vmatprep.mubr.bf16.mxu0 0
        %1296 = vmatmul.mubr.bf16.gmra.mrb[0].mxu0 %v1161
        %v1297 = vpop.f32.mrb[0].mxu0
        %v1298 = vadd.f32 %v1101, %v1297
        %v1299 = vpop.f32.mrb[0].mxu0
        %v1300 = vpop.f32.mrb[0].mxu0
        %v1301 = vadd.f32 %v1101, %v1300
        %v1302 = vpop.f32.mrb[0].mxu0
        %1303 = vmatprep.mubr.bf16.mxu0 0
        %1304 = vmatmul.mubr.bf16.gmra.mrb[0].mxu0 %v1164
        %v1305 = vpop.f32.mrb[0].mxu0
        %v1306 = vadd.f32 %v1101, %v1305
        %v1307 = vpop.f32.mrb[0].mxu0
        %v1308 = vpop.f32.mrb[0].mxu0
        %v1309 = vadd.f32 %v1101, %v1308
        %v1310 = vpop.f32.mrb[0].mxu0
        %1311 = vmatprep.mubr.bf16.mxu0 0
        %1312 = vmatmul.mubr.bf16.gmra.mrb[0].mxu0 %v1167
        %v1313 = vpop.f32.mrb[0].mxu0
        %v1314 = vadd.f32 %v1101, %v1313
        %v1315 = vpop.f32.mrb[0].mxu0
        %v1316 = vpop.f32.mrb[0].mxu0
        %v1317 = vadd.f32 %v1101, %v1316
        %v1318 = vpop.f32.mrb[0].mxu0
        %1319 = vmatprep.mubr.bf16.mxu0 0
        %1320 = vmatmul.mubr.bf16.gmra.mrb[0].mxu0 %v1170
        %v1321 = vpop.f32.mrb[0].mxu0
        %v1322 = vadd.f32 %v1101, %v1321
        %v1323 = vpop.f32.mrb[0].mxu0
        %v1324 = vpop.f32.mrb[0].mxu0
        %v1325 = vadd.f32 %v1101, %v1324
        %v1326 = vpop.f32.mrb[0].mxu0
        %1327 = vmatprep.mubr.bf16.mxu0 0
        %1328 = vmatmul.mubr.bf16.gmra.mrb[0].mxu0 %v1173
        %v1329 = vpop.f32.mrb[0].mxu0
        %v1330 = vadd.f32 %v1101, %v1329
        %v1331 = vpop.f32.mrb[0].mxu0
        %v1332 = vpop.f32.mrb[0].mxu0
        %v1333 = vadd.f32 %v1101, %v1332
        %v1334 = vpop.f32.mrb[0].mxu0
        %1335 = vdwg.mxu0
        %v1336 = vmax.f32 %v1210, 0.0
        %v1337 = vmax.f32 %v1213, 0.0
        %v1338 = vmax.f32 %v1218, 0.0
        %v1339 = vmax.f32 %v1221, 0.0
        %v1340 = vmax.f32 %v1226, 0.0
        %v1341 = vmax.f32 %v1229, 0.0
        %v1342 = vmax.f32 %v1234, 0.0
        %v1343 = vmax.f32 %v1237, 0.0
        %v1344 = vmax.f32 %v1242, 0.0
        %v1345 = vmax.f32 %v1245, 0.0
        %v1346 = vmax.f32 %v1250, 0.0
        %v1347 = vmax.f32 %v1253, 0.0
        %v1348 = vmax.f32 %v1258, 0.0
        %v1349 = vmax.f32 %v1261, 0.0
        %v1350 = vmax.f32 %v1266, 0.0
        %v1351 = vmax.f32 %v1269, 0.0
        %v1352 = vmax.f32 %v1274, 0.0
        %v1353 = vmax.f32 %v1277, 0.0
        %v1354 = vmax.f32 %v1282, 0.0
        %v1355 = vmax.f32 %v1285, 0.0
        %v1356 = vmax.f32 %v1290, 0.0
        %v1357 = vmax.f32 %v1293, 0.0
        %v1358 = vmax.f32 %v1298, 0.0
        %v1359 = vmax.f32 %v1301, 0.0
        %v1360 = vmax.f32 %v1306, 0.0
        %v1361 = vmax.f32 %v1309, 0.0
        %v1362 = vmax.f32 %v1314, 0.0
        %v1363 = vmax.f32 %v1317, 0.0
        %v1364 = vmax.f32 %v1322, 0.0
        %v1365 = vmax.f32 %v1325, 0.0
        %v1366 = vmax.f32 %v1330, 0.0
        %v1367 = vmax.f32 %v1333, 0.0
        %v1368 = vpack.c.bf16 %v1337, %v1336
        %v1369 = vpack.c.bf16 %v1339, %v1338
        %v1370 = vpack.c.bf16 %v1341, %v1340
        %v1371 = vpack.c.bf16 %v1343, %v1342
        %v1372 = vpack.c.bf16 %v1345, %v1344
        %v1373 = vpack.c.bf16 %v1347, %v1346
        %v1374 = vpack.c.bf16 %v1349, %v1348
        %v1375 = vpack.c.bf16 %v1351, %v1350
        %v1376 = vpack.c.bf16 %v1353, %v1352
        %v1377 = vpack.c.bf16 %v1355, %v1354
        %v1378 = vpack.c.bf16 %v1357, %v1356
        %v1379 = vpack.c.bf16 %v1359, %v1358
        %v1380 = vpack.c.bf16 %v1361, %v1360
        %v1381 = vpack.c.bf16 %v1363, %v1362
        %v1382 = vpack.c.bf16 %v1365, %v1364
        %v1383 = vpack.c.bf16 %v1367, %v1366
        %v1384 = vld [vmem:[%s7] sm:$0xf]
        %v1385 = vld [vmem:[%s7 + $0x4] sm:$0xf]
        %v1386 = vld [vmem:[%s7 + $0x8] sm:$0xf]
        %v1387 = vld [vmem:[%s7 + $0xc] sm:$0xf]
        %v1388 = vld [vmem:[%s7 + $0x10] sm:$0xf]
        %v1389 = vld [vmem:[%s7 + $0x14] sm:$0xf]
        %v1390 = vld [vmem:[%s7 + $0x18] sm:$0xf]
        %v1391 = vld [vmem:[%s7 + $0x1c] sm:$0xf]
        %v1392 = vld [vmem:[%s8] sm:$0x1]
        %v1394 = vlaneseq
        %v1395 = vshrl.u32 %v1394, 7
        %v1396 = vsub.s32 0, %v1395
        %v1397 = vrot.slane %v1392, %v1396
        %v1407 = vunpack.c.l.b16 %v1384
        %v1408 = vunpack.c.l.b16 %v1385
        %v1409 = vunpack.c.l.b16 %v1386
        %v1410 = vunpack.c.l.b16 %v1387
        %v1411 = vunpack.c.l.b16 %v1388
        %v1412 = vunpack.c.l.b16 %v1389
        %v1413 = vunpack.c.l.b16 %v1390
        %v1414 = vunpack.c.l.b16 %v1391
        %v1415 = vpack.c.b16 %v1408, %v1407
        %v1416 = vpack.c.b16 %v1410, %v1409
        %v1417 = vpack.c.b16 %v1412, %v1411
        %v1418 = vpack.c.b16 %v1414, %v1413
        %v1424 = vsel %vm830, %v1368, 0
        %v1427 = vsel %vm830, %v1369, 0
        %v1430 = vsel %vm830, %v1370, 0
        %v1433 = vsel %vm830, %v1371, 0
        %v1436 = vsel %vm830, %v1372, 0
        %v1439 = vsel %vm830, %v1373, 0
        %v1442 = vsel %vm830, %v1374, 0
        %v1445 = vsel %vm830, %v1375, 0
        %v1448 = vsel %vm830, %v1376, 0
        %v1451 = vsel %vm830, %v1377, 0
        %v1454 = vsel %vm830, %v1378, 0
        %v1457 = vsel %vm830, %v1379, 0
        %v1460 = vsel %vm830, %v1380, 0
        %v1463 = vsel %vm830, %v1381, 0
        %v1466 = vsel %vm830, %v1382, 0
        %v1469 = vsel %vm830, %v1383, 0
        %1471 = vmatprep.subr.bf16.mxu0 0
        %1472 = vmatpush1.bf16.msra.mxu0 %v1415
        %1473 = vmatprep.subr.bf16.mxu0 0
        %1474 = vmatpush1.bf16.msra.mxu0 %v1416
        %1475 = vmatprep.subr.bf16.mxu0 0
        %1476 = vmatpush1.bf16.msra.mxu0 %v1417
        %1477 = vmatprep.subr.bf16.mxu0 0
        %1478 = vmatpush1.bf16.msra.mxu0 %v1418
        %1479 = vmatprep.subr.bf16.mxu0 0
        %1480 = vmatpush1.bf16.msra.mxu0 0
        %1481 = vmatprep.subr.bf16.mxu0 0
        %1482 = vmatpush1.bf16.msra.mxu0 0
        %1483 = vmatprep.subr.bf16.mxu0 0
        %1484 = vmatpush1.bf16.msra.mxu0 0
        %1485 = vmatprep.subr.bf16.mxu0 0
        %1486 = vmatpush1.bf16.msra.mxu0 0
        %1487 = vmatprep.subr.bf16.mxu0 0
        %1488 = vmatpush1.bf16.msra.mxu0 0
        %1489 = vmatprep.subr.bf16.mxu0 0
        %1490 = vmatpush1.bf16.msra.mxu0 0
        %1491 = vmatprep.subr.bf16.mxu0 0
        %1492 = vmatpush1.bf16.msra.mxu0 0
        %1493 = vmatprep.subr.bf16.mxu0 0
        %1494 = vmatpush1.bf16.msra.mxu0 0
        %1495 = vmatprep.subr.bf16.mxu0 0
        %1496 = vmatpush1.bf16.msra.mxu0 0
        %1497 = vmatprep.subr.bf16.mxu0 0
        %1498 = vmatpush1.bf16.msra.mxu0 0
        %1499 = vmatprep.subr.bf16.mxu0 0
        %1500 = vmatpush1.bf16.msra.mxu0 0
        %1501 = vmatprep.subr.bf16.mxu0 0
        %1502 = vmatpush1.bf16.msra.mxu0 0
        %1503 = vmatprep.mubr.bf16.mxu0 0
        %1504 = vmatmul.mubr.bf16.gmra.mrb[0].mxu0 %v1424
        %v1505 = vpop.f32.mrb[0].mxu0
        %v1506 = vadd.f32 %v1397, %v1505
        %v1507 = vpop.f32.mrb[0].mxu0
        %v1508 = vpop.f32.mrb[0].mxu0
        %v1509 = vadd.f32 %v1397, %v1508
        %v1510 = vpop.f32.mrb[0].mxu0
        %1511 = vmatprep.mubr.bf16.mxu0 0
        %1512 = vmatmul.mubr.bf16.gmra.mrb[0].mxu0 %v1427
        %v1513 = vpop.f32.mrb[0].mxu0
        %v1514 = vadd.f32 %v1397, %v1513
        %v1515 = vpop.f32.mrb[0].mxu0
        %v1516 = vpop.f32.mrb[0].mxu0
        %v1517 = vadd.f32 %v1397, %v1516
        %v1518 = vpop.f32.mrb[0].mxu0
        %1519 = vmatprep.mubr.bf16.mxu0 0
        %1520 = vmatmul.mubr.bf16.gmra.mrb[0].mxu0 %v1430
        %v1521 = vpop.f32.mrb[0].mxu0
        %v1522 = vadd.f32 %v1397, %v1521
        %v1523 = vpop.f32.mrb[0].mxu0
        %v1524 = vpop.f32.mrb[0].mxu0
        %v1525 = vadd.f32 %v1397, %v1524
        %v1526 = vpop.f32.mrb[0].mxu0
        %1527 = vmatprep.mubr.bf16.mxu0 0
        %1528 = vmatmul.mubr.bf16.gmra.mrb[0].mxu0 %v1433
        %v1529 = vpop.f32.mrb[0].mxu0
        %v1530 = vadd.f32 %v1397, %v1529
        %v1531 = vpop.f32.mrb[0].mxu0
        %v1532 = vpop.f32.mrb[0].mxu0
        %v1533 = vadd.f32 %v1397, %v1532
        %v1534 = vpop.f32.mrb[0].mxu0
        %1535 = vmatprep.mubr.bf16.mxu0 0
        %1536 = vmatmul.mubr.bf16.gmra.mrb[0].mxu0 %v1436
        %v1537 = vpop.f32.mrb[0].mxu0
        %v1538 = vadd.f32 %v1397, %v1537
        %v1539 = vpop.f32.mrb[0].mxu0
        %v1540 = vpop.f32.mrb[0].mxu0
        %v1541 = vadd.f32 %v1397, %v1540
        %v1542 = vpop.f32.mrb[0].mxu0
        %1543 = vmatprep.mubr.bf16.mxu0 0
        %1544 = vmatmul.mubr.bf16.gmra.mrb[0].mxu0 %v1439
        %v1545 = vpop.f32.mrb[0].mxu0
        %v1546 = vadd.f32 %v1397, %v1545
        %v1547 = vpop.f32.mrb[0].mxu0
        %v1548 = vpop.f32.mrb[0].mxu0
        %v1549 = vadd.f32 %v1397, %v1548
        %v1550 = vpop.f32.mrb[0].mxu0
        %1551 = vmatprep.mubr.bf16.mxu0 0
        %1552 = vmatmul.mubr.bf16.gmra.mrb[0].mxu0 %v1442
        %v1553 = vpop.f32.mrb[0].mxu0
        %v1554 = vadd.f32 %v1397, %v1553
        %v1555 = vpop.f32.mrb[0].mxu0
        %v1556 = vpop.f32.mrb[0].mxu0
        %v1557 = vadd.f32 %v1397, %v1556
        %v1558 = vpop.f32.mrb[0].mxu0
        %1559 = vmatprep.mubr.bf16.mxu0 0
        %1560 = vmatmul.mubr.bf16.gmra.mrb[0].mxu0 %v1445
        %v1561 = vpop.f32.mrb[0].mxu0
        %v1562 = vadd.f32 %v1397, %v1561
        %v1563 = vpop.f32.mrb[0].mxu0
        %v1564 = vpop.f32.mrb[0].mxu0
        %v1565 = vadd.f32 %v1397, %v1564
        %v1566 = vpop.f32.mrb[0].mxu0
        %1567 = vmatprep.mubr.bf16.mxu0 0
        %1568 = vmatmul.mubr.bf16.gmra.mrb[0].mxu0 %v1448
        %v1569 = vpop.f32.mrb[0].mxu0
        %v1570 = vadd.f32 %v1397, %v1569
        %v1571 = vpop.f32.mrb[0].mxu0
        %v1572 = vpop.f32.mrb[0].mxu0
        %v1573 = vadd.f32 %v1397, %v1572
        %v1574 = vpop.f32.mrb[0].mxu0
        %1575 = vmatprep.mubr.bf16.mxu0 0
        %1576 = vmatmul.mubr.bf16.gmra.mrb[0].mxu0 %v1451
        %v1577 = vpop.f32.mrb[0].mxu0
        %v1578 = vadd.f32 %v1397, %v1577
        %v1579 = vpop.f32.mrb[0].mxu0
        %v1580 = vpop.f32.mrb[0].mxu0
        %v1581 = vadd.f32 %v1397, %v1580
        %v1582 = vpop.f32.mrb[0].mxu0
        %1583 = vmatprep.mubr.bf16.mxu0 0
        %1584 = vmatmul.mubr.bf16.gmra.mrb[0].mxu0 %v1454
        %v1585 = vpop.f32.mrb[0].mxu0
        %v1586 = vadd.f32 %v1397, %v1585
        %v1587 = vpop.f32.mrb[0].mxu0
        %v1588 = vpop.f32.mrb[0].mxu0
        %v1589 = vadd.f32 %v1397, %v1588
        %v1590 = vpop.f32.mrb[0].mxu0
        %1591 = vmatprep.mubr.bf16.mxu0 0
        %1592 = vmatmul.mubr.bf16.gmra.mrb[0].mxu0 %v1457
        %v1593 = vpop.f32.mrb[0].mxu0
        %v1594 = vadd.f32 %v1397, %v1593
        %v1595 = vpop.f32.mrb[0].mxu0
        %v1596 = vpop.f32.mrb[0].mxu0
        %v1597 = vadd.f32 %v1397, %v1596
        %v1598 = vpop.f32.mrb[0].mxu0
        %1599 = vmatprep.mubr.bf16.mxu0 0
        %1600 = vmatmul.mubr.bf16.gmra.mrb[0].mxu0 %v1460
        %v1601 = vpop.f32.mrb[0].mxu0
        %v1602 = vadd.f32 %v1397, %v1601
        %v1603 = vpop.f32.mrb[0].mxu0
        %v1604 = vpop.f32.mrb[0].mxu0
        %v1605 = vadd.f32 %v1397, %v1604
        %v1606 = vpop.f32.mrb[0].mxu0
        %1607 = vmatprep.mubr.bf16.mxu0 0
        %1608 = vmatmul.mubr.bf16.gmra.mrb[0].mxu0 %v1463
        %v1609 = vpop.f32.mrb[0].mxu0
        %v1610 = vadd.f32 %v1397, %v1609
        %v1611 = vpop.f32.mrb[0].mxu0
        %v1612 = vpop.f32.mrb[0].mxu0
        %v1613 = vadd.f32 %v1397, %v1612
        %v1614 = vpop.f32.mrb[0].mxu0
        %1615 = vmatprep.mubr.bf16.mxu0 0
        %1616 = vmatmul.mubr.bf16.gmra.mrb[0].mxu0 %v1466
        %v1617 = vpop.f32.mrb[0].mxu0
        %v1618 = vadd.f32 %v1397, %v1617
        %v1619 = vpop.f32.mrb[0].mxu0
        %v1620 = vpop.f32.mrb[0].mxu0
        %v1621 = vadd.f32 %v1397, %v1620
        %v1622 = vpop.f32.mrb[0].mxu0
        %1623 = vmatprep.mubr.bf16.mxu0 0
        %1624 = vmatmul.mubr.bf16.gmra.mrb[0].mxu0 %v1469
        %v1625 = vpop.f32.mrb[0].mxu0
        %v1626 = vadd.f32 %v1397, %v1625
        %v1627 = vpop.f32.mrb[0].mxu0
        %v1628 = vpop.f32.mrb[0].mxu0
        %v1629 = vadd.f32 %v1397, %v1628
        %v1630 = vpop.f32.mrb[0].mxu0
        %1631 = vdwg.mxu0
        %v1632 = vmax.f32 %v1506, 0.0
        %v1633 = vmax.f32 %v1509, 0.0
        %v1634 = vmax.f32 %v1514, 0.0
        %v1635 = vmax.f32 %v1517, 0.0
        %v1636 = vmax.f32 %v1522, 0.0
        %v1637 = vmax.f32 %v1525, 0.0
        %v1638 = vmax.f32 %v1530, 0.0
        %v1639 = vmax.f32 %v1533, 0.0
        %v1640 = vmax.f32 %v1538, 0.0
        %v1641 = vmax.f32 %v1541, 0.0
        %v1642 = vmax.f32 %v1546, 0.0
        %v1643 = vmax.f32 %v1549, 0.0
        %v1644 = vmax.f32 %v1554, 0.0
        %v1645 = vmax.f32 %v1557, 0.0
        %v1646 = vmax.f32 %v1562, 0.0
        %v1647 = vmax.f32 %v1565, 0.0
        %v1648 = vmax.f32 %v1570, 0.0
        %v1649 = vmax.f32 %v1573, 0.0
        %v1650 = vmax.f32 %v1578, 0.0
        %v1651 = vmax.f32 %v1581, 0.0
        %v1652 = vmax.f32 %v1586, 0.0
        %v1653 = vmax.f32 %v1589, 0.0
        %v1654 = vmax.f32 %v1594, 0.0
        %v1655 = vmax.f32 %v1597, 0.0
        %v1656 = vmax.f32 %v1602, 0.0
        %v1657 = vmax.f32 %v1605, 0.0
        %v1658 = vmax.f32 %v1610, 0.0
        %v1659 = vmax.f32 %v1613, 0.0
        %v1660 = vmax.f32 %v1618, 0.0
        %v1661 = vmax.f32 %v1621, 0.0
        %v1662 = vmax.f32 %v1626, 0.0
        %v1663 = vmax.f32 %v1629, 0.0
        %v1664 = vpack.c.bf16 %v1633, %v1632
        %v1665 = vpack.c.bf16 %v1635, %v1634
        %v1666 = vpack.c.bf16 %v1637, %v1636
        %v1667 = vpack.c.bf16 %v1639, %v1638
        %v1668 = vpack.c.bf16 %v1641, %v1640
        %v1669 = vpack.c.bf16 %v1643, %v1642
        %v1670 = vpack.c.bf16 %v1645, %v1644
        %v1671 = vpack.c.bf16 %v1647, %v1646
        %v1672 = vpack.c.bf16 %v1649, %v1648
        %v1673 = vpack.c.bf16 %v1651, %v1650
        %v1674 = vpack.c.bf16 %v1653, %v1652
        %v1675 = vpack.c.bf16 %v1655, %v1654
        %v1676 = vpack.c.bf16 %v1657, %v1656
        %v1677 = vpack.c.bf16 %v1659, %v1658
        %v1678 = vpack.c.bf16 %v1661, %v1660
        %v1679 = vpack.c.bf16 %v1663, %v1662
        %v1680 = vld [vmem:[%s9] sm:$0xff]
        %v1681 = vld [vmem:[%s9 + $0x8] sm:$0xff]
        %v1682 = vld [vmem:[%s9 + $0x10] sm:$0xff]
        %v1683 = vld [vmem:[%s9 + $0x18] sm:$0xff]
        %v1684 = vld [vmem:[%s9 + $0x20] sm:$0xff]
        %v1685 = vld [vmem:[%s9 + $0x28] sm:$0xff]
        %v1686 = vld [vmem:[%s9 + $0x30] sm:$0xff]
        %v1687 = vld [vmem:[%s9 + $0x38] sm:$0xff]
        %v1688 = vld [vmem:[%s9 + $0x40] sm:$0xff]
        %v1689 = vld [vmem:[%s9 + $0x48] sm:$0xff]
        %v1690 = vld [vmem:[%s9 + $0x50] sm:$0xff]
        %v1691 = vld [vmem:[%s9 + $0x58] sm:$0xff]
        %v1692 = vld [vmem:[%s9 + $0x60] sm:$0xff]
        %v1693 = vld [vmem:[%s9 + $0x68] sm:$0xff]
        %v1694 = vld [vmem:[%s9 + $0x70] sm:$0xff]
        %v1695 = vld [vmem:[%s9 + $0x78] sm:$0xff]
        %v1696 = vld [vmem:[%s10] sm:$0x3]
        %v1698 = vlaneseq
        %v1699 = vshrl.u32 %v1698, 7
        %v1700 = vsub.s32 0, %v1699
        %v1701 = vrot.slane %v1696, %v1700
        %v1702 = vlaneseq
        %v1703 = vshrl.u32 %v1702, 7
        %v1704 = vsub.s32 1, %v1703
        %v1705 = vrot.slane %v1696, %v1704
        %v1724 = vunpack.c.l.b16 %v1680
        %v1725 = vunpack.c.h.b16 %v1680
        %v1726 = vunpack.c.l.b16 %v1681
        %v1727 = vunpack.c.h.b16 %v1681
        %v1728 = vunpack.c.l.b16 %v1682
        %v1729 = vunpack.c.h.b16 %v1682
        %v1730 = vunpack.c.l.b16 %v1683
        %v1731 = vunpack.c.h.b16 %v1683
        %v1732 = vunpack.c.l.b16 %v1684
        %v1733 = vunpack.c.h.b16 %v1684
        %v1734 = vunpack.c.l.b16 %v1685
        %v1735 = vunpack.c.h.b16 %v1685
        %v1736 = vunpack.c.l.b16 %v1686
        %v1737 = vunpack.c.h.b16 %v1686
        %v1738 = vunpack.c.l.b16 %v1687
        %v1739 = vunpack.c.h.b16 %v1687
        %v1740 = vunpack.c.l.b16 %v1688
        %v1741 = vunpack.c.h.b16 %v1688
        %v1742 = vunpack.c.l.b16 %v1689
        %v1743 = vunpack.c.h.b16 %v1689
        %v1744 = vunpack.c.l.b16 %v1690
        %v1745 = vunpack.c.h.b16 %v1690
        %v1746 = vunpack.c.l.b16 %v1691
        %v1747 = vunpack.c.h.b16 %v1691
        %v1748 = vunpack.c.l.b16 %v1692
        %v1749 = vunpack.c.h.b16 %v1692
        %v1750 = vunpack.c.l.b16 %v1693
        %v1751 = vunpack.c.h.b16 %v1693
        %v1752 = vunpack.c.l.b16 %v1694
        %v1753 = vunpack.c.h.b16 %v1694
        %v1754 = vunpack.c.l.b16 %v1695
        %v1755 = vunpack.c.h.b16 %v1695
        %v1756 = vpack.c.b16 %v1726, %v1724
        %v1757 = vpack.c.b16 %v1727, %v1725
        %v1758 = vpack.c.b16 %v1730, %v1728
        %v1759 = vpack.c.b16 %v1731, %v1729
        %v1760 = vpack.c.b16 %v1734, %v1732
        %v1761 = vpack.c.b16 %v1735, %v1733
        %v1762 = vpack.c.b16 %v1738, %v1736
        %v1763 = vpack.c.b16 %v1739, %v1737
        %v1764 = vpack.c.b16 %v1742, %v1740
        %v1765 = vpack.c.b16 %v1743, %v1741
        %v1766 = vpack.c.b16 %v1746, %v1744
        %v1767 = vpack.c.b16 %v1747, %v1745
        %v1768 = vpack.c.b16 %v1750, %v1748
        %v1769 = vpack.c.b16 %v1751, %v1749
        %v1770 = vpack.c.b16 %v1754, %v1752
        %v1771 = vpack.c.b16 %v1755, %v1753
        %1788 = vmatprep.subr.bf16.mxu0 %v1757
        %1789 = vmatpush1.bf16.msra.mxu0 %v1756
        %1790 = vmatprep.subr.bf16.mxu0 %v1759
        %1791 = vmatpush1.bf16.msra.mxu0 %v1758
        %1792 = vmatprep.subr.bf16.mxu0 %v1761
        %1793 = vmatpush1.bf16.msra.mxu0 %v1760
        %1794 = vmatprep.subr.bf16.mxu0 %v1763
        %1795 = vmatpush1.bf16.msra.mxu0 %v1762
        %1796 = vmatprep.subr.bf16.mxu0 %v1765
        %1797 = vmatpush1.bf16.msra.mxu0 %v1764
        %1798 = vmatprep.subr.bf16.mxu0 %v1767
        %1799 = vmatpush1.bf16.msra.mxu0 %v1766
        %1800 = vmatprep.subr.bf16.mxu0 %v1769
        %1801 = vmatpush1.bf16.msra.mxu0 %v1768
        %1802 = vmatprep.subr.bf16.mxu0 %v1771
        %1803 = vmatpush1.bf16.msra.mxu0 %v1770
        %1804 = vmatprep.subr.bf16.mxu0 0
        %1805 = vmatpush1.bf16.msra.mxu0 0
        %1806 = vmatprep.subr.bf16.mxu0 0
        %1807 = vmatpush1.bf16.msra.mxu0 0
        %1808 = vmatprep.subr.bf16.mxu0 0
        %1809 = vmatpush1.bf16.msra.mxu0 0
        %1810 = vmatprep.subr.bf16.mxu0 0
        %1811 = vmatpush1.bf16.msra.mxu0 0
        %1812 = vmatprep.subr.bf16.mxu0 0
        %1813 = vmatpush1.bf16.msra.mxu0 0
        %1814 = vmatprep.subr.bf16.mxu0 0
        %1815 = vmatpush1.bf16.msra.mxu0 0
        %1816 = vmatprep.subr.bf16.mxu0 0
        %1817 = vmatpush1.bf16.msra.mxu0 0
        %1818 = vmatprep.subr.bf16.mxu0 0
        %1819 = vmatpush1.bf16.msra.mxu0 0
        %1820 = vmatprep.mubr.bf16.mxu0 0
        %1821 = vmatmul.mubr.bf16.gmra.mrb[0].mxu0 %v1664
        %v1822 = vpop.f32.mrb[0].mxu0
        %v1823 = vadd.f32 %v1701, %v1822
        %v1824 = vpop.f32.mrb[0].mxu0
        %v1825 = vadd.f32 %v1705, %v1824
        %v1826 = vpop.f32.mrb[0].mxu0
        %v1827 = vadd.f32 %v1701, %v1826
        %v1828 = vpop.f32.mrb[0].mxu0
        %v1829 = vadd.f32 %v1705, %v1828
        %1830 = vmatprep.mubr.bf16.mxu0 0
        %1831 = vmatmul.mubr.bf16.gmra.mrb[0].mxu0 %v1665
        %v1832 = vpop.f32.mrb[0].mxu0
        %v1833 = vadd.f32 %v1701, %v1832
        %v1834 = vpop.f32.mrb[0].mxu0
        %v1835 = vadd.f32 %v1705, %v1834
        %v1836 = vpop.f32.mrb[0].mxu0
        %v1837 = vadd.f32 %v1701, %v1836
        %v1838 = vpop.f32.mrb[0].mxu0
        %v1839 = vadd.f32 %v1705, %v1838
        %1840 = vmatprep.mubr.bf16.mxu0 0
        %1841 = vmatmul.mubr.bf16.gmra.mrb[0].mxu0 %v1666
        %v1842 = vpop.f32.mrb[0].mxu0
        %v1843 = vadd.f32 %v1701, %v1842
        %v1844 = vpop.f32.mrb[0].mxu0
        %v1845 = vadd.f32 %v1705, %v1844
        %v1846 = vpop.f32.mrb[0].mxu0
        %v1847 = vadd.f32 %v1701, %v1846
        %v1848 = vpop.f32.mrb[0].mxu0
        %v1849 = vadd.f32 %v1705, %v1848
        %1850 = vmatprep.mubr.bf16.mxu0 0
        %1851 = vmatmul.mubr.bf16.gmra.mrb[0].mxu0 %v1667
        %v1852 = vpop.f32.mrb[0].mxu0
        %v1853 = vadd.f32 %v1701, %v1852
        %v1854 = vpop.f32.mrb[0].mxu0
        %v1855 = vadd.f32 %v1705, %v1854
        %v1856 = vpop.f32.mrb[0].mxu0
        %v1857 = vadd.f32 %v1701, %v1856
        %v1858 = vpop.f32.mrb[0].mxu0
        %v1859 = vadd.f32 %v1705, %v1858
        %1860 = vmatprep.mubr.bf16.mxu0 0
        %1861 = vmatmul.mubr.bf16.gmra.mrb[0].mxu0 %v1668
        %v1862 = vpop.f32.mrb[0].mxu0
        %v1863 = vadd.f32 %v1701, %v1862
        %v1864 = vpop.f32.mrb[0].mxu0
        %v1865 = vadd.f32 %v1705, %v1864
        %v1866 = vpop.f32.mrb[0].mxu0
        %v1867 = vadd.f32 %v1701, %v1866
        %v1868 = vpop.f32.mrb[0].mxu0
        %v1869 = vadd.f32 %v1705, %v1868
        %1870 = vmatprep.mubr.bf16.mxu0 0
        %1871 = vmatmul.mubr.bf16.gmra.mrb[0].mxu0 %v1669
        %v1872 = vpop.f32.mrb[0].mxu0
        %v1873 = vadd.f32 %v1701, %v1872
        %v1874 = vpop.f32.mrb[0].mxu0
        %v1875 = vadd.f32 %v1705, %v1874
        %v1876 = vpop.f32.mrb[0].mxu0
        %v1877 = vadd.f32 %v1701, %v1876
        %v1878 = vpop.f32.mrb[0].mxu0
        %v1879 = vadd.f32 %v1705, %v1878
        %1880 = vmatprep.mubr.bf16.mxu0 0
        %1881 = vmatmul.mubr.bf16.gmra.mrb[0].mxu0 %v1670
        %v1882 = vpop.f32.mrb[0].mxu0
        %v1883 = vadd.f32 %v1701, %v1882
        %v1884 = vpop.f32.mrb[0].mxu0
        %v1885 = vadd.f32 %v1705, %v1884
        %v1886 = vpop.f32.mrb[0].mxu0
        %v1887 = vadd.f32 %v1701, %v1886
        %v1888 = vpop.f32.mrb[0].mxu0
        %v1889 = vadd.f32 %v1705, %v1888
        %1890 = vmatprep.mubr.bf16.mxu0 0
        %1891 = vmatmul.mubr.bf16.gmra.mrb[0].mxu0 %v1671
        %v1892 = vpop.f32.mrb[0].mxu0
        %v1893 = vadd.f32 %v1701, %v1892
        %v1894 = vpop.f32.mrb[0].mxu0
        %v1895 = vadd.f32 %v1705, %v1894
        %v1896 = vpop.f32.mrb[0].mxu0
        %v1897 = vadd.f32 %v1701, %v1896
        %v1898 = vpop.f32.mrb[0].mxu0
        %v1899 = vadd.f32 %v1705, %v1898
        %1900 = vmatprep.mubr.bf16.mxu0 0
        %1901 = vmatmul.mubr.bf16.gmra.mrb[0].mxu0 %v1672
        %v1902 = vpop.f32.mrb[0].mxu0
        %v1903 = vadd.f32 %v1701, %v1902
        %v1904 = vpop.f32.mrb[0].mxu0
        %v1905 = vadd.f32 %v1705, %v1904
        %v1906 = vpop.f32.mrb[0].mxu0
        %v1907 = vadd.f32 %v1701, %v1906
        %v1908 = vpop.f32.mrb[0].mxu0
        %v1909 = vadd.f32 %v1705, %v1908
        %1910 = vmatprep.mubr.bf16.mxu0 0
        %1911 = vmatmul.mubr.bf16.gmra.mrb[0].mxu0 %v1673
        %v1912 = vpop.f32.mrb[0].mxu0
        %v1913 = vadd.f32 %v1701, %v1912
        %v1914 = vpop.f32.mrb[0].mxu0
        %v1915 = vadd.f32 %v1705, %v1914
        %v1916 = vpop.f32.mrb[0].mxu0
        %v1917 = vadd.f32 %v1701, %v1916
        %v1918 = vpop.f32.mrb[0].mxu0
        %v1919 = vadd.f32 %v1705, %v1918
        %1920 = vmatprep.mubr.bf16.mxu0 0
        %1921 = vmatmul.mubr.bf16.gmra.mrb[0].mxu0 %v1674
        %v1922 = vpop.f32.mrb[0].mxu0
        %v1923 = vadd.f32 %v1701, %v1922
        %v1924 = vpop.f32.mrb[0].mxu0
        %v1925 = vadd.f32 %v1705, %v1924
        %v1926 = vpop.f32.mrb[0].mxu0
        %v1927 = vadd.f32 %v1701, %v1926
        %v1928 = vpop.f32.mrb[0].mxu0
        %v1929 = vadd.f32 %v1705, %v1928
        %1930 = vmatprep.mubr.bf16.mxu0 0
        %1931 = vmatmul.mubr.bf16.gmra.mrb[0].mxu0 %v1675
        %v1932 = vpop.f32.mrb[0].mxu0
        %v1933 = vadd.f32 %v1701, %v1932
        %v1934 = vpop.f32.mrb[0].mxu0
        %v1935 = vadd.f32 %v1705, %v1934
        %v1936 = vpop.f32.mrb[0].mxu0
        %v1937 = vadd.f32 %v1701, %v1936
        %v1938 = vpop.f32.mrb[0].mxu0
        %v1939 = vadd.f32 %v1705, %v1938
        %1940 = vmatprep.mubr.bf16.mxu0 0
        %1941 = vmatmul.mubr.bf16.gmra.mrb[0].mxu0 %v1676
        %v1942 = vpop.f32.mrb[0].mxu0
        %v1943 = vadd.f32 %v1701, %v1942
        %v1944 = vpop.f32.mrb[0].mxu0
        %v1945 = vadd.f32 %v1705, %v1944
        %v1946 = vpop.f32.mrb[0].mxu0
        %v1947 = vadd.f32 %v1701, %v1946
        %v1948 = vpop.f32.mrb[0].mxu0
        %v1949 = vadd.f32 %v1705, %v1948
        %1950 = vmatprep.mubr.bf16.mxu0 0
        %1951 = vmatmul.mubr.bf16.gmra.mrb[0].mxu0 %v1677
        %v1952 = vpop.f32.mrb[0].mxu0
        %v1953 = vadd.f32 %v1701, %v1952
        %v1954 = vpop.f32.mrb[0].mxu0
        %v1955 = vadd.f32 %v1705, %v1954
        %v1956 = vpop.f32.mrb[0].mxu0
        %v1957 = vadd.f32 %v1701, %v1956
        %v1958 = vpop.f32.mrb[0].mxu0
        %v1959 = vadd.f32 %v1705, %v1958
        %1960 = vmatprep.mubr.bf16.mxu0 0
        %1961 = vmatmul.mubr.bf16.gmra.mrb[0].mxu0 %v1678
        %v1962 = vpop.f32.mrb[0].mxu0
        %v1963 = vadd.f32 %v1701, %v1962
        %v1964 = vpop.f32.mrb[0].mxu0
        %v1965 = vadd.f32 %v1705, %v1964
        %v1966 = vpop.f32.mrb[0].mxu0
        %v1967 = vadd.f32 %v1701, %v1966
        %v1968 = vpop.f32.mrb[0].mxu0
        %v1969 = vadd.f32 %v1705, %v1968
        %1970 = vmatprep.mubr.bf16.mxu0 0
        %1971 = vmatmul.mubr.bf16.gmra.mrb[0].mxu0 %v1679
        %v1972 = vpop.f32.mrb[0].mxu0
        %v1973 = vadd.f32 %v1701, %v1972
        %v1974 = vpop.f32.mrb[0].mxu0
        %v1975 = vadd.f32 %v1705, %v1974
        %v1976 = vpop.f32.mrb[0].mxu0
        %v1977 = vadd.f32 %v1701, %v1976
        %v1978 = vpop.f32.mrb[0].mxu0
        %v1979 = vadd.f32 %v1705, %v1978
        %1980 = vdwg.mxu0
        %v1981 = vmax.f32 %v1823, 0.0
        %v1982 = vmax.f32 %v1825, 0.0
        %v1983 = vmax.f32 %v1827, 0.0
        %v1984 = vmax.f32 %v1829, 0.0
        %v1985 = vmax.f32 %v1833, 0.0
        %v1986 = vmax.f32 %v1835, 0.0
        %v1987 = vmax.f32 %v1837, 0.0
        %v1988 = vmax.f32 %v1839, 0.0
        %v1989 = vmax.f32 %v1843, 0.0
        %v1990 = vmax.f32 %v1845, 0.0
        %v1991 = vmax.f32 %v1847, 0.0
        %v1992 = vmax.f32 %v1849, 0.0
        %v1993 = vmax.f32 %v1853, 0.0
        %v1994 = vmax.f32 %v1855, 0.0
        %v1995 = vmax.f32 %v1857, 0.0
        %v1996 = vmax.f32 %v1859, 0.0
        %v1997 = vmax.f32 %v1863, 0.0
        %v1998 = vmax.f32 %v1865, 0.0
        %v1999 = vmax.f32 %v1867, 0.0
        %v2000 = vmax.f32 %v1869, 0.0
        %v2001 = vmax.f32 %v1873, 0.0
        %v2002 = vmax.f32 %v1875, 0.0
        %v2003 = vmax.f32 %v1877, 0.0
        %v2004 = vmax.f32 %v1879, 0.0
        %v2005 = vmax.f32 %v1883, 0.0
        %v2006 = vmax.f32 %v1885, 0.0
        %v2007 = vmax.f32 %v1887, 0.0
        %v2008 = vmax.f32 %v1889, 0.0
        %v2009 = vmax.f32 %v1893, 0.0
        %v2010 = vmax.f32 %v1895, 0.0
        %v2011 = vmax.f32 %v1897, 0.0
        %v2012 = vmax.f32 %v1899, 0.0
        %v2013 = vmax.f32 %v1903, 0.0
        %v2014 = vmax.f32 %v1905, 0.0
        %v2015 = vmax.f32 %v1907, 0.0
        %v2016 = vmax.f32 %v1909, 0.0
        %v2017 = vmax.f32 %v1913, 0.0
        %v2018 = vmax.f32 %v1915, 0.0
        %v2019 = vmax.f32 %v1917, 0.0
        %v2020 = vmax.f32 %v1919, 0.0
        %v2021 = vmax.f32 %v1923, 0.0
        %v2022 = vmax.f32 %v1925, 0.0
        %v2023 = vmax.f32 %v1927, 0.0
        %v2024 = vmax.f32 %v1929, 0.0
        %v2025 = vmax.f32 %v1933, 0.0
        %v2026 = vmax.f32 %v1935, 0.0
        %v2027 = vmax.f32 %v1937, 0.0
        %v2028 = vmax.f32 %v1939, 0.0
        %v2029 = vmax.f32 %v1943, 0.0
        %v2030 = vmax.f32 %v1945, 0.0
        %v2031 = vmax.f32 %v1947, 0.0
        %v2032 = vmax.f32 %v1949, 0.0
        %v2033 = vmax.f32 %v1953, 0.0
        %v2034 = vmax.f32 %v1955, 0.0
        %v2035 = vmax.f32 %v1957, 0.0
        %v2036 = vmax.f32 %v1959, 0.0
        %v2037 = vmax.f32 %v1963, 0.0
        %v2038 = vmax.f32 %v1965, 0.0
        %v2039 = vmax.f32 %v1967, 0.0
        %v2040 = vmax.f32 %v1969, 0.0
        %v2041 = vmax.f32 %v1973, 0.0
        %v2042 = vmax.f32 %v1975, 0.0
        %v2043 = vmax.f32 %v1977, 0.0
        %v2044 = vmax.f32 %v1979, 0.0
        %v2045 = vmax.f32 %v1981, 1e-06
        %v2046 = vmax.f32 %v1982, 1e-06
        %v2047 = vmax.f32 %v1983, 1e-06
        %v2048 = vmax.f32 %v1984, 1e-06
        %v2049 = vmax.f32 %v1985, 1e-06
        %v2050 = vmax.f32 %v1986, 1e-06
        %v2051 = vmax.f32 %v1987, 1e-06
        %v2052 = vmax.f32 %v1988, 1e-06
        %v2053 = vmax.f32 %v1989, 1e-06
        %v2054 = vmax.f32 %v1990, 1e-06
        %v2055 = vmax.f32 %v1991, 1e-06
        %v2056 = vmax.f32 %v1992, 1e-06
        %v2057 = vmax.f32 %v1993, 1e-06
        %v2058 = vmax.f32 %v1994, 1e-06
        %v2059 = vmax.f32 %v1995, 1e-06
        %v2060 = vmax.f32 %v1996, 1e-06
        %v2061 = vmax.f32 %v1997, 1e-06
        %v2062 = vmax.f32 %v1998, 1e-06
        %v2063 = vmax.f32 %v1999, 1e-06
        %v2064 = vmax.f32 %v2000, 1e-06
        %v2065 = vmax.f32 %v2001, 1e-06
        %v2066 = vmax.f32 %v2002, 1e-06
        %v2067 = vmax.f32 %v2003, 1e-06
        %v2068 = vmax.f32 %v2004, 1e-06
        %v2069 = vmax.f32 %v2005, 1e-06
        %v2070 = vmax.f32 %v2006, 1e-06
        %v2071 = vmax.f32 %v2007, 1e-06
        %v2072 = vmax.f32 %v2008, 1e-06
        %v2073 = vmax.f32 %v2009, 1e-06
        %v2074 = vmax.f32 %v2010, 1e-06
        %v2075 = vmax.f32 %v2011, 1e-06
        %v2076 = vmax.f32 %v2012, 1e-06
        %v2077 = vmax.f32 %v2013, 1e-06
        %v2078 = vmax.f32 %v2014, 1e-06
        %v2079 = vmax.f32 %v2015, 1e-06
        %v2080 = vmax.f32 %v2016, 1e-06
        %v2081 = vmax.f32 %v2017, 1e-06
        %v2082 = vmax.f32 %v2018, 1e-06
        %v2083 = vmax.f32 %v2019, 1e-06
        %v2084 = vmax.f32 %v2020, 1e-06
        %v2085 = vmax.f32 %v2021, 1e-06
        %v2086 = vmax.f32 %v2022, 1e-06
        %v2087 = vmax.f32 %v2023, 1e-06
        %v2088 = vmax.f32 %v2024, 1e-06
        %v2089 = vmax.f32 %v2025, 1e-06
        %v2090 = vmax.f32 %v2026, 1e-06
        %v2091 = vmax.f32 %v2027, 1e-06
        %v2092 = vmax.f32 %v2028, 1e-06
        %v2093 = vmax.f32 %v2029, 1e-06
        %v2094 = vmax.f32 %v2030, 1e-06
        %v2095 = vmax.f32 %v2031, 1e-06
        %v2096 = vmax.f32 %v2032, 1e-06
        %v2097 = vmax.f32 %v2033, 1e-06
        %v2098 = vmax.f32 %v2034, 1e-06
        %v2099 = vmax.f32 %v2035, 1e-06
        %v2100 = vmax.f32 %v2036, 1e-06
        %v2101 = vmax.f32 %v2037, 1e-06
        %v2102 = vmax.f32 %v2038, 1e-06
        %v2103 = vmax.f32 %v2039, 1e-06
        %v2104 = vmax.f32 %v2040, 1e-06
        %v2105 = vmax.f32 %v2041, 1e-06
        %v2106 = vmax.f32 %v2042, 1e-06
        %v2107 = vmax.f32 %v2043, 1e-06
        %v2108 = vmax.f32 %v2044, 1e-06
        %v2109 = vmul.f32 %v2045, %v2045
        %v2110 = vmul.f32 %v2046, %v2046
        %v2111 = vmul.f32 %v2047, %v2047
        %v2112 = vmul.f32 %v2048, %v2048
        %v2113 = vmul.f32 %v2049, %v2049
        %v2114 = vmul.f32 %v2050, %v2050
        %v2115 = vmul.f32 %v2051, %v2051
        %v2116 = vmul.f32 %v2052, %v2052
        %v2117 = vmul.f32 %v2053, %v2053
        %v2118 = vmul.f32 %v2054, %v2054
        %v2119 = vmul.f32 %v2055, %v2055
        %v2120 = vmul.f32 %v2056, %v2056
        %v2121 = vmul.f32 %v2057, %v2057
        %v2122 = vmul.f32 %v2058, %v2058
        %v2123 = vmul.f32 %v2059, %v2059
        %v2124 = vmul.f32 %v2060, %v2060
        %v2125 = vmul.f32 %v2061, %v2061
        %v2126 = vmul.f32 %v2062, %v2062
        %v2127 = vmul.f32 %v2063, %v2063
        %v2128 = vmul.f32 %v2064, %v2064
        %v2129 = vmul.f32 %v2065, %v2065
        %v2130 = vmul.f32 %v2066, %v2066
        %v2131 = vmul.f32 %v2067, %v2067
        %v2132 = vmul.f32 %v2068, %v2068
        %v2133 = vmul.f32 %v2069, %v2069
        %v2134 = vmul.f32 %v2070, %v2070
        %v2135 = vmul.f32 %v2071, %v2071
        %v2136 = vmul.f32 %v2072, %v2072
        %v2137 = vmul.f32 %v2073, %v2073
        %v2138 = vmul.f32 %v2074, %v2074
        %v2139 = vmul.f32 %v2075, %v2075
        %v2140 = vmul.f32 %v2076, %v2076
        %v2141 = vmul.f32 %v2077, %v2077
        %v2142 = vmul.f32 %v2078, %v2078
        %v2143 = vmul.f32 %v2079, %v2079
        %v2144 = vmul.f32 %v2080, %v2080
        %v2145 = vmul.f32 %v2081, %v2081
        %v2146 = vmul.f32 %v2082, %v2082
        %v2147 = vmul.f32 %v2083, %v2083
        %v2148 = vmul.f32 %v2084, %v2084
        %v2149 = vmul.f32 %v2085, %v2085
        %v2150 = vmul.f32 %v2086, %v2086
        %v2151 = vmul.f32 %v2087, %v2087
        %v2152 = vmul.f32 %v2088, %v2088
        %v2153 = vmul.f32 %v2089, %v2089
        %v2154 = vmul.f32 %v2090, %v2090
        %v2155 = vmul.f32 %v2091, %v2091
        %v2156 = vmul.f32 %v2092, %v2092
        %v2157 = vmul.f32 %v2093, %v2093
        %v2158 = vmul.f32 %v2094, %v2094
        %v2159 = vmul.f32 %v2095, %v2095
        %v2160 = vmul.f32 %v2096, %v2096
        %v2161 = vmul.f32 %v2097, %v2097
        %v2162 = vmul.f32 %v2098, %v2098
        %v2163 = vmul.f32 %v2099, %v2099
        %v2164 = vmul.f32 %v2100, %v2100
        %v2165 = vmul.f32 %v2101, %v2101
        %v2166 = vmul.f32 %v2102, %v2102
        %v2167 = vmul.f32 %v2103, %v2103
        %v2168 = vmul.f32 %v2104, %v2104
        %v2169 = vmul.f32 %v2105, %v2105
        %v2170 = vmul.f32 %v2106, %v2106
        %v2171 = vmul.f32 %v2107, %v2107
        %v2172 = vmul.f32 %v2108, %v2108
        %v2173 = vmul.f32 %v2045, %v2109
        %v2174 = vmul.f32 %v2046, %v2110
        %v2175 = vmul.f32 %v2047, %v2111
        %v2176 = vmul.f32 %v2048, %v2112
        %v2177 = vmul.f32 %v2049, %v2113
        %v2178 = vmul.f32 %v2050, %v2114
        %v2179 = vmul.f32 %v2051, %v2115
        %v2180 = vmul.f32 %v2052, %v2116
        %v2181 = vmul.f32 %v2053, %v2117
        %v2182 = vmul.f32 %v2054, %v2118
        %v2183 = vmul.f32 %v2055, %v2119
        %v2184 = vmul.f32 %v2056, %v2120
        %v2185 = vmul.f32 %v2057, %v2121
        %v2186 = vmul.f32 %v2058, %v2122
        %v2187 = vmul.f32 %v2059, %v2123
        %v2188 = vmul.f32 %v2060, %v2124
        %v2189 = vmul.f32 %v2061, %v2125
        %v2190 = vmul.f32 %v2062, %v2126
        %v2191 = vmul.f32 %v2063, %v2127
        %v2192 = vmul.f32 %v2064, %v2128
        %v2193 = vmul.f32 %v2065, %v2129
        %v2194 = vmul.f32 %v2066, %v2130
        %v2195 = vmul.f32 %v2067, %v2131
        %v2196 = vmul.f32 %v2068, %v2132
        %v2197 = vmul.f32 %v2069, %v2133
        %v2198 = vmul.f32 %v2070, %v2134
        %v2199 = vmul.f32 %v2071, %v2135
        %v2200 = vmul.f32 %v2072, %v2136
        %v2201 = vmul.f32 %v2073, %v2137
        %v2202 = vmul.f32 %v2074, %v2138
        %v2203 = vmul.f32 %v2075, %v2139
        %v2204 = vmul.f32 %v2076, %v2140
        %v2205 = vmul.f32 %v2077, %v2141
        %v2206 = vmul.f32 %v2078, %v2142
        %v2207 = vmul.f32 %v2079, %v2143
        %v2208 = vmul.f32 %v2080, %v2144
        %v2209 = vmul.f32 %v2081, %v2145
        %v2210 = vmul.f32 %v2082, %v2146
        %v2211 = vmul.f32 %v2083, %v2147
        %v2212 = vmul.f32 %v2084, %v2148
        %v2213 = vmul.f32 %v2085, %v2149
        %v2214 = vmul.f32 %v2086, %v2150
        %v2215 = vmul.f32 %v2087, %v2151
        %v2216 = vmul.f32 %v2088, %v2152
        %v2217 = vmul.f32 %v2089, %v2153
        %v2218 = vmul.f32 %v2090, %v2154
        %v2219 = vmul.f32 %v2091, %v2155
        %v2220 = vmul.f32 %v2092, %v2156
        %v2221 = vmul.f32 %v2093, %v2157
        %v2222 = vmul.f32 %v2094, %v2158
        %v2223 = vmul.f32 %v2095, %v2159
        %v2224 = vmul.f32 %v2096, %v2160
        %v2225 = vmul.f32 %v2097, %v2161
        %v2226 = vmul.f32 %v2098, %v2162
        %v2227 = vmul.f32 %v2099, %v2163
        %v2228 = vmul.f32 %v2100, %v2164
        %v2229 = vmul.f32 %v2101, %v2165
        %v2230 = vmul.f32 %v2102, %v2166
        %v2231 = vmul.f32 %v2103, %v2167
        %v2232 = vmul.f32 %v2104, %v2168
        %v2233 = vmul.f32 %v2105, %v2169
        %v2234 = vmul.f32 %v2106, %v2170
        %v2235 = vmul.f32 %v2107, %v2171
        %v2236 = vmul.f32 %v2108, %v2172
        %v2237 = vld [vmem:[#allocation2] sm:$0xf]
        %v2238 = vadd.f32 %v2173, %v2175
        %v2239 = vadd.f32 %v2238, %v2177
        %v2240 = vadd.f32 %v2239, %v2179
        %v2241 = vadd.f32 %v2240, %v2181
        %v2242 = vadd.f32 %v2241, %v2183
        %v2243 = vadd.f32 %v2242, %v2185
        %v2244 = vadd.f32 %v2243, %v2187
        %v2245 = vadd.f32 %v2244, %v2189
        %v2246 = vadd.f32 %v2245, %v2191
        %v2247 = vadd.f32 %v2246, %v2193
        %v2248 = vadd.f32 %v2247, %v2195
        %v2249 = vadd.f32 %v2248, %v2197
        %v2250 = vadd.f32 %v2249, %v2199
        %v2251 = vadd.f32 %v2250, %v2201
        %v2252 = vadd.f32 %v2251, %v2203
        %v2253 = vrot.slane %v2252, 4
        %v2254 = vadd.f32 %v2252, %v2253
        %v2255 = vrot.slane %v2254, 2
        %v2256 = vadd.f32 %v2254, %v2255
        %v2257 = vrot.slane %v2256, 1
        %v2258 = vadd.f32 %v2256, %v2257
        %v2259 = vadd.f32 %v2174, %v2176
        %v2260 = vadd.f32 %v2259, %v2178
        %v2261 = vadd.f32 %v2260, %v2180
        %v2262 = vadd.f32 %v2261, %v2182
        %v2263 = vadd.f32 %v2262, %v2184
        %v2264 = vadd.f32 %v2263, %v2186
        %v2265 = vadd.f32 %v2264, %v2188
        %v2266 = vadd.f32 %v2265, %v2190
        %v2267 = vadd.f32 %v2266, %v2192
        %v2268 = vadd.f32 %v2267, %v2194
        %v2269 = vadd.f32 %v2268, %v2196
        %v2270 = vadd.f32 %v2269, %v2198
        %v2271 = vadd.f32 %v2270, %v2200
        %v2272 = vadd.f32 %v2271, %v2202
        %v2273 = vadd.f32 %v2272, %v2204
        %v2274 = vrot.slane %v2273, 4
        %v2275 = vadd.f32 %v2273, %v2274
        %v2276 = vrot.slane %v2275, 2
        %v2277 = vadd.f32 %v2275, %v2276
        %v2278 = vrot.slane %v2277, 1
        %v2279 = vadd.f32 %v2277, %v2278
        %v2280 = vadd.f32 %v2205, %v2207
        %v2281 = vadd.f32 %v2280, %v2209
        %v2282 = vadd.f32 %v2281, %v2211
        %v2283 = vadd.f32 %v2282, %v2213
        %v2284 = vadd.f32 %v2283, %v2215
        %v2285 = vadd.f32 %v2284, %v2217
        %v2286 = vadd.f32 %v2285, %v2219
        %v2287 = vadd.f32 %v2286, %v2221
        %v2288 = vadd.f32 %v2287, %v2223
        %v2289 = vadd.f32 %v2288, %v2225
        %v2290 = vadd.f32 %v2289, %v2227
        %v2291 = vadd.f32 %v2290, %v2229
        %v2292 = vadd.f32 %v2291, %v2231
        %v2293 = vadd.f32 %v2292, %v2233
        %v2294 = vadd.f32 %v2293, %v2235
        %v2295 = vrot.slane %v2294, 4
        %v2296 = vadd.f32 %v2294, %v2295
        %v2297 = vrot.slane %v2296, 2
        %v2298 = vadd.f32 %v2296, %v2297
        %v2299 = vrot.slane %v2298, 1
        %v2300 = vadd.f32 %v2298, %v2299
        %v2301 = vadd.f32 %v2206, %v2208
        %v2302 = vadd.f32 %v2301, %v2210
        %v2303 = vadd.f32 %v2302, %v2212
        %v2304 = vadd.f32 %v2303, %v2214
        %v2305 = vadd.f32 %v2304, %v2216
        %v2306 = vadd.f32 %v2305, %v2218
        %v2307 = vadd.f32 %v2306, %v2220
        %v2308 = vadd.f32 %v2307, %v2222
        %v2309 = vadd.f32 %v2308, %v2224
        %v2310 = vadd.f32 %v2309, %v2226
        %v2311 = vadd.f32 %v2310, %v2228
        %v2312 = vadd.f32 %v2311, %v2230
        %v2313 = vadd.f32 %v2312, %v2232
        %v2314 = vadd.f32 %v2313, %v2234
        %v2315 = vadd.f32 %v2314, %v2236
        %v2316 = vrot.slane %v2315, 4
        %v2317 = vadd.f32 %v2315, %v2316
        %v2318 = vrot.slane %v2317, 2
        %v2319 = vadd.f32 %v2317, %v2318
        %v2320 = vrot.slane %v2319, 1
        %v2321 = vadd.f32 %v2319, %v2320
        %v2326 = vcombine.low %v2258, %v2279
        %v2328 = vunpack.c.l.s4 1983009808
        %v2329 = vunpack.c.0.s8 %v2328
        %v2330 = vlaneseq
        %v2331 = vshrl.u32 %v2330, 7
        %v2332 = vsub.s32 %v2329, %v2331
        %v2333 = vrot.slane %v2326, %v2332
        %v2334 = vcombine.low %v2300, %v2321
        %v2336 = vunpack.c.l.s4 1983009808
        %v2337 = vunpack.c.0.s8 %v2336
        %v2338 = vlaneseq
        %v2339 = vshrl.u32 %v2338, 7
        %v2340 = vsub.s32 %v2337, %v2339
        %v2341 = vrot.slane %v2334, %v2340
        %vm2342 = vcmask 1044484
        %v2343 = vsel %vm2342, %v2333, %v2333
        %vm2344 = vcmask 1046534
        %v2345 = vsel %vm2344, %v2333, %v2343
        %v2346 = vrot.slane %v2341, 7
        %vm2347 = vcmask 1041409
        %v2348 = vsel %vm2347, %v2346, %v2345
        %vm2349 = vcmask 1043459
        %v2350 = vsel %vm2349, %v2346, %v2348
        %vm2351 = vcmask 1045509
        %v2352 = vsel %vm2351, %v2346, %v2350
        %vm2353 = vcmask 1047559
        %v2354 = vsel %vm2353, %v2346, %v2352
        %v2356 = vadd.f32 %v2237, %v2354
        %2357 = vst [vmem:[#allocation2] sm:$0xf] %v2356
        // Predicated region
        $region77: #{tpu_custom_call.1} parent=71 // pred_check
          %p2358 = pneg %p468
        $region78: #{tpu_custom_call.1} parent=71 // pred_check_branch
          %2360 = sbr.rel (%p2358) target = $region80
        $region79: #{tpu_custom_call.1} parent=71 // pred_region
          %v2361 = vld [vmem:[#allocation2] sm:$0xf]
          %v2362 = vmul.f32 %v2361, 0.0078125
          %v2363 = vlog2.pop %v2362
          %v2364 = vmul.f32 %v2363, 0.6931472
          %v2365 = vmul.f32 %v2364, 0.33333334
          %v2366 = vmul.f32 %v2365, 1.442695
          %v2367 = vpow.pop %v2366
          %v2368 = vld [vmem:[%s11] sm:$0xff]
          %v2369 = vld [vmem:[%s11 + $0x8] sm:$0xff]
          %v2370 = vld [vmem:[%s11 + $0x10] sm:$0xff]
          %v2371 = vld [vmem:[%s11 + $0x18] sm:$0xff]
          %v2372 = vld [vmem:[%s11 + $0x20] sm:$0xff]
          %v2373 = vld [vmem:[%s11 + $0x28] sm:$0xff]
          %v2374 = vld [vmem:[%s11 + $0x30] sm:$0xff]
          %v2375 = vld [vmem:[%s11 + $0x38] sm:$0xff]
          %v2376 = vld [vmem:[%s11 + $0x40] sm:$0xff]
          %v2377 = vld [vmem:[%s11 + $0x48] sm:$0xff]
          %v2378 = vld [vmem:[%s11 + $0x50] sm:$0xff]
          %v2379 = vld [vmem:[%s11 + $0x58] sm:$0xff]
          %v2380 = vld [vmem:[%s11 + $0x60] sm:$0xff]
          %v2381 = vld [vmem:[%s11 + $0x68] sm:$0xff]
          %v2382 = vld [vmem:[%s11 + $0x70] sm:$0xff]
          %v2383 = vld [vmem:[%s11 + $0x78] sm:$0xff]
          %v2384 = vld [vmem:[%s11 + $0x80] sm:$0xff]
          %v2385 = vld [vmem:[%s11 + $0x88] sm:$0xff]
          %v2386 = vld [vmem:[%s11 + $0x90] sm:$0xff]
          %v2387 = vld [vmem:[%s11 + $0x98] sm:$0xff]
          %v2388 = vld [vmem:[%s11 + $0xa0] sm:$0xff]
          %v2389 = vld [vmem:[%s11 + $0xa8] sm:$0xff]
          %v2390 = vld [vmem:[%s11 + $0xb0] sm:$0xff]
          %v2391 = vld [vmem:[%s11 + $0xb8] sm:$0xff]
          %v2392 = vld [vmem:[%s11 + $0xc0] sm:$0xff]
          %v2393 = vld [vmem:[%s11 + $0xc8] sm:$0xff]
          %v2394 = vld [vmem:[%s11 + $0xd0] sm:$0xff]
          %v2395 = vld [vmem:[%s11 + $0xd8] sm:$0xff]
          %v2396 = vld [vmem:[%s11 + $0xe0] sm:$0xff]
          %v2397 = vld [vmem:[%s11 + $0xe8] sm:$0xff]
          %v2398 = vld [vmem:[%s11 + $0xf0] sm:$0xff]
          %v2399 = vld [vmem:[%s11 + $0xf8] sm:$0xff]
          %v2400 = vld [vmem:[%s12] sm:$0x1]
          %v2402 = vlaneseq
          %v2403 = vshrl.u32 %v2402, 7
          %v2404 = vsub.s32 0, %v2403
          %v2405 = vrot.slane %v2400, %v2404
          %v2409 = vunpack.c.l.s4 1983009808
          %v2410 = vunpack.c.0.s8 %v2409
          %v2411 = vlaneseq
          %v2412 = vshrl.u32 %v2411, 7
          %v2413 = vsub.s32 %v2410, %v2412
          %v2414 = vrot.slane %v2367, %v2413
          %v2415 = vcombine.high %v2414, %v2414
          %2418 = vmatprep.subr.mxu0 0.0
          %2419 = vmatpush1.msra.mxu0 %v2368
          %2420 = vmatprep.subr.mxu0 0.0
          %2421 = vmatpush1.msra.mxu0 %v2369
          %2422 = vmatprep.subr.mxu0 0.0
          %2423 = vmatpush1.msra.mxu0 %v2370
          %2424 = vmatprep.subr.mxu0 0.0
          %2425 = vmatpush1.msra.mxu0 %v2371
          %2426 = vmatprep.subr.mxu0 0.0
          %2427 = vmatpush1.msra.mxu0 %v2372
          %2428 = vmatprep.subr.mxu0 0.0
          %2429 = vmatpush1.msra.mxu0 %v2373
          %2430 = vmatprep.subr.mxu0 0.0
          %2431 = vmatpush1.msra.mxu0 %v2374
          %2432 = vmatprep.subr.mxu0 0.0
          %2433 = vmatpush1.msra.mxu0 %v2375
          %2434 = vmatprep.subr.mxu0 0.0
          %2435 = vmatpush1.msra.mxu0 %v2376
          %2436 = vmatprep.subr.mxu0 0.0
          %2437 = vmatpush1.msra.mxu0 %v2377
          %2438 = vmatprep.subr.mxu0 0.0
          %2439 = vmatpush1.msra.mxu0 %v2378
          %2440 = vmatprep.subr.mxu0 0.0
          %2441 = vmatpush1.msra.mxu0 %v2379
          %2442 = vmatprep.subr.mxu0 0.0
          %2443 = vmatpush1.msra.mxu0 %v2380
          %2444 = vmatprep.subr.mxu0 0.0
          %2445 = vmatpush1.msra.mxu0 %v2381
          %2446 = vmatprep.subr.mxu0 0.0
          %2447 = vmatpush1.msra.mxu0 %v2382
          %2448 = vmatprep.subr.mxu0 0.0
          %2449 = vmatpush1.msra.mxu0 %v2383
          %2450 = vmatprep.subr.mxu0 0.0
          %2451 = vmatpush1.msra.mxu0 %v2384
          %2452 = vmatprep.subr.mxu0 0.0
          %2453 = vmatpush1.msra.mxu0 %v2385
          %2454 = vmatprep.subr.mxu0 0.0
          %2455 = vmatpush1.msra.mxu0 %v2386
          %2456 = vmatprep.subr.mxu0 0.0
          %2457 = vmatpush1.msra.mxu0 %v2387
          %2458 = vmatprep.subr.mxu0 0.0
          %2459 = vmatpush1.msra.mxu0 %v2388
          %2460 = vmatprep.subr.mxu0 0.0
          %2461 = vmatpush1.msra.mxu0 %v2389
          %2462 = vmatprep.subr.mxu0 0.0
          %2463 = vmatpush1.msra.mxu0 %v2390
          %2464 = vmatprep.subr.mxu0 0.0
          %2465 = vmatpush1.msra.mxu0 %v2391
          %2466 = vmatprep.subr.mxu0 0.0
          %2467 = vmatpush1.msra.mxu0 %v2392
          %2468 = vmatprep.subr.mxu0 0.0
          %2469 = vmatpush1.msra.mxu0 %v2393
          %2470 = vmatprep.subr.mxu0 0.0
          %2471 = vmatpush1.msra.mxu0 %v2394
          %2472 = vmatprep.subr.mxu0 0.0
          %2473 = vmatpush1.msra.mxu0 %v2395
          %2474 = vmatprep.subr.mxu0 0.0
          %2475 = vmatpush1.msra.mxu0 %v2396
          %2476 = vmatprep.subr.mxu0 0.0
          %2477 = vmatpush1.msra.mxu0 %v2397
          %2478 = vmatprep.subr.mxu0 0.0
          %2479 = vmatpush1.msra.mxu0 %v2398
          %2480 = vmatprep.subr.mxu0 0.0
          %2481 = vmatpush1.msra.mxu0 %v2399
          %2482 = vmatprep.mubr.f32.mxu0 %v2415
          %2483 = vmatmul.mubr.f32.gmra.mrb[0].mxu0 %v2414
          %v2484 = vpop.f32.mrb[0].mxu0
          %v2485 = vadd.f32 %v2405, %v2484
          %v2486 = vpop.f32.mrb[0].mxu0
          %2487 = vdwg.mxu0
          %2488 = vst [vmem:[%s456] sm:$0x3] %v2485
        $region80: #{tpu_custom_call.1} parent=71 // pred_fallthru
          _
        %s2489 = sand.u32 %s327, 1
        %s2490 = scalar_lea.sflag [#allocation4], %s2489
        %s2491 = sand.u32 %s327, 1
        %s2492 = smul.addr %s2491, 2
        %s2493 = scalar_lea.vmem [#allocation3], %s2492
        // Predicated region
        $region81: #{tpu_custom_call.1} parent=71 // pred_check
          %p2494 = pneg %p337
        $region82: #{tpu_custom_call.1} parent=71 // pred_check_branch
          %2496 = sbr.rel (%p2494) target = $region84
        $region83: #{tpu_custom_call.1} parent=71 // pred_region
          %s2498 = ssub.s32 32, 32
          %2499 = vsyncadd %s2490, %s2498
          %s2500 = smul.addr %s31, 32
          %s2501 = scalar_lea.hbm %s13, %s2500
          %s2503 = sshll.u32 %s2493, 4
          %s2504 = int_to_ptr.vmem [resolvable:$true] %s2503
          %2506 = dma.vmem_to_hbm [thread:$0]  %s2504, 32, %s2501, %s2490
        $region84: #{tpu_custom_call.1} parent=71 // pred_fallthru
          _
      $region72: #{tpu_custom_call.1} parent=5 // pred_fallthru
        _
      %p2507 = scmp.le.s32.totalorder 2, %s22
      // Predicated region
      $region85: #{tpu_custom_call.1} parent=5 // pred_check
        %p2508 = pneg %p2507
      $region86: #{tpu_custom_call.1} parent=5 // pred_check_branch
        %2510 = sbr.rel (%p2508) target = $region88
      $region87: #{tpu_custom_call.1} parent=5 // pred_region
        %s2511 = ssub.s32 %s22, 2
        // Predicated region
        $region89: #{tpu_custom_call.1} parent=87 // pred_check
          %p2512 = pneg %p343
        $region90: #{tpu_custom_call.1} parent=87 // pred_check_branch
          %2514 = sbr.rel (%p2512) target = $region92
        $region91: #{tpu_custom_call.1} parent=87 // pred_region
          %s2515 = sand.u32 %s328, 1
          %s2516 = scalar_lea.sflag [#allocation4], %s2515
          %s2517 = sand.u32 %s328, 1
          %s2518 = smul.addr %s2517, 2
          %s2519 = scalar_lea.vmem [#allocation3], %s2518
          %2520 = dma.done %s2516, 32
        $region92: #{tpu_custom_call.1} parent=87 // pred_fallthru
          _
      $region88: #{tpu_custom_call.1} parent=5 // pred_fallthru
        _
    $region6: #{tpu_custom_call.1} parent=1 // loop_footer
      %s26 = sadd.s32 1, %s22
    $region7: #{tpu_custom_call.1} parent=1 // loop_footer_branch
      %21 = sbr.rel target = $region3
    $region8: #{tpu_custom_call.1} parent=1 // loop_exit
      _
    %2521 = vsyncpa [#allocation4], 1
    %s2522 = scalar_lea.sflag [#allocation4], 1
    %2523 = vsyncpa %s2522, 1

</llo_original>
